<compile_context>
chip_gen: v7x
topology: tpu7x:2x2x1
jax: 0.10.0
libtpu: 0.0.40
codegen_flags: <defaults>
</compile_context>

<pallas_src>
import jax
import jax.numpy as jnp
from jax.experimental import pallas as pl
from jax.experimental.pallas import tpu as pltpu

# (out_channels, kernel, stride) of the Atari RND conv trunk.
_CONV_SPECS = ((32, 8, 4), (64, 4, 2), (64, 3, 1))
_MLP_HIDDEN = 256


def _conv_out_hw(h, w):
    for _, k, s in _CONV_SPECS:
        h = (h - k) // s + 1
        w = (w - k) // s + 1
    return h, w


def _geometry(C, H, W):
    geo = []
    cin, hin, win = C, H, W
    for cout, k, s in _CONV_SPECS:
        ho = (hin - k) // s + 1
        wo = (win - k) // s + 1
        assert ho > 0 and wo > 0, "input spatial size too small for AtariConv"
        geo.append((cin, cout, k, s, ho, wo))
        cin, hin, win = cout, ho, wo
    return geo


def _silu(x):
    # SiLU = x * sigmoid(x); exp and approx reciprocal both ride the EUP slot.
    return x * pl.reciprocal(1.0 + jnp.exp(-x), approx=True)


def _pick_tb(B):
    """Batch tile: keep a non-trivial grid so batches shard across cores."""
    for cand in (8, 4, 2):
        if cand < B and B % cand == 0:
            return cand
    return 1


# ----------------------------------------------------------------------------
# Conv1 im2col (thin channels-last XLA glue on the raw input only).
# ----------------------------------------------------------------------------
def _conv1_patches(x_nhwc, k, s, s2):
    """Return [B, Ho*Wo, k*k*C] conv1 patches (feature order (ki, kj, c)) with
    rows ordered (phase_h, phase_w, oh//s2, ow//s2) so the in-kernel conv2
    im2col (stride s2) only ever needs unit-stride slices."""
    B, H, W, C = x_nhwc.shape
    Ho = (H - k) // s + 1
    Wo = (W - k) // s + 1
    F = k * k * C
    if k % s == 0 and H % s == 0 and W % s == 0:
        r = k // s
        xt = x_nhwc.reshape(B, H // s, s, W // s, s, C)
        blocks = [xt[:, ti:ti + Ho, :, tj:tj + Wo, :, :]
                  for ti in range(r) for tj in range(r)]
        stk = jnp.stack(blocks, axis=0).reshape(r, r, B, Ho, s, Wo, s, C)
        # -> [B, Ho, Wo, (ti,u), (tj,v), C] with ki = ti*s+u, kj = tj*s+v
        pat = stk.transpose(2, 3, 5, 0, 4, 1, 6, 7).reshape(B, Ho, Wo, F)
    else:
        cols = [x_nhwc[:, ki:ki + s * (Ho - 1) + 1:s,
                       kj:kj + s * (Wo - 1) + 1:s, :]
                for ki in range(k) for kj in range(k)]
        pat = jnp.stack(cols, axis=3).reshape(B, Ho, Wo, F)

    assert Ho % s2 == 0 and Wo % s2 == 0, (
        "conv1 output spatial dims must be divisible by the conv2 stride")
    # TODO(synk): pad the polyphase layout to support odd conv1 output sizes.
    p1 = pat.reshape(B, Ho // s2, s2, Wo // s2, s2, F)
    p1 = p1.transpose(0, 2, 4, 1, 3, 5).reshape(B, Ho * Wo, F)
    return p1


# ----------------------------------------------------------------------------
# Fused forward kernel builder
# ----------------------------------------------------------------------------
def _build_fused_call(B, C, H, W, TB):
    geo = _geometry(C, H, W)
    (_ci1, co1, k1, _s1, ho1, wo1) = geo[0]
    (_ci2, co2, k2, s2, ho2, wo2) = geo[1]
    (_ci3, co3, k3, _s3, ho3, wo3) = geo[2]
    assert ho1 % s2 == 0 and wo1 % s2 == 0, (
        "conv1 output spatial dims must be divisible by the conv2 stride")
    HW1, HW3 = ho1 * wo1, ho3 * wo3
    F1 = k1 * k1 * C
    K2 = k2 * k2 * co1
    K3 = k3 * k3 * co2
    hph, wph = ho1 // s2, wo1 // s2
    M1, M2, M3 = TB * HW1, TB * ho2 * wo2, TB * HW3

    def kernel(p1_ref, w1_ref, b1_ref, w2_ref, b2_ref, w3_ref, b3_ref,
               wm_ref, bm_ref, wv_ref, bv_ref, out_ref, p2_scr, p3_scr):
        f32, bf16 = jnp.float32, jnp.bfloat16

        # ---- conv1: pre-im2col'd patches -> one MXU matmul + bias + SiLU ----
        p1 = p1_ref[...].reshape(M1, F1)
        h1 = _silu(jnp.dot(p1, w1_ref[...], preferred_element_type=f32)
                   + b1_ref[...]).astype(bf16)

        # ---- conv2 (k4, s2): polyphase rows -> unit-stride tap slices,
        #      lane-dense [M2, K2] bf16 patch buffer, ONE matmul -------------
        h1p = h1.reshape(TB, s2 * s2, hph, wph, co1)
        for ki in range(k2):
            ti, u = ki // s2, ki % s2
            for kj in range(k2):
                tj, v = kj // s2, kj % s2
                tap = h1p[:, u * s2 + v, ti:ti + ho2, tj:tj + wo2, :]
                kk = ki * k2 + kj
                p2_scr[:, kk * co1:(kk + 1) * co1] = tap.reshape(M2, co1)
        h2 = _silu(jnp.dot(p2_scr[...], w2_ref[...],
                           preferred_element_type=f32)
                   + b2_ref[...]).astype(bf16)

        # ---- conv3 (k3, s1) --------------------------------------------------
        h2sp = h2.reshape(TB, ho2, wo2, co2)
        for ki in range(k3):
            for kj in range(k3):
                tap = h2sp[:, ki:ki + ho3, kj:kj + wo3, :]
                kk = ki * k3 + kj
                p3_scr[:, kk * co2:(kk + 1) * co2] = tap.reshape(M3, co2)
        h3 = _silu(jnp.dot(p3_scr[...], w3_ref[...],
                           preferred_element_type=f32)
                   + b3_ref[...]).astype(bf16)

        # ---- MLP (flatten folded into pre-permuted wm) + both value heads ---
        h3r = h3.reshape(TB, HW3, co3)
        wm = wm_ref[...]
        acc = jnp.zeros((TB, _MLP_HIDDEN), f32)
        for p in range(HW3):
            acc = acc + jnp.dot(h3r[:, p, :], wm[p],
                                preferred_element_type=f32)
        hid = _silu(acc + bm_ref[...]).astype(bf16)
        vals = jnp.dot(hid, wv_ref[...], preferred_element_type=f32) + bv_ref[...]
        out_ref[...] = vals.reshape(1, TB, 2)

    def const_spec(shape):
        nd = len(shape)
        return pl.BlockSpec(tuple(shape), lambda b, _n=nd: (0,) * _n)

    in_specs = [pl.BlockSpec((TB, HW1, F1), lambda b: (b, 0, 0)),
                const_spec((F1, co1)), const_spec((1, co1)),
                const_spec((K2, co2)), const_spec((1, co2)),
                const_spec((K3, co3)), const_spec((1, co3)),
                const_spec((HW3, co3, _MLP_HIDDEN)),
                const_spec((1, _MLP_HIDDEN)),
                const_spec((_MLP_HIDDEN, 2)), const_spec((1, 2))]
    out_spec = pl.BlockSpec((1, TB, 2), lambda b: (b, 0, 0))

    # Explicit scoped-VMEM budget: resident weights + double-buffered IO tiles
    # + bf16 patch scratch + activation headroom (incl. 128-lane padding),
    # clamped to stay inside v7x's 64 MiB physical VMEM.
    weight_bytes = 2 * (F1 * co1 + K2 * co2 + K3 * co3
                        + HW3 * co3 * _MLP_HIDDEN + _MLP_HIDDEN * 2)
    bias_bytes = 4 * (co1 + co2 + co3 + _MLP_HIDDEN + 2)
    io_bytes = 2 * (TB * HW1 * F1 * 2 + TB * 2 * 4)
    scratch_bytes = 2 * (M2 * K2 + M3 * K3)
    act_bytes = 4 * 128 * (M1 + M2 + M3 + TB)
    vmem_limit = int(min(48 * 1024 * 1024,
                         max(16 * 1024 * 1024,
                             2 * (weight_bytes + bias_bytes + io_bytes
                                  + scratch_bytes + act_bytes))))

    call = pl.pallas_call(
        kernel,
        out_shape=jax.ShapeDtypeStruct((B // TB, TB, 2), jnp.float32),
        grid=(B // TB,),
        in_specs=in_specs,
        out_specs=out_spec,
        scratch_shapes=[pltpu.VMEM((M2, K2), jnp.bfloat16),
                        pltpu.VMEM((M3, K3), jnp.bfloat16)],
        compiler_params=pltpu.CompilerParams(
            dimension_semantics=("parallel",),
            vmem_limit_bytes=vmem_limit),
    )
    return call


# ----------------------------------------------------------------------------
# Forward pass
# ----------------------------------------------------------------------------
def atari_rnd_value_forward(x, kparams):
    """x: [B, C, H, W] float frames with integer values in [0, 255] (NCHW)."""
    B, C, H, W = x.shape
    geo = _geometry(C, H, W)
    k1, s1 = geo[0][2], geo[0][3]
    s2 = geo[1][3]
    TB = _pick_tb(B)
    call = _build_fused_call(B, C, H, W, TB)
    # Single boundary transpose to channels-last; integer 0..255 frames are
    # exact in bf16 (the 1/255 normalisation lives in the conv1 weight).
    x_nhwc = jnp.transpose(x.astype(jnp.bfloat16), (0, 2, 3, 1))
    p1 = _conv1_patches(x_nhwc, k1, s1, s2)
    out = call(p1,
               kparams["w1"], kparams["b1"], kparams["w2"], kparams["b2"],
               kparams["w3"], kparams["b3"], kparams["wm"], kparams["bm"],
               kparams["wv"], kparams["bv"]).reshape(B, 2)
    return out[:, 0:1], out[:, 1:2]


# ----------------------------------------------------------------------------
# Parameters: torch-layout init + one-time conversion to kernel layout
# ----------------------------------------------------------------------------
def init_torch_params(key, in_channels, h, w):
    """Random parameters in the PyTorch module's native layouts."""
    ho, wo = _conv_out_hw(h, w)
    output_dim = _CONV_SPECS[-1][0] * ho * wo
    ks = jax.random.split(key, 12)

    def dense(kw_, kb_, out_f, in_f):
        w_ = jax.random.normal(kw_, (out_f, in_f), jnp.float32) / jnp.sqrt(in_f)
        b_ = 0.01 * jax.random.normal(kb_, (out_f,), jnp.float32)
        return w_, b_

    p = {}
    cin = in_channels
    for i, (cout, k, _) in enumerate(_CONV_SPECS, start=1):
        w_ = jax.random.normal(ks[2 * i - 2], (cout, cin, k, k), jnp.float32)
        p[f"conv{i}_w"] = w_ / jnp.sqrt(cin * k * k)
        p[f"conv{i}_b"] = 0.01 * jax.random.normal(ks[2 * i - 1], (cout,),
                                                   jnp.float32)
        cin = cout
    p["mlp_w"], p["mlp_b"] = dense(ks[6], ks[7], _MLP_HIDDEN, output_dim)
    p["val1_w"], p["val1_b"] = dense(ks[8], ks[9], 1, _MLP_HIDDEN)
    p["val2_w"], p["val2_b"] = dense(ks[10], ks[11], 1, _MLP_HIDDEN)
    return p


def prepare_params(tp, h, w):
    """One-time conversion of torch-layout params into the kernel's matmul
    layouts (bf16 weights, [1, N] f32 biases).  Runs OUTSIDE the jitted
    forward so no weight transposes/reshapes remain on the hot path."""
    ho3, wo3 = _conv_out_hw(h, w)
    HW3 = ho3 * wo3
    co3 = _CONV_SPECS[-1][0]
    bf, f32 = jnp.bfloat16, jnp.float32

    def conv_w(wt):                      # [O, Cin, kh, kw] -> [kh*kw*Cin, O]
        o, ci, kh, kw = wt.shape
        return wt.transpose(2, 3, 1, 0).reshape(kh * kw * ci, o)

    # x/255 folded into conv1 weight (exact for integer 0..255 frames).
    w1 = (conv_w(tp["conv1_w"]) / 255.0).astype(bf)
    w2 = conv_w(tp["conv2_w"]).astype(bf)
    w3 = conv_w(tp["conv3_w"]).astype(bf)
    # torch flattens conv features in (C, H, W) order; the kernel consumes one
    # [co3] row per spatial position p -> wm[p, c, n] = mlp_w[n, c*HW3 + p].
    wm = tp["mlp_w"].T.reshape(co3, HW3, _MLP_HIDDEN).transpose(1, 0, 2)
    wv = jnp.concatenate([tp["val1_w"], tp["val2_w"]], axis=0).T   # [256, 2]
    bv = jnp.concatenate([tp["val1_b"], tp["val2_b"]], axis=0)
    return {
        "w1": w1, "b1": tp["conv1_b"].reshape(1, -1).astype(f32),
        "w2": w2, "b2": tp["conv2_b"].reshape(1, -1).astype(f32),
        "w3": w3, "b3": tp["conv3_b"].reshape(1, -1).astype(f32),
        "wm": wm.astype(bf), "bm": tp["mlp_b"].reshape(1, -1).astype(f32),
        "wv": wv.astype(bf), "bv": bv.reshape(1, -1).astype(f32),
    }


# ----------------------------------------------------------------------------
# Pure-JAX f32 reference (mirrors the PyTorch module) for a loose parity check
# ----------------------------------------------------------------------------
def _reference_forward(x, tp):
    h = x.astype(jnp.float32) / 255.0
    for i, (_, _, s) in enumerate(_CONV_SPECS, start=1):
        w_, b_ = tp[f"conv{i}_w"], tp[f"conv{i}_b"]
        h = jax.lax.conv_general_dilated(
            h, w_, window_strides=(s, s), padding="VALID",
            dimension_numbers=("NCHW", "OIHW", "NCHW"))
        h = jax.nn.silu(h + b_.reshape(1, -1, 1, 1))
    feat = h.reshape(h.shape[0], -1)
    hid = jax.nn.silu(feat @ tp["mlp_w"].T + tp["mlp_b"])
    v1 = hid @ tp["val1_w"].T + tp["val1_b"]
    v2 = hid @ tp["val2_w"].T + tp["val2_b"]
    return v1, v2


if __name__ == "__main__":
    key = jax.random.PRNGKey(0)
    k_x, k_p = jax.random.split(key)

    # Smallest spatial size the Atari conv stack supports: 36 -> 8 -> 3 -> 1.
    B, C, H, W = 2, 4, 36, 36
    x = jax.random.randint(k_x, (B, C, H, W), 0, 256).astype(jnp.float32)

    torch_params = init_torch_params(k_p, C, H, W)
    kparams = prepare_params(torch_params, H, W)    # one-time weight layouting

    fwd = jax.jit(atari_rnd_value_forward)
    v1, v2 = fwd(x, kparams)
    jax.block_until_ready((v1, v2))

    assert v1.shape == (B, 1) and v2.shape == (B, 1)
    assert v1.dtype == jnp.float32 and v2.dtype == jnp.float32
    assert bool(jnp.all(jnp.isfinite(v1))) and bool(jnp.all(jnp.isfinite(v2)))

    # Loose-tolerance parity vs the f32 XLA reference (bf16 weights/activations
    # + approx-reciprocal SiLU in the kernel => not bit-exact).
    r1, r2 = _reference_forward(x, torch_params)
    assert bool(jnp.allclose(v1, r1, atol=5e-2, rtol=5e-2))
    assert bool(jnp.allclose(v2, r2, atol=5e-2, rtol=5e-2))

    print("KERNEL_OK")
</pallas_src>

<mosaic_0001>
module attributes {stable_mosaic.version = 11 : i64} {
  func.func @kernel(%arg0: i32, %arg1: memref<1x64x256xbf16, #tpu.memory_space<vmem>>, %arg2: memref<256x32xbf16, #tpu.memory_space<vmem>>, %arg3: memref<1x32xf32, #tpu.memory_space<vmem>>, %arg4: memref<512x64xbf16, #tpu.memory_space<vmem>>, %arg5: memref<1x64xf32, #tpu.memory_space<vmem>>, %arg6: memref<576x64xbf16, #tpu.memory_space<vmem>>, %arg7: memref<1x64xf32, #tpu.memory_space<vmem>>, %arg8: memref<1x64x256xbf16, #tpu.memory_space<vmem>>, %arg9: memref<1x256xf32, #tpu.memory_space<vmem>>, %arg10: memref<256x2xbf16, #tpu.memory_space<vmem>>, %arg11: memref<1x2xf32, #tpu.memory_space<vmem>>, %arg12: memref<1x1x2xf32, #tpu.memory_space<vmem>>, %arg13: memref<9x512xbf16, #tpu.memory_space<vmem>>, %arg14: memref<1x576xbf16, #tpu.memory_space<vmem>>) attributes {dimension_semantics = [#tpu.dimension_semantics<parallel>], iteration_bounds = array<i64: 2>, scalar_prefetch = 0 : i64, scratch_operands = 2 : i64, tpu.core_type = #tpu.core_type<tc>, window_params = [{transform_indices = @transform_0, window_bounds = array<i64: 1, 64, 256>}, {pipeline_mode = #tpu.pipeline_mode<synchronous>, transform_indices = @transform_1, window_bounds = array<i64: 256, 32>}, {pipeline_mode = #tpu.pipeline_mode<synchronous>, transform_indices = @transform_2, window_bounds = array<i64: 1, 32>}, {pipeline_mode = #tpu.pipeline_mode<synchronous>, transform_indices = @transform_3, window_bounds = array<i64: 512, 64>}, {pipeline_mode = #tpu.pipeline_mode<synchronous>, transform_indices = @transform_4, window_bounds = array<i64: 1, 64>}, {pipeline_mode = #tpu.pipeline_mode<synchronous>, transform_indices = @transform_5, window_bounds = array<i64: 576, 64>}, {pipeline_mode = #tpu.pipeline_mode<synchronous>, transform_indices = @transform_6, window_bounds = array<i64: 1, 64>}, {pipeline_mode = #tpu.pipeline_mode<synchronous>, transform_indices = @transform_7, window_bounds = array<i64: 1, 64, 256>}, {pipeline_mode = #tpu.pipeline_mode<synchronous>, transform_indices = @transform_8, window_bounds = array<i64: 1, 256>}, {pipeline_mode = #tpu.pipeline_mode<synchronous>, transform_indices = @transform_9, window_bounds = array<i64: 256, 2>}, {pipeline_mode = #tpu.pipeline_mode<synchronous>, transform_indices = @transform_10, window_bounds = array<i64: 1, 2>}, {transform_indices = @transform_11, window_bounds = array<i64: 1, 1, 2>}]} {
    %c0 = arith.constant 0 : index
    %c0_0 = arith.constant 0 : index
    %c0_1 = arith.constant 0 : index
    %0 = vector.load %arg1[%c0, %c0_0, %c0_1] : memref<1x64x256xbf16, #tpu.memory_space<vmem>>, vector<1x64x256xbf16>
    %1 = vector.shape_cast %0 : vector<1x64x256xbf16> to vector<64x256xbf16>
    %c0_2 = arith.constant 0 : index
    %c0_3 = arith.constant 0 : index
    %2 = vector.load %arg2[%c0_2, %c0_3] : memref<256x32xbf16, #tpu.memory_space<vmem>>, vector<256x32xbf16>
    %cst = arith.constant dense<0.000000e+00> : vector<64x32xf32>
    %3 = tpu.matmul %1, %2, %cst {dimension_numbers = #tpu.dot_dimension_numbers<[1], [0], [0], [1], [0, 0, 1, 1], [], []>} : vector<64x256xbf16>, vector<256x32xbf16>, vector<64x32xf32> -> vector<64x32xf32>
    %c0_4 = arith.constant 0 : index
    %c0_5 = arith.constant 0 : index
    %4 = vector.load %arg3[%c0_4, %c0_5] : memref<1x32xf32, #tpu.memory_space<vmem>>, vector<1x32xf32>
    %5 = vector.broadcast %4 : vector<1x32xf32> to vector<64x32xf32>
    %6 = arith.addf %3, %5 : vector<64x32xf32>
    %cst_6 = arith.constant 0.000000e+00 : f32
    %7 = vector.broadcast %cst_6 : f32 to vector<64x32xf32>
    %8 = arith.subf %7, %6 : vector<64x32xf32>
    %9 = math.exp %8 : vector<64x32xf32>
    %cst_7 = arith.constant 1.000000e+00 : f32
    %10 = vector.broadcast %cst_7 : f32 to vector<64x32xf32>
    %11 = arith.addf %10, %9 : vector<64x32xf32>
    %12 = tpu.reciprocal %11 {approx = true} : vector<64x32xf32> -> vector<64x32xf32>
    %13 = arith.mulf %6, %12 : vector<64x32xf32>
    %14 = arith.truncf %13 : vector<64x32xf32> to vector<64x32xbf16>
    %15 = vector.shape_cast %14 : vector<64x32xbf16> to vector<1x4x4x4x32xbf16>
    %16 = vector.extract_strided_slice %15 {offsets = [0, 0, 0, 0, 0], sizes = [1, 1, 3, 3, 32], strides = [1, 1, 1, 1, 1]} : vector<1x4x4x4x32xbf16> to vector<1x1x3x3x32xbf16>
    %17 = vector.shape_cast %16 : vector<1x1x3x3x32xbf16> to vector<1x3x3x32xbf16>
    %18 = vector.shape_cast %17 : vector<1x3x3x32xbf16> to vector<9x32xbf16>
    %c0_8 = arith.constant 0 : index
    %c0_9 = arith.constant 0 : index
    %19 = vector.load %arg13[%c0_8, %c0_9] : memref<9x512xbf16, #tpu.memory_space<vmem>>, vector<9x32xbf16>
    tpu.vector_store %arg13[%c0_8, %c0_9], %18 {strides = array<i32>} : memref<9x512xbf16, #tpu.memory_space<vmem>>, vector<9x32xbf16>,
    %20 = vector.extract_strided_slice %15 {offsets = [0, 1, 0, 0, 0], sizes = [1, 1, 3, 3, 32], strides = [1, 1, 1, 1, 1]} : vector<1x4x4x4x32xbf16> to vector<1x1x3x3x32xbf16>
    %21 = vector.shape_cast %20 : vector<1x1x3x3x32xbf16> to vector<1x3x3x32xbf16>
    %22 = vector.shape_cast %21 : vector<1x3x3x32xbf16> to vector<9x32xbf16>
    %c0_10 = arith.constant 0 : index
    %c32 = arith.constant 32 : index
    %23 = vector.load %arg13[%c0_10, %c32] : memref<9x512xbf16, #tpu.memory_space<vmem>>, vector<9x32xbf16>
    tpu.vector_store %arg13[%c0_10, %c32], %22 {strides = array<i32>} : memref<9x512xbf16, #tpu.memory_space<vmem>>, vector<9x32xbf16>,
    %24 = vector.extract_strided_slice %15 {offsets = [0, 0, 0, 1, 0], sizes = [1, 1, 3, 3, 32], strides = [1, 1, 1, 1, 1]} : vector<1x4x4x4x32xbf16> to vector<1x1x3x3x32xbf16>
    %25 = vector.shape_cast %24 : vector<1x1x3x3x32xbf16> to vector<1x3x3x32xbf16>
    %26 = vector.shape_cast %25 : vector<1x3x3x32xbf16> to vector<9x32xbf16>
    %c0_11 = arith.constant 0 : index
    %c64 = arith.constant 64 : index
    %27 = vector.load %arg13[%c0_11, %c64] : memref<9x512xbf16, #tpu.memory_space<vmem>>, vector<9x32xbf16>
    tpu.vector_store %arg13[%c0_11, %c64], %26 {strides = array<i32>} : memref<9x512xbf16, #tpu.memory_space<vmem>>, vector<9x32xbf16>,
    %28 = vector.extract_strided_slice %15 {offsets = [0, 1, 0, 1, 0], sizes = [1, 1, 3, 3, 32], strides = [1, 1, 1, 1, 1]} : vector<1x4x4x4x32xbf16> to vector<1x1x3x3x32xbf16>
    %29 = vector.shape_cast %28 : vector<1x1x3x3x32xbf16> to vector<1x3x3x32xbf16>
    %30 = vector.shape_cast %29 : vector<1x3x3x32xbf16> to vector<9x32xbf16>
    %c0_12 = arith.constant 0 : index
    %c96 = arith.constant 96 : index
    %31 = vector.load %arg13[%c0_12, %c96] : memref<9x512xbf16, #tpu.memory_space<vmem>>, vector<9x32xbf16>
    tpu.vector_store %arg13[%c0_12, %c96], %30 {strides = array<i32>} : memref<9x512xbf16, #tpu.memory_space<vmem>>, vector<9x32xbf16>,
    %32 = vector.extract_strided_slice %15 {offsets = [0, 2, 0, 0, 0], sizes = [1, 1, 3, 3, 32], strides = [1, 1, 1, 1, 1]} : vector<1x4x4x4x32xbf16> to vector<1x1x3x3x32xbf16>
    %33 = vector.shape_cast %32 : vector<1x1x3x3x32xbf16> to vector<1x3x3x32xbf16>
    %34 = vector.shape_cast %33 : vector<1x3x3x32xbf16> to vector<9x32xbf16>
    %c0_13 = arith.constant 0 : index
    %c128 = arith.constant 128 : index
    %35 = vector.load %arg13[%c0_13, %c128] : memref<9x512xbf16, #tpu.memory_space<vmem>>, vector<9x32xbf16>
    tpu.vector_store %arg13[%c0_13, %c128], %34 {strides = array<i32>} : memref<9x512xbf16, #tpu.memory_space<vmem>>, vector<9x32xbf16>,
    %36 = vector.extract_strided_slice %15 {offsets = [0, 3, 0, 0, 0], sizes = [1, 1, 3, 3, 32], strides = [1, 1, 1, 1, 1]} : vector<1x4x4x4x32xbf16> to vector<1x1x3x3x32xbf16>
    %37 = vector.shape_cast %36 : vector<1x1x3x3x32xbf16> to vector<1x3x3x32xbf16>
    %38 = vector.shape_cast %37 : vector<1x3x3x32xbf16> to vector<9x32xbf16>
    %c0_14 = arith.constant 0 : index
    %c160 = arith.constant 160 : index
    %39 = vector.load %arg13[%c0_14, %c160] : memref<9x512xbf16, #tpu.memory_space<vmem>>, vector<9x32xbf16>
    tpu.vector_store %arg13[%c0_14, %c160], %38 {strides = array<i32>} : memref<9x512xbf16, #tpu.memory_space<vmem>>, vector<9x32xbf16>,
    %40 = vector.extract_strided_slice %15 {offsets = [0, 2, 0, 1, 0], sizes = [1, 1, 3, 3, 32], strides = [1, 1, 1, 1, 1]} : vector<1x4x4x4x32xbf16> to vector<1x1x3x3x32xbf16>
    %41 = vector.shape_cast %40 : vector<1x1x3x3x32xbf16> to vector<1x3x3x32xbf16>
    %42 = vector.shape_cast %41 : vector<1x3x3x32xbf16> to vector<9x32xbf16>
    %c0_15 = arith.constant 0 : index
    %c192 = arith.constant 192 : index
    %43 = vector.load %arg13[%c0_15, %c192] : memref<9x512xbf16, #tpu.memory_space<vmem>>, vector<9x32xbf16>
    tpu.vector_store %arg13[%c0_15, %c192], %42 {strides = array<i32>} : memref<9x512xbf16, #tpu.memory_space<vmem>>, vector<9x32xbf16>,
    %44 = vector.extract_strided_slice %15 {offsets = [0, 3, 0, 1, 0], sizes = [1, 1, 3, 3, 32], strides = [1, 1, 1, 1, 1]} : vector<1x4x4x4x32xbf16> to vector<1x1x3x3x32xbf16>
    %45 = vector.shape_cast %44 : vector<1x1x3x3x32xbf16> to vector<1x3x3x32xbf16>
    %46 = vector.shape_cast %45 : vector<1x3x3x32xbf16> to vector<9x32xbf16>
    %c0_16 = arith.constant 0 : index
    %c224 = arith.constant 224 : index
    %47 = vector.load %arg13[%c0_16, %c224] : memref<9x512xbf16, #tpu.memory_space<vmem>>, vector<9x32xbf16>
    tpu.vector_store %arg13[%c0_16, %c224], %46 {strides = array<i32>} : memref<9x512xbf16, #tpu.memory_space<vmem>>, vector<9x32xbf16>,
    %48 = vector.extract_strided_slice %15 {offsets = [0, 0, 1, 0, 0], sizes = [1, 1, 3, 3, 32], strides = [1, 1, 1, 1, 1]} : vector<1x4x4x4x32xbf16> to vector<1x1x3x3x32xbf16>
    %49 = vector.shape_cast %48 : vector<1x1x3x3x32xbf16> to vector<1x3x3x32xbf16>
    %50 = vector.shape_cast %49 : vector<1x3x3x32xbf16> to vector<9x32xbf16>
    %c0_17 = arith.constant 0 : index
    %c256 = arith.constant 256 : index
    %51 = vector.load %arg13[%c0_17, %c256] : memref<9x512xbf16, #tpu.memory_space<vmem>>, vector<9x32xbf16>
    tpu.vector_store %arg13[%c0_17, %c256], %50 {strides = array<i32>} : memref<9x512xbf16, #tpu.memory_space<vmem>>, vector<9x32xbf16>,
    %52 = vector.extract_strided_slice %15 {offsets = [0, 1, 1, 0, 0], sizes = [1, 1, 3, 3, 32], strides = [1, 1, 1, 1, 1]} : vector<1x4x4x4x32xbf16> to vector<1x1x3x3x32xbf16>
    %53 = vector.shape_cast %52 : vector<1x1x3x3x32xbf16> to vector<1x3x3x32xbf16>
    %54 = vector.shape_cast %53 : vector<1x3x3x32xbf16> to vector<9x32xbf16>
    %c0_18 = arith.constant 0 : index
    %c288 = arith.constant 288 : index
    %55 = vector.load %arg13[%c0_18, %c288] : memref<9x512xbf16, #tpu.memory_space<vmem>>, vector<9x32xbf16>
    tpu.vector_store %arg13[%c0_18, %c288], %54 {strides = array<i32>} : memref<9x512xbf16, #tpu.memory_space<vmem>>, vector<9x32xbf16>,
    %56 = vector.extract_strided_slice %15 {offsets = [0, 0, 1, 1, 0], sizes = [1, 1, 3, 3, 32], strides = [1, 1, 1, 1, 1]} : vector<1x4x4x4x32xbf16> to vector<1x1x3x3x32xbf16>
    %57 = vector.shape_cast %56 : vector<1x1x3x3x32xbf16> to vector<1x3x3x32xbf16>
    %58 = vector.shape_cast %57 : vector<1x3x3x32xbf16> to vector<9x32xbf16>
    %c0_19 = arith.constant 0 : index
    %c320 = arith.constant 320 : index
    %59 = vector.load %arg13[%c0_19, %c320] : memref<9x512xbf16, #tpu.memory_space<vmem>>, vector<9x32xbf16>
    tpu.vector_store %arg13[%c0_19, %c320], %58 {strides = array<i32>} : memref<9x512xbf16, #tpu.memory_space<vmem>>, vector<9x32xbf16>,
    %60 = vector.extract_strided_slice %15 {offsets = [0, 1, 1, 1, 0], sizes = [1, 1, 3, 3, 32], strides = [1, 1, 1, 1, 1]} : vector<1x4x4x4x32xbf16> to vector<1x1x3x3x32xbf16>
    %61 = vector.shape_cast %60 : vector<1x1x3x3x32xbf16> to vector<1x3x3x32xbf16>
    %62 = vector.shape_cast %61 : vector<1x3x3x32xbf16> to vector<9x32xbf16>
    %c0_20 = arith.constant 0 : index
    %c352 = arith.constant 352 : index
    %63 = vector.load %arg13[%c0_20, %c352] : memref<9x512xbf16, #tpu.memory_space<vmem>>, vector<9x32xbf16>
    tpu.vector_store %arg13[%c0_20, %c352], %62 {strides = array<i32>} : memref<9x512xbf16, #tpu.memory_space<vmem>>, vector<9x32xbf16>,
    %64 = vector.extract_strided_slice %15 {offsets = [0, 2, 1, 0, 0], sizes = [1, 1, 3, 3, 32], strides = [1, 1, 1, 1, 1]} : vector<1x4x4x4x32xbf16> to vector<1x1x3x3x32xbf16>
    %65 = vector.shape_cast %64 : vector<1x1x3x3x32xbf16> to vector<1x3x3x32xbf16>
    %66 = vector.shape_cast %65 : vector<1x3x3x32xbf16> to vector<9x32xbf16>
    %c0_21 = arith.constant 0 : index
    %c384 = arith.constant 384 : index
    %67 = vector.load %arg13[%c0_21, %c384] : memref<9x512xbf16, #tpu.memory_space<vmem>>, vector<9x32xbf16>
    tpu.vector_store %arg13[%c0_21, %c384], %66 {strides = array<i32>} : memref<9x512xbf16, #tpu.memory_space<vmem>>, vector<9x32xbf16>,
    %68 = vector.extract_strided_slice %15 {offsets = [0, 3, 1, 0, 0], sizes = [1, 1, 3, 3, 32], strides = [1, 1, 1, 1, 1]} : vector<1x4x4x4x32xbf16> to vector<1x1x3x3x32xbf16>
    %69 = vector.shape_cast %68 : vector<1x1x3x3x32xbf16> to vector<1x3x3x32xbf16>
    %70 = vector.shape_cast %69 : vector<1x3x3x32xbf16> to vector<9x32xbf16>
    %c0_22 = arith.constant 0 : index
    %c416 = arith.constant 416 : index
    %71 = vector.load %arg13[%c0_22, %c416] : memref<9x512xbf16, #tpu.memory_space<vmem>>, vector<9x32xbf16>
    tpu.vector_store %arg13[%c0_22, %c416], %70 {strides = array<i32>} : memref<9x512xbf16, #tpu.memory_space<vmem>>, vector<9x32xbf16>,
    %72 = vector.extract_strided_slice %15 {offsets = [0, 2, 1, 1, 0], sizes = [1, 1, 3, 3, 32], strides = [1, 1, 1, 1, 1]} : vector<1x4x4x4x32xbf16> to vector<1x1x3x3x32xbf16>
    %73 = vector.shape_cast %72 : vector<1x1x3x3x32xbf16> to vector<1x3x3x32xbf16>
    %74 = vector.shape_cast %73 : vector<1x3x3x32xbf16> to vector<9x32xbf16>
    %c0_23 = arith.constant 0 : index
    %c448 = arith.constant 448 : index
    %75 = vector.load %arg13[%c0_23, %c448] : memref<9x512xbf16, #tpu.memory_space<vmem>>, vector<9x32xbf16>
    tpu.vector_store %arg13[%c0_23, %c448], %74 {strides = array<i32>} : memref<9x512xbf16, #tpu.memory_space<vmem>>, vector<9x32xbf16>,
    %76 = vector.extract_strided_slice %15 {offsets = [0, 3, 1, 1, 0], sizes = [1, 1, 3, 3, 32], strides = [1, 1, 1, 1, 1]} : vector<1x4x4x4x32xbf16> to vector<1x1x3x3x32xbf16>
    %77 = vector.shape_cast %76 : vector<1x1x3x3x32xbf16> to vector<1x3x3x32xbf16>
    %78 = vector.shape_cast %77 : vector<1x3x3x32xbf16> to vector<9x32xbf16>
    %c0_24 = arith.constant 0 : index
    %c480 = arith.constant 480 : index
    %79 = vector.load %arg13[%c0_24, %c480] : memref<9x512xbf16, #tpu.memory_space<vmem>>, vector<9x32xbf16>
    tpu.vector_store %arg13[%c0_24, %c480], %78 {strides = array<i32>} : memref<9x512xbf16, #tpu.memory_space<vmem>>, vector<9x32xbf16>,
    %c0_25 = arith.constant 0 : index
    %c0_26 = arith.constant 0 : index
    %80 = vector.load %arg13[%c0_25, %c0_26] : memref<9x512xbf16, #tpu.memory_space<vmem>>, vector<9x512xbf16>
    %c0_27 = arith.constant 0 : index
    %c0_28 = arith.constant 0 : index
    %81 = vector.load %arg4[%c0_27, %c0_28] : memref<512x64xbf16, #tpu.memory_space<vmem>>, vector<512x64xbf16>
    %cst_29 = arith.constant dense<0.000000e+00> : vector<9x64xf32>
    %82 = tpu.matmul %80, %81, %cst_29 {dimension_numbers = #tpu.dot_dimension_numbers<[1], [0], [0], [1], [0, 0, 1, 1], [], []>} : vector<9x512xbf16>, vector<512x64xbf16>, vector<9x64xf32> -> vector<9x64xf32>
    %c0_30 = arith.constant 0 : index
    %c0_31 = arith.constant 0 : index
    %83 = vector.load %arg5[%c0_30, %c0_31] : memref<1x64xf32, #tpu.memory_space<vmem>>, vector<1x64xf32>
    %84 = vector.broadcast %83 : vector<1x64xf32> to vector<9x64xf32>
    %85 = arith.addf %82, %84 : vector<9x64xf32>
    %cst_32 = arith.constant 0.000000e+00 : f32
    %86 = vector.broadcast %cst_32 : f32 to vector<9x64xf32>
    %87 = arith.subf %86, %85 : vector<9x64xf32>
    %88 = math.exp %87 : vector<9x64xf32>
    %cst_33 = arith.constant 1.000000e+00 : f32
    %89 = vector.broadcast %cst_33 : f32 to vector<9x64xf32>
    %90 = arith.addf %89, %88 : vector<9x64xf32>
    %91 = tpu.reciprocal %90 {approx = true} : vector<9x64xf32> -> vector<9x64xf32>
    %92 = arith.mulf %85, %91 : vector<9x64xf32>
    %93 = arith.truncf %92 : vector<9x64xf32> to vector<9x64xbf16>
    %94 = vector.shape_cast %93 : vector<9x64xbf16> to vector<1x3x3x64xbf16>
    %95 = vector.extract_strided_slice %94 {offsets = [0, 0, 0, 0], sizes = [1, 1, 1, 64], strides = [1, 1, 1, 1]} : vector<1x3x3x64xbf16> to vector<1x1x1x64xbf16>
    %96 = vector.shape_cast %95 : vector<1x1x1x64xbf16> to vector<1x64xbf16>
    %c0_34 = arith.constant 0 : index
    %c0_35 = arith.constant 0 : index
    %97 = vector.load %arg14[%c0_34, %c0_35] : memref<1x576xbf16, #tpu.memory_space<vmem>>, vector<1x64xbf16>
    tpu.vector_store %arg14[%c0_34, %c0_35], %96 {strides = array<i32>} : memref<1x576xbf16, #tpu.memory_space<vmem>>, vector<1x64xbf16>,
    %98 = vector.extract_strided_slice %94 {offsets = [0, 0, 1, 0], sizes = [1, 1, 1, 64], strides = [1, 1, 1, 1]} : vector<1x3x3x64xbf16> to vector<1x1x1x64xbf16>
    %99 = vector.shape_cast %98 : vector<1x1x1x64xbf16> to vector<1x64xbf16>
    %c0_36 = arith.constant 0 : index
    %c64_37 = arith.constant 64 : index
    %100 = vector.load %arg14[%c0_36, %c64_37] : memref<1x576xbf16, #tpu.memory_space<vmem>>, vector<1x64xbf16>
    tpu.vector_store %arg14[%c0_36, %c64_37], %99 {strides = array<i32>} : memref<1x576xbf16, #tpu.memory_space<vmem>>, vector<1x64xbf16>,
    %101 = vector.extract_strided_slice %94 {offsets = [0, 0, 2, 0], sizes = [1, 1, 1, 64], strides = [1, 1, 1, 1]} : vector<1x3x3x64xbf16> to vector<1x1x1x64xbf16>
    %102 = vector.shape_cast %101 : vector<1x1x1x64xbf16> to vector<1x64xbf16>
    %c0_38 = arith.constant 0 : index
    %c128_39 = arith.constant 128 : index
    %103 = vector.load %arg14[%c0_38, %c128_39] : memref<1x576xbf16, #tpu.memory_space<vmem>>, vector<1x64xbf16>
    tpu.vector_store %arg14[%c0_38, %c128_39], %102 {strides = array<i32>} : memref<1x576xbf16, #tpu.memory_space<vmem>>, vector<1x64xbf16>,
    %104 = vector.extract_strided_slice %94 {offsets = [0, 1, 0, 0], sizes = [1, 1, 1, 64], strides = [1, 1, 1, 1]} : vector<1x3x3x64xbf16> to vector<1x1x1x64xbf16>
    %105 = vector.shape_cast %104 : vector<1x1x1x64xbf16> to vector<1x64xbf16>
    %c0_40 = arith.constant 0 : index
    %c192_41 = arith.constant 192 : index
    %106 = vector.load %arg14[%c0_40, %c192_41] : memref<1x576xbf16, #tpu.memory_space<vmem>>, vector<1x64xbf16>
    tpu.vector_store %arg14[%c0_40, %c192_41], %105 {strides = array<i32>} : memref<1x576xbf16, #tpu.memory_space<vmem>>, vector<1x64xbf16>,
    %107 = vector.extract_strided_slice %94 {offsets = [0, 1, 1, 0], sizes = [1, 1, 1, 64], strides = [1, 1, 1, 1]} : vector<1x3x3x64xbf16> to vector<1x1x1x64xbf16>
    %108 = vector.shape_cast %107 : vector<1x1x1x64xbf16> to vector<1x64xbf16>
    %c0_42 = arith.constant 0 : index
    %c256_43 = arith.constant 256 : index
    %109 = vector.load %arg14[%c0_42, %c256_43] : memref<1x576xbf16, #tpu.memory_space<vmem>>, vector<1x64xbf16>
    tpu.vector_store %arg14[%c0_42, %c256_43], %108 {strides = array<i32>} : memref<1x576xbf16, #tpu.memory_space<vmem>>, vector<1x64xbf16>,
    %110 = vector.extract_strided_slice %94 {offsets = [0, 1, 2, 0], sizes = [1, 1, 1, 64], strides = [1, 1, 1, 1]} : vector<1x3x3x64xbf16> to vector<1x1x1x64xbf16>
    %111 = vector.shape_cast %110 : vector<1x1x1x64xbf16> to vector<1x64xbf16>
    %c0_44 = arith.constant 0 : index
    %c320_45 = arith.constant 320 : index
    %112 = vector.load %arg14[%c0_44, %c320_45] : memref<1x576xbf16, #tpu.memory_space<vmem>>, vector<1x64xbf16>
    tpu.vector_store %arg14[%c0_44, %c320_45], %111 {strides = array<i32>} : memref<1x576xbf16, #tpu.memory_space<vmem>>, vector<1x64xbf16>,
    %113 = vector.extract_strided_slice %94 {offsets = [0, 2, 0, 0], sizes = [1, 1, 1, 64], strides = [1, 1, 1, 1]} : vector<1x3x3x64xbf16> to vector<1x1x1x64xbf16>
    %114 = vector.shape_cast %113 : vector<1x1x1x64xbf16> to vector<1x64xbf16>
    %c0_46 = arith.constant 0 : index
    %c384_47 = arith.constant 384 : index
    %115 = vector.load %arg14[%c0_46, %c384_47] : memref<1x576xbf16, #tpu.memory_space<vmem>>, vector<1x64xbf16>
    tpu.vector_store %arg14[%c0_46, %c384_47], %114 {strides = array<i32>} : memref<1x576xbf16, #tpu.memory_space<vmem>>, vector<1x64xbf16>,
    %116 = vector.extract_strided_slice %94 {offsets = [0, 2, 1, 0], sizes = [1, 1, 1, 64], strides = [1, 1, 1, 1]} : vector<1x3x3x64xbf16> to vector<1x1x1x64xbf16>
    %117 = vector.shape_cast %116 : vector<1x1x1x64xbf16> to vector<1x64xbf16>
    %c0_48 = arith.constant 0 : index
    %c448_49 = arith.constant 448 : index
    %118 = vector.load %arg14[%c0_48, %c448_49] : memref<1x576xbf16, #tpu.memory_space<vmem>>, vector<1x64xbf16>
    tpu.vector_store %arg14[%c0_48, %c448_49], %117 {strides = array<i32>} : memref<1x576xbf16, #tpu.memory_space<vmem>>, vector<1x64xbf16>,
    %119 = vector.extract_strided_slice %94 {offsets = [0, 2, 2, 0], sizes = [1, 1, 1, 64], strides = [1, 1, 1, 1]} : vector<1x3x3x64xbf16> to vector<1x1x1x64xbf16>
    %120 = vector.shape_cast %119 : vector<1x1x1x64xbf16> to vector<1x64xbf16>
    %c0_50 = arith.constant 0 : index
    %c512 = arith.constant 512 : index
    %121 = vector.load %arg14[%c0_50, %c512] : memref<1x576xbf16, #tpu.memory_space<vmem>>, vector<1x64xbf16>
    tpu.vector_store %arg14[%c0_50, %c512], %120 {strides = array<i32>} : memref<1x576xbf16, #tpu.memory_space<vmem>>, vector<1x64xbf16>,
    %c0_51 = arith.constant 0 : index
    %c0_52 = arith.constant 0 : index
    %122 = vector.load %arg14[%c0_51, %c0_52] : memref<1x576xbf16, #tpu.memory_space<vmem>>, vector<1x576xbf16>
    %c0_53 = arith.constant 0 : index
    %c0_54 = arith.constant 0 : index
    %123 = vector.load %arg6[%c0_53, %c0_54] : memref<576x64xbf16, #tpu.memory_space<vmem>>, vector<576x64xbf16>
    %cst_55 = arith.constant dense<0.000000e+00> : vector<1x64xf32>
    %124 = tpu.matmul %122, %123, %cst_55 {dimension_numbers = #tpu.dot_dimension_numbers<[1], [0], [0], [1], [0, 0, 1, 1], [], []>} : vector<1x576xbf16>, vector<576x64xbf16>, vector<1x64xf32> -> vector<1x64xf32>
    %c0_56 = arith.constant 0 : index
    %c0_57 = arith.constant 0 : index
    %125 = vector.load %arg7[%c0_56, %c0_57] : memref<1x64xf32, #tpu.memory_space<vmem>>, vector<1x64xf32>
    %126 = arith.addf %124, %125 : vector<1x64xf32>
    %cst_58 = arith.constant 0.000000e+00 : f32
    %127 = vector.broadcast %cst_58 : f32 to vector<1x64xf32>
    %128 = arith.subf %127, %126 : vector<1x64xf32>
    %129 = math.exp %128 : vector<1x64xf32>
    %cst_59 = arith.constant 1.000000e+00 : f32
    %130 = vector.broadcast %cst_59 : f32 to vector<1x64xf32>
    %131 = arith.addf %130, %129 : vector<1x64xf32>
    %132 = tpu.reciprocal %131 {approx = true} : vector<1x64xf32> -> vector<1x64xf32>
    %133 = arith.mulf %126, %132 : vector<1x64xf32>
    %134 = arith.truncf %133 : vector<1x64xf32> to vector<1x64xbf16>
    %135 = vector.shape_cast %134 : vector<1x64xbf16> to vector<1x1x64xbf16>
    %c0_60 = arith.constant 0 : index
    %c0_61 = arith.constant 0 : index
    %c0_62 = arith.constant 0 : index
    %136 = vector.load %arg8[%c0_60, %c0_61, %c0_62] : memref<1x64x256xbf16, #tpu.memory_space<vmem>>, vector<1x64x256xbf16>
    %cst_63 = arith.constant 0.000000e+00 : f32
    %137 = vector.broadcast %cst_63 : f32 to vector<1x256xf32>
    %138 = vector.shape_cast %135 : vector<1x1x64xbf16> to vector<1x64xbf16>
    %139 = vector.shape_cast %136 : vector<1x64x256xbf16> to vector<64x256xbf16>
    %cst_64 = arith.constant dense<0.000000e+00> : vector<1x256xf32>
    %140 = tpu.matmul %138, %139, %cst_64 {dimension_numbers = #tpu.dot_dimension_numbers<[1], [0], [0], [1], [0, 0, 1, 1], [], []>} : vector<1x64xbf16>, vector<64x256xbf16>, vector<1x256xf32> -> vector<1x256xf32>
    %141 = arith.addf %137, %140 : vector<1x256xf32>
    %c0_65 = arith.constant 0 : index
    %c0_66 = arith.constant 0 : index
    %142 = vector.load %arg9[%c0_65, %c0_66] : memref<1x256xf32, #tpu.memory_space<vmem>>, vector<1x256xf32>
    %143 = arith.addf %141, %142 : vector<1x256xf32>
    %cst_67 = arith.constant 0.000000e+00 : f32
    %144 = vector.broadcast %cst_67 : f32 to vector<1x256xf32>
    %145 = arith.subf %144, %143 : vector<1x256xf32>
    %146 = math.exp %145 : vector<1x256xf32>
    %cst_68 = arith.constant 1.000000e+00 : f32
    %147 = vector.broadcast %cst_68 : f32 to vector<1x256xf32>
    %148 = arith.addf %147, %146 : vector<1x256xf32>
    %149 = tpu.reciprocal %148 {approx = true} : vector<1x256xf32> -> vector<1x256xf32>
    %150 = arith.mulf %143, %149 : vector<1x256xf32>
    %151 = arith.truncf %150 : vector<1x256xf32> to vector<1x256xbf16>
    %c0_69 = arith.constant 0 : index
    %c0_70 = arith.constant 0 : index
    %152 = vector.load %arg10[%c0_69, %c0_70] : memref<256x2xbf16, #tpu.memory_space<vmem>>, vector<256x2xbf16>
    %cst_71 = arith.constant dense<0.000000e+00> : vector<1x2xf32>
    %153 = tpu.matmul %151, %152, %cst_71 {dimension_numbers = #tpu.dot_dimension_numbers<[1], [0], [0], [1], [0, 0, 1, 1], [], []>} : vector<1x256xbf16>, vector<256x2xbf16>, vector<1x2xf32> -> vector<1x2xf32>
    %c0_72 = arith.constant 0 : index
    %c0_73 = arith.constant 0 : index
    %154 = vector.load %arg11[%c0_72, %c0_73] : memref<1x2xf32, #tpu.memory_space<vmem>>, vector<1x2xf32>
    %155 = arith.addf %153, %154 : vector<1x2xf32>
    %156 = vector.shape_cast %155 : vector<1x2xf32> to vector<1x1x2xf32>
    %c0_74 = arith.constant 0 : index
    %c0_75 = arith.constant 0 : index
    %c0_76 = arith.constant 0 : index
    %157 = vector.load %arg12[%c0_74, %c0_75, %c0_76] : memref<1x1x2xf32, #tpu.memory_space<vmem>>, vector<1x1x2xf32>
    tpu.vector_store %arg12[%c0_74, %c0_75, %c0_76], %156 {strides = array<i32>} : memref<1x1x2xf32, #tpu.memory_space<vmem>>, vector<1x1x2xf32>,
    return
  }
  func.func @transform_0(%arg0: i32) -> (i32, i32, i32) {
    %c0_i32 = arith.constant 0 : i32
    %c0_i32_0 = arith.constant 0 : i32
    %c0_i32_1 = arith.constant 0 : i32
    return %arg0, %c0_i32, %c0_i32_0 : i32, i32, i32
  }
  func.func @transform_1(%arg0: i32) -> (i32, i32) {
    %c0_i32 = arith.constant 0 : i32
    %c0_i32_0 = arith.constant 0 : i32
    %c0_i32_1 = arith.constant 0 : i32
    return %c0_i32, %c0_i32_0 : i32, i32
  }
  func.func @transform_2(%arg0: i32) -> (i32, i32) {
    %c0_i32 = arith.constant 0 : i32
    %c0_i32_0 = arith.constant 0 : i32
    %c0_i32_1 = arith.constant 0 : i32
    return %c0_i32, %c0_i32_0 : i32, i32
  }
  func.func @transform_3(%arg0: i32) -> (i32, i32) {
    %c0_i32 = arith.constant 0 : i32
    %c0_i32_0 = arith.constant 0 : i32
    %c0_i32_1 = arith.constant 0 : i32
    return %c0_i32, %c0_i32_0 : i32, i32
  }
  func.func @transform_4(%arg0: i32) -> (i32, i32) {
    %c0_i32 = arith.constant 0 : i32
    %c0_i32_0 = arith.constant 0 : i32
    %c0_i32_1 = arith.constant 0 : i32
    return %c0_i32, %c0_i32_0 : i32, i32
  }
  func.func @transform_5(%arg0: i32) -> (i32, i32) {
    %c0_i32 = arith.constant 0 : i32
    %c0_i32_0 = arith.constant 0 : i32
    %c0_i32_1 = arith.constant 0 : i32
    return %c0_i32, %c0_i32_0 : i32, i32
  }
  func.func @transform_6(%arg0: i32) -> (i32, i32) {
    %c0_i32 = arith.constant 0 : i32
    %c0_i32_0 = arith.constant 0 : i32
    %c0_i32_1 = arith.constant 0 : i32
    return %c0_i32, %c0_i32_0 : i32, i32
  }
  func.func @transform_7(%arg0: i32) -> (i32, i32, i32) {
    %c0_i32 = arith.constant 0 : i32
    %c0_i32_0 = arith.constant 0 : i32
    %c0_i32_1 = arith.constant 0 : i32
    %c0_i32_2 = arith.constant 0 : i32
    return %c0_i32, %c0_i32_0, %c0_i32_1 : i32, i32, i32
  }
  func.func @transform_8(%arg0: i32) -> (i32, i32) {
    %c0_i32 = arith.constant 0 : i32
    %c0_i32_0 = arith.constant 0 : i32
    %c0_i32_1 = arith.constant 0 : i32
    return %c0_i32, %c0_i32_0 : i32, i32
  }
  func.func @transform_9(%arg0: i32) -> (i32, i32) {
    %c0_i32 = arith.constant 0 : i32
    %c0_i32_0 = arith.constant 0 : i32
    %c0_i32_1 = arith.constant 0 : i32
    return %c0_i32, %c0_i32_0 : i32, i32
  }
  func.func @transform_10(%arg0: i32) -> (i32, i32) {
    %c0_i32 = arith.constant 0 : i32
    %c0_i32_0 = arith.constant 0 : i32
    %c0_i32_1 = arith.constant 0 : i32
    return %c0_i32, %c0_i32_0 : i32, i32
  }
  func.func @transform_11(%arg0: i32) -> (i32, i32, i32) {
    %c0_i32 = arith.constant 0 : i32
    %c0_i32_0 = arith.constant 0 : i32
    %c0_i32_1 = arith.constant 0 : i32
    return %arg0, %c0_i32, %c0_i32_0 : i32, i32, i32
  }
}

</mosaic_0001>

<llo_original>
// kernel: atari_rnd_value_forward.1
$region0: #{atari_rnd_value_forward.1}
  #allocation0 [shape = 'u32[]', space=smem, size = 0x4, offset = 0x4, fixed_abs, tag = 'smem constant byte address 0x4 - core index']
  #allocation1 [shape = 'u32[144,128]{1,0:T(1,128)}', space=vmem, size = 0x12000, scoped, tag = 'internal scratch']
  #allocation2 [shape = 'bf16[9,512]{1,0:T(8,128)(2,1)}', space=vmem, size = 0x4000, scoped, tag = 'scratch operand']
  #allocation3 [shape = 'bf16[1,576]{1,0:T(2,128)(2,1)}', space=vmem, size = 0xa00, scoped, tag = 'scratch operand']
  %s0 = inlined_call_operand.vmem [shape: bf16[2,64,256], index: 0, kind: input, shape index: {}]
  %s1 = inlined_call_operand.vmem [shape: bf16[256,32], index: 1, kind: input, shape index: {}]
  %s2 = inlined_call_operand.vmem [shape: f32[1,32], index: 2, kind: input, shape index: {}]
  %s3 = inlined_call_operand.vmem [shape: bf16[512,64], index: 3, kind: input, shape index: {}]
  %s4 = inlined_call_operand.vmem [shape: f32[1,64], index: 4, kind: input, shape index: {}]
  %s5 = inlined_call_operand.vmem [shape: bf16[576,64], index: 5, kind: input, shape index: {}]
  %s6 = inlined_call_operand.vmem [shape: f32[1,64], index: 6, kind: input, shape index: {}]
  %s7 = inlined_call_operand.vmem [shape: bf16[1,64,256], index: 7, kind: input, shape index: {}]
  %s8 = inlined_call_operand.vmem [shape: f32[1,256], index: 8, kind: input, shape index: {}]
  %s9 = inlined_call_operand.vmem [shape: bf16[256,2], index: 9, kind: input, shape index: {}]
  %s10 = inlined_call_operand.vmem [shape: f32[1,2], index: 10, kind: input, shape index: {}]
  %s11 = inlined_call_operand.vmem [shape: f32[2,1,2], index: 11, kind: output, shape index: {}]
  %s12 = sld [smem:[#allocation0]]
  $region77: #{atari_rnd_value_forward.1} parent=0
    _
  %s14 = ssub.s32 1, %s12
  %s15 = scalar_select 0, %s14, %s12
  loop: start=0, step=1, limit=4
  $region2: #{atari_rnd_value_forward.1} parent=0 // loop_pre_header
    _
  $region3: #{atari_rnd_value_forward.1} parent=0 // loop_header
    %s17 = sphi 0, %s21
    %p18 = scmp.ge.s32.totalorder %s17, 4
    %s27 = sphi 0, %s29
    %s30 = sphi 0, %s27
    %s31 = sphi 0, %s30
    %s47 = sphi 0, %s31
    %s51 = sphi 0, %s51
    %s53 = sphi 0, %s51
    %s54 = sphi 0, %s53
    %s68 = sphi 0, %s54
    %s72 = sphi 0, %s72
    %s74 = sphi 0, %s72
    %s75 = sphi 0, %s74
    %s89 = sphi 0, %s75
    %s93 = sphi 0, %s93
    %s95 = sphi 0, %s93
    %s96 = sphi 0, %s95
    %s110 = sphi 0, %s96
    %s114 = sphi 0, %s114
    %s116 = sphi 0, %s114
    %s117 = sphi 0, %s116
    %s131 = sphi 0, %s117
    %s135 = sphi 0, %s135
    %s137 = sphi 0, %s135
    %s138 = sphi 0, %s137
    %s152 = sphi 0, %s138
    %s156 = sphi 0, %s156
    %s158 = sphi 0, %s156
    %s159 = sphi 0, %s158
    %s173 = sphi 0, %s159
    %s177 = sphi 0, %s177
    %s179 = sphi 0, %s177
    %s180 = sphi 0, %s179
    %s194 = sphi 0, %s180
    %s198 = sphi 0, %s198
    %s200 = sphi 0, %s198
    %s201 = sphi 0, %s200
    %s215 = sphi 0, %s201
    %s219 = sphi 0, %s219
    %s221 = sphi 0, %s219
    %s222 = sphi 0, %s221
    %s236 = sphi 0, %s222
    %s240 = sphi 0, %s240
    %s242 = sphi 0, %s240
    %s243 = sphi 0, %s242
    %s257 = sphi 0, %s243
    %s263 = sphi 0, %s265
    %s266 = sphi 0, %s263
    %s267 = sphi 0, %s266
    %s283 = sphi 0, %s267
  $region4: #{atari_rnd_value_forward.1} parent=0 // loop_header_branch
    %20 = sbr.rel (%p18) target = $region8
  $region5: #{atari_rnd_value_forward.1} parent=0 // loop_body
    %s22 = ssub.s32 %s17, 1
    %s23 = ssub.s32 %s17, 2
    %s24 = sadd.s32 %s17, 1
    %s25 = ssub.s32 %s17, %s24
    %p26 = scmp.eq.s32.totalorder %s25, 0
    %s28 = sadd.s32 %s27, 1
    %s29 = scalar_select %p26, %s27, %s28
    %p32 = pneg %p26
    %p33 = scmp.eq.s32.totalorder %s17, 1
    %p34 = por %p32, %p33
    %p35 = scmp.ne.s32.totalorder %s27, %s30
    %p36 = scmp.eq.s32.totalorder %s17, 0
    %p37 = por %p35, %p36
    %p38 = scmp.ne.s32.totalorder %s27, %s30
    %p39 = scmp.eq.s32.totalorder %s22, 1
    %p40 = por %p38, %p39
    %p41 = scmp.ne.s32.totalorder %s30, %s31
    %p42 = scmp.eq.s32.totalorder %s22, 0
    %p43 = por %p41, %p42
    %p44 = scmp.ne.s32.totalorder %s30, %s31
    %p45 = scmp.eq.s32.totalorder %s23, 1
    %p46 = por %p44, %p45
    %p48 = scmp.ne.s32.totalorder %s31, %s47
    %p49 = scmp.eq.s32.totalorder %s23, 0
    %p50 = por %p48, %p49
    %s52 = sadd.s32 %s51, 1
    %p55 = scmp.eq.s32.totalorder %s17, 1
    %p56 = scmp.ne.s32.totalorder %s51, %s53
    %p57 = scmp.eq.s32.totalorder %s17, 0
    %p58 = por %p56, %p57
    %p59 = scmp.ne.s32.totalorder %s51, %s53
    %p60 = scmp.eq.s32.totalorder %s22, 1
    %p61 = por %p59, %p60
    %p62 = scmp.ne.s32.totalorder %s53, %s54
    %p63 = scmp.eq.s32.totalorder %s22, 0
    %p64 = por %p62, %p63
    %p65 = scmp.ne.s32.totalorder %s53, %s54
    %p66 = scmp.eq.s32.totalorder %s23, 1
    %p67 = por %p65, %p66
    %p69 = scmp.ne.s32.totalorder %s54, %s68
    %p70 = scmp.eq.s32.totalorder %s23, 0
    %p71 = por %p69, %p70
    %s73 = sadd.s32 %s72, 1
    %p76 = scmp.eq.s32.totalorder %s17, 1
    %p77 = scmp.ne.s32.totalorder %s72, %s74
    %p78 = scmp.eq.s32.totalorder %s17, 0
    %p79 = por %p77, %p78
    %p80 = scmp.ne.s32.totalorder %s72, %s74
    %p81 = scmp.eq.s32.totalorder %s22, 1
    %p82 = por %p80, %p81
    %p83 = scmp.ne.s32.totalorder %s74, %s75
    %p84 = scmp.eq.s32.totalorder %s22, 0
    %p85 = por %p83, %p84
    %p86 = scmp.ne.s32.totalorder %s74, %s75
    %p87 = scmp.eq.s32.totalorder %s23, 1
    %p88 = por %p86, %p87
    %p90 = scmp.ne.s32.totalorder %s75, %s89
    %p91 = scmp.eq.s32.totalorder %s23, 0
    %p92 = por %p90, %p91
    %s94 = sadd.s32 %s93, 1
    %p97 = scmp.eq.s32.totalorder %s17, 1
    %p98 = scmp.ne.s32.totalorder %s93, %s95
    %p99 = scmp.eq.s32.totalorder %s17, 0
    %p100 = por %p98, %p99
    %p101 = scmp.ne.s32.totalorder %s93, %s95
    %p102 = scmp.eq.s32.totalorder %s22, 1
    %p103 = por %p101, %p102
    %p104 = scmp.ne.s32.totalorder %s95, %s96
    %p105 = scmp.eq.s32.totalorder %s22, 0
    %p106 = por %p104, %p105
    %p107 = scmp.ne.s32.totalorder %s95, %s96
    %p108 = scmp.eq.s32.totalorder %s23, 1
    %p109 = por %p107, %p108
    %p111 = scmp.ne.s32.totalorder %s96, %s110
    %p112 = scmp.eq.s32.totalorder %s23, 0
    %p113 = por %p111, %p112
    %s115 = sadd.s32 %s114, 1
    %p118 = scmp.eq.s32.totalorder %s17, 1
    %p119 = scmp.ne.s32.totalorder %s114, %s116
    %p120 = scmp.eq.s32.totalorder %s17, 0
    %p121 = por %p119, %p120
    %p122 = scmp.ne.s32.totalorder %s114, %s116
    %p123 = scmp.eq.s32.totalorder %s22, 1
    %p124 = por %p122, %p123
    %p125 = scmp.ne.s32.totalorder %s116, %s117
    %p126 = scmp.eq.s32.totalorder %s22, 0
    %p127 = por %p125, %p126
    %p128 = scmp.ne.s32.totalorder %s116, %s117
    %p129 = scmp.eq.s32.totalorder %s23, 1
    %p130 = por %p128, %p129
    %p132 = scmp.ne.s32.totalorder %s117, %s131
    %p133 = scmp.eq.s32.totalorder %s23, 0
    %p134 = por %p132, %p133
    %s136 = sadd.s32 %s135, 1
    %p139 = scmp.eq.s32.totalorder %s17, 1
    %p140 = scmp.ne.s32.totalorder %s135, %s137
    %p141 = scmp.eq.s32.totalorder %s17, 0
    %p142 = por %p140, %p141
    %p143 = scmp.ne.s32.totalorder %s135, %s137
    %p144 = scmp.eq.s32.totalorder %s22, 1
    %p145 = por %p143, %p144
    %p146 = scmp.ne.s32.totalorder %s137, %s138
    %p147 = scmp.eq.s32.totalorder %s22, 0
    %p148 = por %p146, %p147
    %p149 = scmp.ne.s32.totalorder %s137, %s138
    %p150 = scmp.eq.s32.totalorder %s23, 1
    %p151 = por %p149, %p150
    %p153 = scmp.ne.s32.totalorder %s138, %s152
    %p154 = scmp.eq.s32.totalorder %s23, 0
    %p155 = por %p153, %p154
    %s157 = sadd.s32 %s156, 1
    %p160 = scmp.eq.s32.totalorder %s17, 1
    %p161 = scmp.ne.s32.totalorder %s156, %s158
    %p162 = scmp.eq.s32.totalorder %s17, 0
    %p163 = por %p161, %p162
    %p164 = scmp.ne.s32.totalorder %s156, %s158
    %p165 = scmp.eq.s32.totalorder %s22, 1
    %p166 = por %p164, %p165
    %p167 = scmp.ne.s32.totalorder %s158, %s159
    %p168 = scmp.eq.s32.totalorder %s22, 0
    %p169 = por %p167, %p168
    %p170 = scmp.ne.s32.totalorder %s158, %s159
    %p171 = scmp.eq.s32.totalorder %s23, 1
    %p172 = por %p170, %p171
    %p174 = scmp.ne.s32.totalorder %s159, %s173
    %p175 = scmp.eq.s32.totalorder %s23, 0
    %p176 = por %p174, %p175
    %s178 = sadd.s32 %s177, 1
    %p181 = scmp.eq.s32.totalorder %s17, 1
    %p182 = scmp.ne.s32.totalorder %s177, %s179
    %p183 = scmp.eq.s32.totalorder %s17, 0
    %p184 = por %p182, %p183
    %p185 = scmp.ne.s32.totalorder %s177, %s179
    %p186 = scmp.eq.s32.totalorder %s22, 1
    %p187 = por %p185, %p186
    %p188 = scmp.ne.s32.totalorder %s179, %s180
    %p189 = scmp.eq.s32.totalorder %s22, 0
    %p190 = por %p188, %p189
    %p191 = scmp.ne.s32.totalorder %s179, %s180
    %p192 = scmp.eq.s32.totalorder %s23, 1
    %p193 = por %p191, %p192
    %p195 = scmp.ne.s32.totalorder %s180, %s194
    %p196 = scmp.eq.s32.totalorder %s23, 0
    %p197 = por %p195, %p196
    %s199 = sadd.s32 %s198, 1
    %p202 = scmp.eq.s32.totalorder %s17, 1
    %p203 = scmp.ne.s32.totalorder %s198, %s200
    %p204 = scmp.eq.s32.totalorder %s17, 0
    %p205 = por %p203, %p204
    %p206 = scmp.ne.s32.totalorder %s198, %s200
    %p207 = scmp.eq.s32.totalorder %s22, 1
    %p208 = por %p206, %p207
    %p209 = scmp.ne.s32.totalorder %s200, %s201
    %p210 = scmp.eq.s32.totalorder %s22, 0
    %p211 = por %p209, %p210
    %p212 = scmp.ne.s32.totalorder %s200, %s201
    %p213 = scmp.eq.s32.totalorder %s23, 1
    %p214 = por %p212, %p213
    %p216 = scmp.ne.s32.totalorder %s201, %s215
    %p217 = scmp.eq.s32.totalorder %s23, 0
    %p218 = por %p216, %p217
    %s220 = sadd.s32 %s219, 1
    %p223 = scmp.eq.s32.totalorder %s17, 1
    %p224 = scmp.ne.s32.totalorder %s219, %s221
    %p225 = scmp.eq.s32.totalorder %s17, 0
    %p226 = por %p224, %p225
    %p227 = scmp.ne.s32.totalorder %s219, %s221
    %p228 = scmp.eq.s32.totalorder %s22, 1
    %p229 = por %p227, %p228
    %p230 = scmp.ne.s32.totalorder %s221, %s222
    %p231 = scmp.eq.s32.totalorder %s22, 0
    %p232 = por %p230, %p231
    %p233 = scmp.ne.s32.totalorder %s221, %s222
    %p234 = scmp.eq.s32.totalorder %s23, 1
    %p235 = por %p233, %p234
    %p237 = scmp.ne.s32.totalorder %s222, %s236
    %p238 = scmp.eq.s32.totalorder %s23, 0
    %p239 = por %p237, %p238
    %s241 = sadd.s32 %s240, 1
    %p244 = scmp.eq.s32.totalorder %s17, 1
    %p245 = scmp.ne.s32.totalorder %s240, %s242
    %p246 = scmp.eq.s32.totalorder %s17, 0
    %p247 = por %p245, %p246
    %p248 = scmp.ne.s32.totalorder %s240, %s242
    %p249 = scmp.eq.s32.totalorder %s22, 1
    %p250 = por %p248, %p249
    %p251 = scmp.ne.s32.totalorder %s242, %s243
    %p252 = scmp.eq.s32.totalorder %s22, 0
    %p253 = por %p251, %p252
    %p254 = scmp.ne.s32.totalorder %s242, %s243
    %p255 = scmp.eq.s32.totalorder %s23, 1
    %p256 = por %p254, %p255
    %p258 = scmp.ne.s32.totalorder %s243, %s257
    %p259 = scmp.eq.s32.totalorder %s23, 0
    %p260 = por %p258, %p259
    %s261 = ssub.s32 %s17, %s24
    %p262 = scmp.eq.s32.totalorder %s261, 0
    %s264 = sadd.s32 %s263, 1
    %s265 = scalar_select %p262, %s263, %s264
    %p268 = pneg %p262
    %p269 = scmp.eq.s32.totalorder %s17, 1
    %p270 = por %p268, %p269
    %p271 = scmp.ne.s32.totalorder %s263, %s266
    %p272 = scmp.eq.s32.totalorder %s17, 0
    %p273 = por %p271, %p272
    %p274 = scmp.ne.s32.totalorder %s263, %s266
    %p275 = scmp.eq.s32.totalorder %s22, 1
    %p276 = por %p274, %p275
    %p277 = scmp.ne.s32.totalorder %s266, %s267
    %p278 = scmp.eq.s32.totalorder %s22, 0
    %p279 = por %p277, %p278
    %p280 = scmp.ne.s32.totalorder %s266, %s267
    %p281 = scmp.eq.s32.totalorder %s23, 1
    %p282 = por %p280, %p281
    %p284 = scmp.ne.s32.totalorder %s267, %s283
    %p285 = scmp.eq.s32.totalorder %s23, 0
    %p286 = por %p284, %p285
    %p287 = scmp.le.s32.totalorder 1, %s17
    %p288 = scmp.lt.s32.totalorder %s17, 3
    %p289 = pnand %p287, %p288
    %p290 = pneg %p289
    // Predicated region
    $region9: #{atari_rnd_value_forward.1} parent=5 // pred_check
      _
    $region10: #{atari_rnd_value_forward.1} parent=5 // pred_check_branch
      %292 = sbr.rel (%p289) target = $region12
    $region11: #{atari_rnd_value_forward.1} parent=5 // pred_region
      %s293 = ssub.s32 %s17, 1
      // Predicated region
      $region13: #{atari_rnd_value_forward.1} parent=11 // pred_check
        %p294 = pneg %p64
      $region14: #{atari_rnd_value_forward.1} parent=11 // pred_check_branch
        %296 = sbr.rel (%p294) target = $region16
      $region15: #{atari_rnd_value_forward.1} parent=11 // pred_region
        _
      $region16: #{atari_rnd_value_forward.1} parent=11 // pred_fallthru
        _
      // Predicated region
      $region17: #{atari_rnd_value_forward.1} parent=11 // pred_check
        %p297 = pneg %p85
      $region18: #{atari_rnd_value_forward.1} parent=11 // pred_check_branch
        %299 = sbr.rel (%p297) target = $region20
      $region19: #{atari_rnd_value_forward.1} parent=11 // pred_region
        _
      $region20: #{atari_rnd_value_forward.1} parent=11 // pred_fallthru
        _
      // Predicated region
      $region21: #{atari_rnd_value_forward.1} parent=11 // pred_check
        %p300 = pneg %p106
      $region22: #{atari_rnd_value_forward.1} parent=11 // pred_check_branch
        %302 = sbr.rel (%p300) target = $region24
      $region23: #{atari_rnd_value_forward.1} parent=11 // pred_region
        _
      $region24: #{atari_rnd_value_forward.1} parent=11 // pred_fallthru
        _
      // Predicated region
      $region25: #{atari_rnd_value_forward.1} parent=11 // pred_check
        %p303 = pneg %p127
      $region26: #{atari_rnd_value_forward.1} parent=11 // pred_check_branch
        %305 = sbr.rel (%p303) target = $region28
      $region27: #{atari_rnd_value_forward.1} parent=11 // pred_region
        _
      $region28: #{atari_rnd_value_forward.1} parent=11 // pred_fallthru
        _
      // Predicated region
      $region29: #{atari_rnd_value_forward.1} parent=11 // pred_check
        %p306 = pneg %p148
      $region30: #{atari_rnd_value_forward.1} parent=11 // pred_check_branch
        %308 = sbr.rel (%p306) target = $region32
      $region31: #{atari_rnd_value_forward.1} parent=11 // pred_region
        _
      $region32: #{atari_rnd_value_forward.1} parent=11 // pred_fallthru
        _
      // Predicated region
      $region33: #{atari_rnd_value_forward.1} parent=11 // pred_check
        %p309 = pneg %p169
      $region34: #{atari_rnd_value_forward.1} parent=11 // pred_check_branch
        %311 = sbr.rel (%p309) target = $region36
      $region35: #{atari_rnd_value_forward.1} parent=11 // pred_region
        _
      $region36: #{atari_rnd_value_forward.1} parent=11 // pred_fallthru
        _
      // Predicated region
      $region37: #{atari_rnd_value_forward.1} parent=11 // pred_check
        %p312 = pneg %p190
      $region38: #{atari_rnd_value_forward.1} parent=11 // pred_check_branch
        %314 = sbr.rel (%p312) target = $region40
      $region39: #{atari_rnd_value_forward.1} parent=11 // pred_region
        _
      $region40: #{atari_rnd_value_forward.1} parent=11 // pred_fallthru
        _
      // Predicated region
      $region41: #{atari_rnd_value_forward.1} parent=11 // pred_check
        %p315 = pneg %p211
      $region42: #{atari_rnd_value_forward.1} parent=11 // pred_check_branch
        %317 = sbr.rel (%p315) target = $region44
      $region43: #{atari_rnd_value_forward.1} parent=11 // pred_region
        _
      $region44: #{atari_rnd_value_forward.1} parent=11 // pred_fallthru
        _
      // Predicated region
      $region45: #{atari_rnd_value_forward.1} parent=11 // pred_check
        %p318 = pneg %p232
      $region46: #{atari_rnd_value_forward.1} parent=11 // pred_check_branch
        %320 = sbr.rel (%p318) target = $region48
      $region47: #{atari_rnd_value_forward.1} parent=11 // pred_region
        _
      $region48: #{atari_rnd_value_forward.1} parent=11 // pred_fallthru
        _
      // Predicated region
      $region49: #{atari_rnd_value_forward.1} parent=11 // pred_check
        %p321 = pneg %p253
      $region50: #{atari_rnd_value_forward.1} parent=11 // pred_check_branch
        %323 = sbr.rel (%p321) target = $region52
      $region51: #{atari_rnd_value_forward.1} parent=11 // pred_region
        _
      $region52: #{atari_rnd_value_forward.1} parent=11 // pred_fallthru
        _
    $region12: #{atari_rnd_value_forward.1} parent=5 // pred_fallthru
      _
    %p324 = scmp.lt.s32.totalorder %s17, 2
    // Predicated region
    $region53: #{atari_rnd_value_forward.1} parent=5 // pred_check
      %p325 = pneg %p324
    $region54: #{atari_rnd_value_forward.1} parent=5 // pred_check_branch
      %327 = sbr.rel (%p325) target = $region56
    $region55: #{atari_rnd_value_forward.1} parent=5 // pred_region
      // Predicated region
      $region57: #{atari_rnd_value_forward.1} parent=55 // pred_check
        %p328 = pneg %p37
      $region58: #{atari_rnd_value_forward.1} parent=55 // pred_check_branch
        %330 = sbr.rel (%p328) target = $region60
      $region59: #{atari_rnd_value_forward.1} parent=55 // pred_region
        %p331 = scmp.lt.s32.totalorder %s17, 1
        %s332 = scalar_select %p331, %s17, 1
        %s333 = smul.addr %s332, 16
        %s334 = smul.addr %s333, 4
        %s335 = scalar_lea.vmem %s0, %s334
      $region60: #{atari_rnd_value_forward.1} parent=55 // pred_fallthru
        _
    $region56: #{atari_rnd_value_forward.1} parent=5 // pred_fallthru
      _
    %p336 = scmp.le.s32.totalorder 1, %s17
    %p337 = scmp.lt.s32.totalorder %s17, 3
    %p338 = pnand %p336, %p337
    %p339 = pneg %p338
    // Predicated region
    $region61: #{atari_rnd_value_forward.1} parent=5 // pred_check
      _
    $region62: #{atari_rnd_value_forward.1} parent=5 // pred_check_branch
      %341 = sbr.rel (%p338) target = $region64
    $region63: #{atari_rnd_value_forward.1} parent=5 // pred_region
      %s342 = ssub.s32 %s17, 1
      %p343 = scmp.lt.s32.totalorder %s22, 1
      %s344 = scalar_select %p343, %s22, 1
      %s345 = smul.addr %s344, 16
      %s346 = smul.addr %s345, 4
      %s347 = scalar_lea.vmem %s0, %s346
      %p348 = pneg %p43
      %p349 = pneg %p40
      %p350 = pneg %p64
      %p351 = pneg %p61
      %p352 = pneg %p85
      %p353 = pneg %p82
      %p354 = pneg %p106
      %p355 = pneg %p103
      %p356 = pneg %p127
      %p357 = pneg %p124
      %p358 = pneg %p148
      %p359 = pneg %p145
      %p360 = pneg %p169
      %p361 = pneg %p166
      %p362 = pneg %p190
      %p363 = pneg %p187
      %p364 = pneg %p211
      %p365 = pneg %p208
      %p366 = pneg %p232
      %p367 = pneg %p229
      %p368 = pneg %p253
      %p369 = pneg %p250
      %p370 = pneg %p279
      %p371 = pneg %p276
      %p372 = scmp.lt.s32.totalorder %s22, 1
      %s373 = scalar_select %p372, %s22, 1
      %s374 = scalar_lea.vmem %s11, %s373
      %p375 = scmp.lt.s32.totalorder %s22, 1
      %s376 = scalar_select %p375, %s22, 1
      %s377 = smul.addr %s376, 16
      %s378 = smul.addr %s377, 4
      %s379 = scalar_lea.vmem %s0, %s378
      %p380 = scmp.lt.s32.totalorder %s22, 1
      %s381 = scalar_select %p380, %s22, 1
      %s382 = scalar_lea.vmem %s11, %s381
      %v384 = vld [vmem:[%s379] sm:$0xff]
      %v385 = vld [vmem:[%s379 + $0x8] sm:$0xff]
      %v386 = vld [vmem:[%s379 + $0x10] sm:$0xff]
      %v387 = vld [vmem:[%s379 + $0x18] sm:$0xff]
      %v388 = vld [vmem:[%s379 + $0x20] sm:$0xff]
      %v389 = vld [vmem:[%s379 + $0x28] sm:$0xff]
      %v390 = vld [vmem:[%s379 + $0x30] sm:$0xff]
      %v391 = vld [vmem:[%s379 + $0x38] sm:$0xff]
      %v392 = vld [vmem:[%s1] sm:$0xf]
      %v393 = vld [vmem:[%s1 + $0x4] sm:$0xf]
      %v394 = vld [vmem:[%s1 + $0x8] sm:$0xf]
      %v395 = vld [vmem:[%s1 + $0xc] sm:$0xf]
      %v396 = vld [vmem:[%s1 + $0x10] sm:$0xf]
      %v397 = vld [vmem:[%s1 + $0x14] sm:$0xf]
      %v398 = vld [vmem:[%s1 + $0x18] sm:$0xf]
      %v399 = vld [vmem:[%s1 + $0x1c] sm:$0xf]
      %v400 = vld [vmem:[%s1 + $0x20] sm:$0xf]
      %v401 = vld [vmem:[%s1 + $0x24] sm:$0xf]
      %v402 = vld [vmem:[%s1 + $0x28] sm:$0xf]
      %v403 = vld [vmem:[%s1 + $0x2c] sm:$0xf]
      %v404 = vld [vmem:[%s1 + $0x30] sm:$0xf]
      %v405 = vld [vmem:[%s1 + $0x34] sm:$0xf]
      %v406 = vld [vmem:[%s1 + $0x38] sm:$0xf]
      %v407 = vld [vmem:[%s1 + $0x3c] sm:$0xf]
      %v408 = vld [vmem:[%s1 + $0x40] sm:$0xf]
      %v409 = vld [vmem:[%s1 + $0x44] sm:$0xf]
      %v410 = vld [vmem:[%s1 + $0x48] sm:$0xf]
      %v411 = vld [vmem:[%s1 + $0x4c] sm:$0xf]
      %v412 = vld [vmem:[%s1 + $0x50] sm:$0xf]
      %v413 = vld [vmem:[%s1 + $0x54] sm:$0xf]
      %v414 = vld [vmem:[%s1 + $0x58] sm:$0xf]
      %v415 = vld [vmem:[%s1 + $0x5c] sm:$0xf]
      %v416 = vld [vmem:[%s1 + $0x60] sm:$0xf]
      %v417 = vld [vmem:[%s1 + $0x64] sm:$0xf]
      %v418 = vld [vmem:[%s1 + $0x68] sm:$0xf]
      %v419 = vld [vmem:[%s1 + $0x6c] sm:$0xf]
      %v420 = vld [vmem:[%s1 + $0x70] sm:$0xf]
      %v421 = vld [vmem:[%s1 + $0x74] sm:$0xf]
      %v422 = vld [vmem:[%s1 + $0x78] sm:$0xf]
      %v423 = vld [vmem:[%s1 + $0x7c] sm:$0xf]
      %v424 = vld [vmem:[%s2] sm:$0x1]
      %v426 = vlaneseq
      %v427 = vshrl.u32 %v426, 7
      %v428 = vsub.s32 0, %v427
      %v429 = vrot.slane %v424, %v428
      %v439 = vunpack.c.l.b16 %v384
      %v440 = vunpack.c.h.b16 %v384
      %v441 = vunpack.c.l.b16 %v385
      %v442 = vunpack.c.h.b16 %v385
      %v443 = vunpack.c.l.b16 %v386
      %v444 = vunpack.c.h.b16 %v386
      %v445 = vunpack.c.l.b16 %v387
      %v446 = vunpack.c.h.b16 %v387
      %v447 = vunpack.c.l.b16 %v388
      %v448 = vunpack.c.h.b16 %v388
      %v449 = vunpack.c.l.b16 %v389
      %v450 = vunpack.c.h.b16 %v389
      %v451 = vunpack.c.l.b16 %v390
      %v452 = vunpack.c.h.b16 %v390
      %v453 = vunpack.c.l.b16 %v391
      %v454 = vunpack.c.h.b16 %v391
      %v455 = vpack.c.b16 %v441, %v439
      %v456 = vpack.c.b16 %v442, %v440
      %v457 = vpack.c.b16 %v445, %v443
      %v458 = vpack.c.b16 %v446, %v444
      %v459 = vpack.c.b16 %v449, %v447
      %v460 = vpack.c.b16 %v450, %v448
      %v461 = vpack.c.b16 %v453, %v451
      %v462 = vpack.c.b16 %v454, %v452
      %v503 = vunpack.c.l.b16 %v392
      %v504 = vunpack.c.l.b16 %v393
      %v505 = vunpack.c.l.b16 %v394
      %v506 = vunpack.c.l.b16 %v395
      %v507 = vunpack.c.l.b16 %v396
      %v508 = vunpack.c.l.b16 %v397
      %v509 = vunpack.c.l.b16 %v398
      %v510 = vunpack.c.l.b16 %v399
      %v511 = vunpack.c.l.b16 %v400
      %v512 = vunpack.c.l.b16 %v401
      %v513 = vunpack.c.l.b16 %v402
      %v514 = vunpack.c.l.b16 %v403
      %v515 = vunpack.c.l.b16 %v404
      %v516 = vunpack.c.l.b16 %v405
      %v517 = vunpack.c.l.b16 %v406
      %v518 = vunpack.c.l.b16 %v407
      %v519 = vunpack.c.l.b16 %v408
      %v520 = vunpack.c.l.b16 %v409
      %v521 = vunpack.c.l.b16 %v410
      %v522 = vunpack.c.l.b16 %v411
      %v523 = vunpack.c.l.b16 %v412
      %v524 = vunpack.c.l.b16 %v413
      %v525 = vunpack.c.l.b16 %v414
      %v526 = vunpack.c.l.b16 %v415
      %v527 = vunpack.c.l.b16 %v416
      %v528 = vunpack.c.l.b16 %v417
      %v529 = vunpack.c.l.b16 %v418
      %v530 = vunpack.c.l.b16 %v419
      %v531 = vunpack.c.l.b16 %v420
      %v532 = vunpack.c.l.b16 %v421
      %v533 = vunpack.c.l.b16 %v422
      %v534 = vunpack.c.l.b16 %v423
      %v535 = vpack.c.b16 %v504, %v503
      %v536 = vpack.c.b16 %v506, %v505
      %v537 = vpack.c.b16 %v508, %v507
      %v538 = vpack.c.b16 %v510, %v509
      %v539 = vpack.c.b16 %v512, %v511
      %v540 = vpack.c.b16 %v514, %v513
      %v541 = vpack.c.b16 %v516, %v515
      %v542 = vpack.c.b16 %v518, %v517
      %v543 = vpack.c.b16 %v520, %v519
      %v544 = vpack.c.b16 %v522, %v521
      %v545 = vpack.c.b16 %v524, %v523
      %v546 = vpack.c.b16 %v526, %v525
      %v547 = vpack.c.b16 %v528, %v527
      %v548 = vpack.c.b16 %v530, %v529
      %v549 = vpack.c.b16 %v532, %v531
      %v550 = vpack.c.b16 %v534, %v533
      %567 = vmatprep.subr.bf16.mxu0 0
      %568 = vmatpush1.bf16.msra.mxu0 %v535
      %569 = vmatprep.subr.bf16.mxu0 0
      %570 = vmatpush1.bf16.msra.mxu0 %v536
      %571 = vmatprep.subr.bf16.mxu0 0
      %572 = vmatpush1.bf16.msra.mxu0 %v537
      %573 = vmatprep.subr.bf16.mxu0 0
      %574 = vmatpush1.bf16.msra.mxu0 %v538
      %575 = vmatprep.subr.bf16.mxu0 0
      %576 = vmatpush1.bf16.msra.mxu0 %v539
      %577 = vmatprep.subr.bf16.mxu0 0
      %578 = vmatpush1.bf16.msra.mxu0 %v540
      %579 = vmatprep.subr.bf16.mxu0 0
      %580 = vmatpush1.bf16.msra.mxu0 %v541
      %581 = vmatprep.subr.bf16.mxu0 0
      %582 = vmatpush1.bf16.msra.mxu0 %v542
      %583 = vmatprep.subr.bf16.mxu0 0
      %584 = vmatpush1.bf16.msra.mxu0 %v543
      %585 = vmatprep.subr.bf16.mxu0 0
      %586 = vmatpush1.bf16.msra.mxu0 %v544
      %587 = vmatprep.subr.bf16.mxu0 0
      %588 = vmatpush1.bf16.msra.mxu0 %v545
      %589 = vmatprep.subr.bf16.mxu0 0
      %590 = vmatpush1.bf16.msra.mxu0 %v546
      %591 = vmatprep.subr.bf16.mxu0 0
      %592 = vmatpush1.bf16.msra.mxu0 %v547
      %593 = vmatprep.subr.bf16.mxu0 0
      %594 = vmatpush1.bf16.msra.mxu0 %v548
      %595 = vmatprep.subr.bf16.mxu0 0
      %596 = vmatpush1.bf16.msra.mxu0 %v549
      %597 = vmatprep.subr.bf16.mxu0 0
      %598 = vmatpush1.bf16.msra.mxu0 %v550
      %599 = vmatprep.mubr.bf16.mxu0 %v456
      %600 = vmatmul.mubr.bf16.gmra.mrb[0].mxu0 %v455
      %v601 = vpop.f32.mrb[0].mxu0
      %v602 = vadd.f32 %v429, %v601
      %v603 = vpop.f32.mrb[0].mxu0
      %v604 = vpop.f32.mrb[0].mxu0
      %v605 = vadd.f32 %v429, %v604
      %v606 = vpop.f32.mrb[0].mxu0
      %607 = vmatprep.mubr.bf16.mxu0 %v458
      %608 = vmatmul.mubr.bf16.gmra.mrb[0].mxu0 %v457
      %v609 = vpop.f32.mrb[0].mxu0
      %v610 = vadd.f32 %v429, %v609
      %v611 = vpop.f32.mrb[0].mxu0
      %v612 = vpop.f32.mrb[0].mxu0
      %v613 = vadd.f32 %v429, %v612
      %v614 = vpop.f32.mrb[0].mxu0
      %615 = vmatprep.mubr.bf16.mxu0 %v460
      %616 = vmatmul.mubr.bf16.gmra.mrb[0].mxu0 %v459
      %v617 = vpop.f32.mrb[0].mxu0
      %v618 = vadd.f32 %v429, %v617
      %v619 = vpop.f32.mrb[0].mxu0
      %v620 = vpop.f32.mrb[0].mxu0
      %v621 = vadd.f32 %v429, %v620
      %v622 = vpop.f32.mrb[0].mxu0
      %623 = vmatprep.mubr.bf16.mxu0 %v462
      %624 = vmatmul.mubr.bf16.gmra.mrb[0].mxu0 %v461
      %v625 = vpop.f32.mrb[0].mxu0
      %v626 = vadd.f32 %v429, %v625
      %v627 = vpop.f32.mrb[0].mxu0
      %v628 = vpop.f32.mrb[0].mxu0
      %v629 = vadd.f32 %v429, %v628
      %v630 = vpop.f32.mrb[0].mxu0
      %631 = vdwg.mxu0
      %v632 = vsub.f32 0.0, %v602
      %v633 = vsub.f32 0.0, %v605
      %v634 = vsub.f32 0.0, %v610
      %v635 = vsub.f32 0.0, %v613
      %v636 = vsub.f32 0.0, %v618
      %v637 = vsub.f32 0.0, %v621
      %v638 = vsub.f32 0.0, %v626
      %v639 = vsub.f32 0.0, %v629
      %v640 = vmul.f32 %v632, 1.442695
      %v641 = vpow.pop %v640
      %v642 = vmul.f32 %v633, 1.442695
      %v643 = vpow.pop %v642
      %v644 = vmul.f32 %v634, 1.442695
      %v645 = vpow.pop %v644
      %v646 = vmul.f32 %v635, 1.442695
      %v647 = vpow.pop %v646
      %v648 = vmul.f32 %v636, 1.442695
      %v649 = vpow.pop %v648
      %v650 = vmul.f32 %v637, 1.442695
      %v651 = vpow.pop %v650
      %v652 = vmul.f32 %v638, 1.442695
      %v653 = vpow.pop %v652
      %v654 = vmul.f32 %v639, 1.442695
      %v655 = vpow.pop %v654
      %v656 = vadd.f32 %v641, 1.0
      %v657 = vadd.f32 %v643, 1.0
      %v658 = vadd.f32 %v645, 1.0
      %v659 = vadd.f32 %v647, 1.0
      %v660 = vadd.f32 %v649, 1.0
      %v661 = vadd.f32 %v651, 1.0
      %v662 = vadd.f32 %v653, 1.0
      %v663 = vadd.f32 %v655, 1.0
      %v664 = vrcp.pop %v656
      %v665 = vrcp.pop %v657
      %v666 = vrcp.pop %v658
      %v667 = vrcp.pop %v659
      %v668 = vrcp.pop %v660
      %v669 = vrcp.pop %v661
      %v670 = vrcp.pop %v662
      %v671 = vrcp.pop %v663
      %v672 = vmul.f32 %v602, %v664
      %v673 = vmul.f32 %v605, %v665
      %v674 = vmul.f32 %v610, %v666
      %v675 = vmul.f32 %v613, %v667
      %v676 = vmul.f32 %v618, %v668
      %v677 = vmul.f32 %v621, %v669
      %v678 = vmul.f32 %v626, %v670
      %v679 = vmul.f32 %v629, %v671
      %v680 = vpack.c.bf16 %v673, %v672
      %v681 = vpack.c.bf16 %v675, %v674
      %v682 = vpack.c.bf16 %v677, %v676
      %v683 = vpack.c.bf16 %v679, %v678
      %v688 = vcombine.high %v680, %v680
      %v690 = vunpack.c.l.s4 1983009808
      %v691 = vunpack.c.0.s8 %v690
      %v692 = vlaneseq
      %v693 = vshrl.u32 %v692, 7
      %v694 = vsub.s32 %v691, %v693
      %v695 = vrot.slane %v680, %v694
      %v697 = vunpack.c.l.s4 1983009808
      %v698 = vunpack.c.0.s8 %v697
      %v699 = vlaneseq
      %v700 = vshrl.u32 %v699, 7
      %v701 = vsub.s32 %v698, %v700
      %v702 = vrot.slane %v688, %v701
      %v703 = vcombine.high %v695, %v695
      %v704 = vcombine.high %v702, %v702
      %v705 = vcombine.high %v681, %v681
      %v707 = vunpack.c.l.s4 1983009808
      %v708 = vunpack.c.0.s8 %v707
      %v709 = vlaneseq
      %v710 = vshrl.u32 %v709, 7
      %v711 = vsub.s32 %v708, %v710
      %v712 = vrot.slane %v681, %v711
      %v714 = vunpack.c.l.s4 1983009808
      %v715 = vunpack.c.0.s8 %v714
      %v716 = vlaneseq
      %v717 = vshrl.u32 %v716, 7
      %v718 = vsub.s32 %v715, %v717
      %v719 = vrot.slane %v705, %v718
      %v720 = vcombine.high %v712, %v712
      %v721 = vcombine.high %v719, %v719
      %v722 = vcombine.high %v682, %v682
      %v724 = vunpack.c.l.s4 1983009808
      %v725 = vunpack.c.0.s8 %v724
      %v726 = vlaneseq
      %v727 = vshrl.u32 %v726, 7
      %v728 = vsub.s32 %v725, %v727
      %v729 = vrot.slane %v682, %v728
      %v731 = vunpack.c.l.s4 1983009808
      %v732 = vunpack.c.0.s8 %v731
      %v733 = vlaneseq
      %v734 = vshrl.u32 %v733, 7
      %v735 = vsub.s32 %v732, %v734
      %v736 = vrot.slane %v722, %v735
      %v737 = vcombine.high %v729, %v729
      %v738 = vcombine.high %v736, %v736
      %v739 = vcombine.high %v683, %v683
      %v741 = vunpack.c.l.s4 1983009808
      %v742 = vunpack.c.0.s8 %v741
      %v743 = vlaneseq
      %v744 = vshrl.u32 %v743, 7
      %v745 = vsub.s32 %v742, %v744
      %v746 = vrot.slane %v683, %v745
      %v748 = vunpack.c.l.s4 1983009808
      %v749 = vunpack.c.0.s8 %v748
      %v750 = vlaneseq
      %v751 = vshrl.u32 %v750, 7
      %v752 = vsub.s32 %v749, %v751
      %v753 = vrot.slane %v739, %v752
      %v754 = vcombine.high %v746, %v746
      %v755 = vcombine.high %v753, %v753
      %v757 = vunpack.c.l.s4 1966171168
      %v758 = vunpack.c.0.s8 %v757
      %v759 = vlaneseq
      %v760 = vshrl.u32 %v759, 7
      %v761 = vsub.s32 %v758, %v760
      %v762 = vrot.slane %v695, %v761
      %v763 = vcombine.high %v762, %v762
      %v765 = vunpack.c.l.s4 1966171168
      %v766 = vunpack.c.0.s8 %v765
      %v767 = vlaneseq
      %v768 = vshrl.u32 %v767, 7
      %v769 = vsub.s32 %v766, %v768
      %v770 = vrot.slane %v703, %v769
      %v771 = vcombine.high %v770, %v770
      %v773 = vunpack.c.l.s4 1966171168
      %v774 = vunpack.c.0.s8 %v773
      %v775 = vlaneseq
      %v776 = vshrl.u32 %v775, 7
      %v777 = vsub.s32 %v774, %v776
      %v778 = vrot.slane %v702, %v777
      %v779 = vcombine.high %v778, %v778
      %v780 = vunpack.i.l.s16 %v762
      %v781 = vunpack.i.h.s16 %v762
      %v782 = vunpack.i.l.s16 %v763
      %v783 = vunpack.i.l.s16 %v770
      %v784 = vunpack.i.h.s16 %v770
      %v785 = vunpack.i.l.s16 %v771
      %v786 = vunpack.i.l.s16 %v778
      %v787 = vunpack.i.h.s16 %v778
      %v788 = vunpack.i.l.s16 %v779
      %v789 = vpack.i.b16 %v781, %v780
      %v790 = vpack.i.b16 %v783, %v782
      %v791 = vpack.i.b16 %v785, %v784
      %v792 = vpack.i.b16 %v787, %v786
      %v794 = vcombine.low %v789, %v791
      %v795 = vcombine.low %v790, %v792
      %v797 = vunpack.c.l.s4 1935823168
      %v798 = vunpack.c.0.s8 %v797
      %v799 = vlaneseq
      %v800 = vshrl.u32 %v799, 7
      %v801 = vsub.s32 %v798, %v800
      %v802 = vrot.slane %v794, %v801
      %v804 = vunpack.c.l.s4 1935823168
      %v805 = vunpack.c.0.s8 %v804
      %v806 = vlaneseq
      %v807 = vshrl.u32 %v806, 7
      %v808 = vsub.s32 %v805, %v807
      %v809 = vrot.slane %v795, %v808
      %v810 = vcombine.low %v802, %v809
      %v812 = vunpack.c.l.s4 1935823168
      %v813 = vunpack.c.0.s8 %v812
      %v814 = vlaneseq
      %v815 = vshrl.u32 %v814, 7
      %v816 = vsub.s32 %v813, %v815
      %v817 = vrot.slane %v810, %v816
      %v819 = vunpack.c.l.s4 1935823168
      %v820 = vunpack.c.0.s8 %v819
      %v821 = vlaneseq
      %v822 = vshrl.u32 %v821, 7
      %v823 = vsub.s32 %v820, %v822
      %v824 = vrot.slane %v788, %v823
      %v826 = vunpack.c.l.s4 1935823168
      %v827 = vunpack.c.0.s8 %v826
      %v828 = vlaneseq
      %v829 = vshrl.u32 %v828, 7
      %v830 = vsub.s32 %v827, %v829
      %v831 = vrot.slane %v824, %v830
      %vm834 = vcmask 257024
      %835 = vst.msk [vmem:[#allocation2] sm:$0xf] %vm834, %v817
      %vm836 = vcmask 253952
      %vm837 = vsmask.f32 256
      %vm838 = vmand %vm836, %vm837
      %v839 = vld [vmem:[#allocation2 + $0x10] sm:$0x1]
      %v840 = vsel %vm838, %v831, %v839
      %841 = vst [vmem:[#allocation2 + $0x10] sm:$0x1] %v840
      %v843 = vunpack.c.l.s4 1966171168
      %v844 = vunpack.c.0.s8 %v843
      %v845 = vlaneseq
      %v846 = vshrl.u32 %v845, 7
      %v847 = vsub.s32 %v844, %v846
      %v848 = vrot.slane %v712, %v847
      %v849 = vcombine.high %v848, %v848
      %v851 = vunpack.c.l.s4 1966171168
      %v852 = vunpack.c.0.s8 %v851
      %v853 = vlaneseq
      %v854 = vshrl.u32 %v853, 7
      %v855 = vsub.s32 %v852, %v854
      %v856 = vrot.slane %v720, %v855
      %v857 = vcombine.high %v856, %v856
      %v859 = vunpack.c.l.s4 1966171168
      %v860 = vunpack.c.0.s8 %v859
      %v861 = vlaneseq
      %v862 = vshrl.u32 %v861, 7
      %v863 = vsub.s32 %v860, %v862
      %v864 = vrot.slane %v719, %v863
      %v865 = vcombine.high %v864, %v864
      %v866 = vunpack.i.l.s16 %v848
      %v867 = vunpack.i.h.s16 %v848
      %v868 = vunpack.i.l.s16 %v849
      %v869 = vunpack.i.l.s16 %v856
      %v870 = vunpack.i.h.s16 %v856
      %v871 = vunpack.i.l.s16 %v857
      %v872 = vunpack.i.l.s16 %v864
      %v873 = vunpack.i.h.s16 %v864
      %v874 = vunpack.i.l.s16 %v865
      %v875 = vpack.i.b16 %v867, %v866
      %v876 = vpack.i.b16 %v869, %v868
      %v877 = vpack.i.b16 %v871, %v870
      %v878 = vpack.i.b16 %v873, %v872
      %v880 = vcombine.low %v875, %v877
      %v881 = vcombine.low %v876, %v878
      %v883 = vunpack.c.l.s4 1935823168
      %v884 = vunpack.c.0.s8 %v883
      %v885 = vlaneseq
      %v886 = vshrl.u32 %v885, 7
      %v887 = vsub.s32 %v884, %v886
      %v888 = vrot.slane %v880, %v887
      %v890 = vunpack.c.l.s4 1935823168
      %v891 = vunpack.c.0.s8 %v890
      %v892 = vlaneseq
      %v893 = vshrl.u32 %v892, 7
      %v894 = vsub.s32 %v891, %v893
      %v895 = vrot.slane %v881, %v894
      %v896 = vcombine.low %v888, %v895
      %v898 = vunpack.c.l.s4 1935823168
      %v899 = vunpack.c.0.s8 %v898
      %v900 = vlaneseq
      %v901 = vshrl.u32 %v900, 7
      %v902 = vsub.s32 %v899, %v901
      %v903 = vrot.slane %v896, %v902
      %v905 = vunpack.c.l.s4 1935823168
      %v906 = vunpack.c.0.s8 %v905
      %v907 = vlaneseq
      %v908 = vshrl.u32 %v907, 7
      %v909 = vsub.s32 %v906, %v908
      %v910 = vrot.slane %v874, %v909
      %v912 = vunpack.c.l.s4 1935823168
      %v913 = vunpack.c.0.s8 %v912
      %v914 = vlaneseq
      %v915 = vshrl.u32 %v914, 7
      %v916 = vsub.s32 %v913, %v915
      %v917 = vrot.slane %v910, %v916
      %918 = vrot.lane.b32.xlu0 %v903, 32
      %v919 = vpop.permute.xlu0 %918
      %920 = vrot.lane.b32.xlu0 %v917, 32
      %v921 = vpop.permute.xlu0 %920
      %vm924 = vcmask 519424
      %925 = vst.msk [vmem:[#allocation2] sm:$0xf] %vm924, %v919
      %vm926 = vcmask 516352
      %vm927 = vmand %vm926, %vm837
      %v928 = vld [vmem:[#allocation2 + $0x10] sm:$0x1]
      %v929 = vsel %vm927, %v921, %v928
      %930 = vst [vmem:[#allocation2 + $0x10] sm:$0x1] %v929
      %v931 = vunpack.i.h.s16 %v763
      %v932 = vunpack.i.h.s16 %v771
      %v933 = vunpack.i.h.s16 %v779
      %v934 = vpack.i.b16 %v782, %v781
      %v935 = vpack.i.b16 %v784, %v931
      %v936 = vpack.i.b16 %v932, %v785
      %v937 = vpack.i.b16 %v788, %v787
      %v939 = vcombine.low %v934, %v936
      %v940 = vcombine.low %v935, %v937
      %v942 = vunpack.c.l.s4 1935823168
      %v943 = vunpack.c.0.s8 %v942
      %v944 = vlaneseq
      %v945 = vshrl.u32 %v944, 7
      %v946 = vsub.s32 %v943, %v945
      %v947 = vrot.slane %v939, %v946
      %v949 = vunpack.c.l.s4 1935823168
      %v950 = vunpack.c.0.s8 %v949
      %v951 = vlaneseq
      %v952 = vshrl.u32 %v951, 7
      %v953 = vsub.s32 %v950, %v952
      %v954 = vrot.slane %v940, %v953
      %v955 = vcombine.low %v947, %v954
      %v957 = vunpack.c.l.s4 1935823168
      %v958 = vunpack.c.0.s8 %v957
      %v959 = vlaneseq
      %v960 = vshrl.u32 %v959, 7
      %v961 = vsub.s32 %v958, %v960
      %v962 = vrot.slane %v955, %v961
      %v964 = vunpack.c.l.s4 1935823168
      %v965 = vunpack.c.0.s8 %v964
      %v966 = vlaneseq
      %v967 = vshrl.u32 %v966, 7
      %v968 = vsub.s32 %v965, %v967
      %v969 = vrot.slane %v933, %v968
      %v971 = vunpack.c.l.s4 1935823168
      %v972 = vunpack.c.0.s8 %v971
      %v973 = vlaneseq
      %v974 = vshrl.u32 %v973, 7
      %v975 = vsub.s32 %v972, %v974
      %v976 = vrot.slane %v969, %v975
      %977 = vrot.lane.b32.xlu0 %v962, 64
      %v978 = vpop.permute.xlu0 %977
      %979 = vrot.lane.b32.xlu0 %v976, 64
      %v980 = vpop.permute.xlu0 %979
      %vm983 = vcmask 781824
      %984 = vst.msk [vmem:[#allocation2] sm:$0xf] %vm983, %v978
      %vm985 = vcmask 778752
      %vm986 = vmand %vm985, %vm837
      %v987 = vld [vmem:[#allocation2 + $0x10] sm:$0x1]
      %v988 = vsel %vm986, %v980, %v987
      %989 = vst [vmem:[#allocation2 + $0x10] sm:$0x1] %v988
      %v990 = vunpack.i.h.s16 %v849
      %v991 = vunpack.i.h.s16 %v857
      %v992 = vunpack.i.h.s16 %v865
      %v993 = vpack.i.b16 %v868, %v867
      %v994 = vpack.i.b16 %v870, %v990
      %v995 = vpack.i.b16 %v991, %v871
      %v996 = vpack.i.b16 %v874, %v873
      %v998 = vcombine.low %v993, %v995
      %v999 = vcombine.low %v994, %v996
      %v1001 = vunpack.c.l.s4 1935823168
      %v1002 = vunpack.c.0.s8 %v1001
      %v1003 = vlaneseq
      %v1004 = vshrl.u32 %v1003, 7
      %v1005 = vsub.s32 %v1002, %v1004
      %v1006 = vrot.slane %v998, %v1005
      %v1008 = vunpack.c.l.s4 1935823168
      %v1009 = vunpack.c.0.s8 %v1008
      %v1010 = vlaneseq
      %v1011 = vshrl.u32 %v1010, 7
      %v1012 = vsub.s32 %v1009, %v1011
      %v1013 = vrot.slane %v999, %v1012
      %v1014 = vcombine.low %v1006, %v1013
      %v1016 = vunpack.c.l.s4 1935823168
      %v1017 = vunpack.c.0.s8 %v1016
      %v1018 = vlaneseq
      %v1019 = vshrl.u32 %v1018, 7
      %v1020 = vsub.s32 %v1017, %v1019
      %v1021 = vrot.slane %v1014, %v1020
      %v1023 = vunpack.c.l.s4 1935823168
      %v1024 = vunpack.c.0.s8 %v1023
      %v1025 = vlaneseq
      %v1026 = vshrl.u32 %v1025, 7
      %v1027 = vsub.s32 %v1024, %v1026
      %v1028 = vrot.slane %v992, %v1027
      %v1030 = vunpack.c.l.s4 1935823168
      %v1031 = vunpack.c.0.s8 %v1030
      %v1032 = vlaneseq
      %v1033 = vshrl.u32 %v1032, 7
      %v1034 = vsub.s32 %v1031, %v1033
      %v1035 = vrot.slane %v1028, %v1034
      %1036 = vrot.lane.b32.xlu0 %v1021, 96
      %v1037 = vpop.permute.xlu0 %1036
      %1038 = vrot.lane.b32.xlu0 %v1035, 96
      %v1039 = vpop.permute.xlu0 %1038
      %vm1042 = vcmask 1044224
      %1043 = vst.msk [vmem:[#allocation2] sm:$0xf] %vm1042, %v1037
      %vm1044 = vcmask 1041152
      %vm1045 = vmand %vm1044, %vm837
      %v1046 = vld [vmem:[#allocation2 + $0x10] sm:$0x1]
      %v1047 = vsel %vm1045, %v1039, %v1046
      %1048 = vst [vmem:[#allocation2 + $0x10] sm:$0x1] %v1047
      %v1050 = vunpack.c.l.s4 1966171168
      %v1051 = vunpack.c.0.s8 %v1050
      %v1052 = vlaneseq
      %v1053 = vshrl.u32 %v1052, 7
      %v1054 = vsub.s32 %v1051, %v1053
      %v1055 = vrot.slane %v729, %v1054
      %v1056 = vcombine.high %v1055, %v1055
      %v1058 = vunpack.c.l.s4 1966171168
      %v1059 = vunpack.c.0.s8 %v1058
      %v1060 = vlaneseq
      %v1061 = vshrl.u32 %v1060, 7
      %v1062 = vsub.s32 %v1059, %v1061
      %v1063 = vrot.slane %v737, %v1062
      %v1064 = vcombine.high %v1063, %v1063
      %v1066 = vunpack.c.l.s4 1966171168
      %v1067 = vunpack.c.0.s8 %v1066
      %v1068 = vlaneseq
      %v1069 = vshrl.u32 %v1068, 7
      %v1070 = vsub.s32 %v1067, %v1069
      %v1071 = vrot.slane %v736, %v1070
      %v1072 = vcombine.high %v1071, %v1071
      %v1073 = vunpack.i.l.s16 %v1055
      %v1074 = vunpack.i.h.s16 %v1055
      %v1075 = vunpack.i.l.s16 %v1056
      %v1076 = vunpack.i.l.s16 %v1063
      %v1077 = vunpack.i.h.s16 %v1063
      %v1078 = vunpack.i.l.s16 %v1064
      %v1079 = vunpack.i.l.s16 %v1071
      %v1080 = vunpack.i.h.s16 %v1071
      %v1081 = vunpack.i.l.s16 %v1072
      %v1082 = vpack.i.b16 %v1074, %v1073
      %v1083 = vpack.i.b16 %v1076, %v1075
      %v1084 = vpack.i.b16 %v1078, %v1077
      %v1085 = vpack.i.b16 %v1080, %v1079
      %v1087 = vcombine.low %v1082, %v1084
      %v1088 = vcombine.low %v1083, %v1085
      %v1090 = vunpack.c.l.s4 1935823168
      %v1091 = vunpack.c.0.s8 %v1090
      %v1092 = vlaneseq
      %v1093 = vshrl.u32 %v1092, 7
      %v1094 = vsub.s32 %v1091, %v1093
      %v1095 = vrot.slane %v1087, %v1094
      %v1097 = vunpack.c.l.s4 1935823168
      %v1098 = vunpack.c.0.s8 %v1097
      %v1099 = vlaneseq
      %v1100 = vshrl.u32 %v1099, 7
      %v1101 = vsub.s32 %v1098, %v1100
      %v1102 = vrot.slane %v1088, %v1101
      %v1103 = vcombine.low %v1095, %v1102
      %v1105 = vunpack.c.l.s4 1935823168
      %v1106 = vunpack.c.0.s8 %v1105
      %v1107 = vlaneseq
      %v1108 = vshrl.u32 %v1107, 7
      %v1109 = vsub.s32 %v1106, %v1108
      %v1110 = vrot.slane %v1103, %v1109
      %v1112 = vunpack.c.l.s4 1935823168
      %v1113 = vunpack.c.0.s8 %v1112
      %v1114 = vlaneseq
      %v1115 = vshrl.u32 %v1114, 7
      %v1116 = vsub.s32 %v1113, %v1115
      %v1117 = vrot.slane %v1081, %v1116
      %v1119 = vunpack.c.l.s4 1935823168
      %v1120 = vunpack.c.0.s8 %v1119
      %v1121 = vlaneseq
      %v1122 = vshrl.u32 %v1121, 7
      %v1123 = vsub.s32 %v1120, %v1122
      %v1124 = vrot.slane %v1117, %v1123
      %1127 = vst.msk [vmem:[#allocation2 + $0x4] sm:$0xf] %vm834, %v1110
      %v1128 = vld [vmem:[#allocation2 + $0x14] sm:$0x1]
      %v1129 = vsel %vm838, %v1124, %v1128
      %1130 = vst [vmem:[#allocation2 + $0x14] sm:$0x1] %v1129
      %v1132 = vunpack.c.l.s4 1966171168
      %v1133 = vunpack.c.0.s8 %v1132
      %v1134 = vlaneseq
      %v1135 = vshrl.u32 %v1134, 7
      %v1136 = vsub.s32 %v1133, %v1135
      %v1137 = vrot.slane %v746, %v1136
      %v1138 = vcombine.high %v1137, %v1137
      %v1140 = vunpack.c.l.s4 1966171168
      %v1141 = vunpack.c.0.s8 %v1140
      %v1142 = vlaneseq
      %v1143 = vshrl.u32 %v1142, 7
      %v1144 = vsub.s32 %v1141, %v1143
      %v1145 = vrot.slane %v754, %v1144
      %v1146 = vcombine.high %v1145, %v1145
      %v1148 = vunpack.c.l.s4 1966171168
      %v1149 = vunpack.c.0.s8 %v1148
      %v1150 = vlaneseq
      %v1151 = vshrl.u32 %v1150, 7
      %v1152 = vsub.s32 %v1149, %v1151
      %v1153 = vrot.slane %v753, %v1152
      %v1154 = vcombine.high %v1153, %v1153
      %v1155 = vunpack.i.l.s16 %v1137
      %v1156 = vunpack.i.h.s16 %v1137
      %v1157 = vunpack.i.l.s16 %v1138
      %v1158 = vunpack.i.l.s16 %v1145
      %v1159 = vunpack.i.h.s16 %v1145
      %v1160 = vunpack.i.l.s16 %v1146
      %v1161 = vunpack.i.l.s16 %v1153
      %v1162 = vunpack.i.h.s16 %v1153
      %v1163 = vunpack.i.l.s16 %v1154
      %v1164 = vpack.i.b16 %v1156, %v1155
      %v1165 = vpack.i.b16 %v1158, %v1157
      %v1166 = vpack.i.b16 %v1160, %v1159
      %v1167 = vpack.i.b16 %v1162, %v1161
      %v1169 = vcombine.low %v1164, %v1166
      %v1170 = vcombine.low %v1165, %v1167
      %v1172 = vunpack.c.l.s4 1935823168
      %v1173 = vunpack.c.0.s8 %v1172
      %v1174 = vlaneseq
      %v1175 = vshrl.u32 %v1174, 7
      %v1176 = vsub.s32 %v1173, %v1175
      %v1177 = vrot.slane %v1169, %v1176
      %v1179 = vunpack.c.l.s4 1935823168
      %v1180 = vunpack.c.0.s8 %v1179
      %v1181 = vlaneseq
      %v1182 = vshrl.u32 %v1181, 7
      %v1183 = vsub.s32 %v1180, %v1182
      %v1184 = vrot.slane %v1170, %v1183
      %v1185 = vcombine.low %v1177, %v1184
      %v1187 = vunpack.c.l.s4 1935823168
      %v1188 = vunpack.c.0.s8 %v1187
      %v1189 = vlaneseq
      %v1190 = vshrl.u32 %v1189, 7
      %v1191 = vsub.s32 %v1188, %v1190
      %v1192 = vrot.slane %v1185, %v1191
      %v1194 = vunpack.c.l.s4 1935823168
      %v1195 = vunpack.c.0.s8 %v1194
      %v1196 = vlaneseq
      %v1197 = vshrl.u32 %v1196, 7
      %v1198 = vsub.s32 %v1195, %v1197
      %v1199 = vrot.slane %v1163, %v1198
      %v1201 = vunpack.c.l.s4 1935823168
      %v1202 = vunpack.c.0.s8 %v1201
      %v1203 = vlaneseq
      %v1204 = vshrl.u32 %v1203, 7
      %v1205 = vsub.s32 %v1202, %v1204
      %v1206 = vrot.slane %v1199, %v1205
      %1207 = vrot.lane.b32.xlu0 %v1192, 32
      %v1208 = vpop.permute.xlu0 %1207
      %1209 = vrot.lane.b32.xlu0 %v1206, 32
      %v1210 = vpop.permute.xlu0 %1209
      %1213 = vst.msk [vmem:[#allocation2 + $0x4] sm:$0xf] %vm924, %v1208
      %v1214 = vld [vmem:[#allocation2 + $0x14] sm:$0x1]
      %v1215 = vsel %vm927, %v1210, %v1214
      %1216 = vst [vmem:[#allocation2 + $0x14] sm:$0x1] %v1215
      %v1217 = vunpack.i.h.s16 %v1056
      %v1218 = vunpack.i.h.s16 %v1064
      %v1219 = vunpack.i.h.s16 %v1072
      %v1220 = vpack.i.b16 %v1075, %v1074
      %v1221 = vpack.i.b16 %v1077, %v1217
      %v1222 = vpack.i.b16 %v1218, %v1078
      %v1223 = vpack.i.b16 %v1081, %v1080
      %v1225 = vcombine.low %v1220, %v1222
      %v1226 = vcombine.low %v1221, %v1223
      %v1228 = vunpack.c.l.s4 1935823168
      %v1229 = vunpack.c.0.s8 %v1228
      %v1230 = vlaneseq
      %v1231 = vshrl.u32 %v1230, 7
      %v1232 = vsub.s32 %v1229, %v1231
      %v1233 = vrot.slane %v1225, %v1232
      %v1235 = vunpack.c.l.s4 1935823168
      %v1236 = vunpack.c.0.s8 %v1235
      %v1237 = vlaneseq
      %v1238 = vshrl.u32 %v1237, 7
      %v1239 = vsub.s32 %v1236, %v1238
      %v1240 = vrot.slane %v1226, %v1239
      %v1241 = vcombine.low %v1233, %v1240
      %v1243 = vunpack.c.l.s4 1935823168
      %v1244 = vunpack.c.0.s8 %v1243
      %v1245 = vlaneseq
      %v1246 = vshrl.u32 %v1245, 7
      %v1247 = vsub.s32 %v1244, %v1246
      %v1248 = vrot.slane %v1241, %v1247
      %v1250 = vunpack.c.l.s4 1935823168
      %v1251 = vunpack.c.0.s8 %v1250
      %v1252 = vlaneseq
      %v1253 = vshrl.u32 %v1252, 7
      %v1254 = vsub.s32 %v1251, %v1253
      %v1255 = vrot.slane %v1219, %v1254
      %v1257 = vunpack.c.l.s4 1935823168
      %v1258 = vunpack.c.0.s8 %v1257
      %v1259 = vlaneseq
      %v1260 = vshrl.u32 %v1259, 7
      %v1261 = vsub.s32 %v1258, %v1260
      %v1262 = vrot.slane %v1255, %v1261
      %1263 = vrot.lane.b32.xlu0 %v1248, 64
      %v1264 = vpop.permute.xlu0 %1263
      %1265 = vrot.lane.b32.xlu0 %v1262, 64
      %v1266 = vpop.permute.xlu0 %1265
      %1269 = vst.msk [vmem:[#allocation2 + $0x4] sm:$0xf] %vm983, %v1264
      %v1270 = vld [vmem:[#allocation2 + $0x14] sm:$0x1]
      %v1271 = vsel %vm986, %v1266, %v1270
      %1272 = vst [vmem:[#allocation2 + $0x14] sm:$0x1] %v1271
      %v1273 = vunpack.i.h.s16 %v1138
      %v1274 = vunpack.i.h.s16 %v1146
      %v1275 = vunpack.i.h.s16 %v1154
      %v1276 = vpack.i.b16 %v1157, %v1156
      %v1277 = vpack.i.b16 %v1159, %v1273
      %v1278 = vpack.i.b16 %v1274, %v1160
      %v1279 = vpack.i.b16 %v1163, %v1162
      %v1281 = vcombine.low %v1276, %v1278
      %v1282 = vcombine.low %v1277, %v1279
      %v1284 = vunpack.c.l.s4 1935823168
      %v1285 = vunpack.c.0.s8 %v1284
      %v1286 = vlaneseq
      %v1287 = vshrl.u32 %v1286, 7
      %v1288 = vsub.s32 %v1285, %v1287
      %v1289 = vrot.slane %v1281, %v1288
      %v1291 = vunpack.c.l.s4 1935823168
      %v1292 = vunpack.c.0.s8 %v1291
      %v1293 = vlaneseq
      %v1294 = vshrl.u32 %v1293, 7
      %v1295 = vsub.s32 %v1292, %v1294
      %v1296 = vrot.slane %v1282, %v1295
      %v1297 = vcombine.low %v1289, %v1296
      %v1299 = vunpack.c.l.s4 1935823168
      %v1300 = vunpack.c.0.s8 %v1299
      %v1301 = vlaneseq
      %v1302 = vshrl.u32 %v1301, 7
      %v1303 = vsub.s32 %v1300, %v1302
      %v1304 = vrot.slane %v1297, %v1303
      %v1306 = vunpack.c.l.s4 1935823168
      %v1307 = vunpack.c.0.s8 %v1306
      %v1308 = vlaneseq
      %v1309 = vshrl.u32 %v1308, 7
      %v1310 = vsub.s32 %v1307, %v1309
      %v1311 = vrot.slane %v1275, %v1310
      %v1313 = vunpack.c.l.s4 1935823168
      %v1314 = vunpack.c.0.s8 %v1313
      %v1315 = vlaneseq
      %v1316 = vshrl.u32 %v1315, 7
      %v1317 = vsub.s32 %v1314, %v1316
      %v1318 = vrot.slane %v1311, %v1317
      %1319 = vrot.lane.b32.xlu0 %v1304, 96
      %v1320 = vpop.permute.xlu0 %1319
      %1321 = vrot.lane.b32.xlu0 %v1318, 96
      %v1322 = vpop.permute.xlu0 %1321
      %1325 = vst.msk [vmem:[#allocation2 + $0x4] sm:$0xf] %vm1042, %v1320
      %v1326 = vld [vmem:[#allocation2 + $0x14] sm:$0x1]
      %v1327 = vsel %vm1045, %v1322, %v1326
      %1328 = vst [vmem:[#allocation2 + $0x14] sm:$0x1] %v1327
      %v1330 = vunpack.c.l.s4 1966171168
      %v1331 = vunpack.c.0.s8 %v1330
      %v1332 = vlaneseq
      %v1333 = vshrl.u32 %v1332, 7
      %v1334 = vsub.s32 %v1331, %v1333
      %v1335 = vrot.slane %v704, %v1334
      %v1336 = vcombine.high %v1335, %v1335
      %v1337 = vunpack.i.l.s16 %v1335
      %v1338 = vunpack.i.h.s16 %v1335
      %v1339 = vunpack.i.l.s16 %v1336
      %v1340 = vpack.i.b16 %v784, %v783
      %v1341 = vpack.i.b16 %v786, %v785
      %v1342 = vpack.i.b16 %v1338, %v1337
      %v1344 = vcombine.low %v1340, %v937
      %v1345 = vcombine.low %v1341, %v1342
      %v1347 = vunpack.c.l.s4 1935823168
      %v1348 = vunpack.c.0.s8 %v1347
      %v1349 = vlaneseq
      %v1350 = vshrl.u32 %v1349, 7
      %v1351 = vsub.s32 %v1348, %v1350
      %v1352 = vrot.slane %v1344, %v1351
      %v1354 = vunpack.c.l.s4 1935823168
      %v1355 = vunpack.c.0.s8 %v1354
      %v1356 = vlaneseq
      %v1357 = vshrl.u32 %v1356, 7
      %v1358 = vsub.s32 %v1355, %v1357
      %v1359 = vrot.slane %v1345, %v1358
      %v1360 = vcombine.low %v1352, %v1359
      %v1362 = vunpack.c.l.s4 1935823168
      %v1363 = vunpack.c.0.s8 %v1362
      %v1364 = vlaneseq
      %v1365 = vshrl.u32 %v1364, 7
      %v1366 = vsub.s32 %v1363, %v1365
      %v1367 = vrot.slane %v1360, %v1366
      %v1369 = vunpack.c.l.s4 1935823168
      %v1370 = vunpack.c.0.s8 %v1369
      %v1371 = vlaneseq
      %v1372 = vshrl.u32 %v1371, 7
      %v1373 = vsub.s32 %v1370, %v1372
      %v1374 = vrot.slane %v1339, %v1373
      %v1376 = vunpack.c.l.s4 1935823168
      %v1377 = vunpack.c.0.s8 %v1376
      %v1378 = vlaneseq
      %v1379 = vshrl.u32 %v1378, 7
      %v1380 = vsub.s32 %v1377, %v1379
      %v1381 = vrot.slane %v1374, %v1380
      %1384 = vst.msk [vmem:[#allocation2 + $0x8] sm:$0xf] %vm834, %v1367
      %v1385 = vld [vmem:[#allocation2 + $0x18] sm:$0x1]
      %v1386 = vsel %vm838, %v1381, %v1385
      %1387 = vst [vmem:[#allocation2 + $0x18] sm:$0x1] %v1386
      %v1389 = vunpack.c.l.s4 1966171168
      %v1390 = vunpack.c.0.s8 %v1389
      %v1391 = vlaneseq
      %v1392 = vshrl.u32 %v1391, 7
      %v1393 = vsub.s32 %v1390, %v1392
      %v1394 = vrot.slane %v721, %v1393
      %v1395 = vcombine.high %v1394, %v1394
      %v1396 = vunpack.i.l.s16 %v1394
      %v1397 = vunpack.i.h.s16 %v1394
      %v1398 = vunpack.i.l.s16 %v1395
      %v1399 = vpack.i.b16 %v870, %v869
      %v1400 = vpack.i.b16 %v872, %v871
      %v1401 = vpack.i.b16 %v1397, %v1396
      %v1403 = vcombine.low %v1399, %v996
      %v1404 = vcombine.low %v1400, %v1401
      %v1406 = vunpack.c.l.s4 1935823168
      %v1407 = vunpack.c.0.s8 %v1406
      %v1408 = vlaneseq
      %v1409 = vshrl.u32 %v1408, 7
      %v1410 = vsub.s32 %v1407, %v1409
      %v1411 = vrot.slane %v1403, %v1410
      %v1413 = vunpack.c.l.s4 1935823168
      %v1414 = vunpack.c.0.s8 %v1413
      %v1415 = vlaneseq
      %v1416 = vshrl.u32 %v1415, 7
      %v1417 = vsub.s32 %v1414, %v1416
      %v1418 = vrot.slane %v1404, %v1417
      %v1419 = vcombine.low %v1411, %v1418
      %v1421 = vunpack.c.l.s4 1935823168
      %v1422 = vunpack.c.0.s8 %v1421
      %v1423 = vlaneseq
      %v1424 = vshrl.u32 %v1423, 7
      %v1425 = vsub.s32 %v1422, %v1424
      %v1426 = vrot.slane %v1419, %v1425
      %v1428 = vunpack.c.l.s4 1935823168
      %v1429 = vunpack.c.0.s8 %v1428
      %v1430 = vlaneseq
      %v1431 = vshrl.u32 %v1430, 7
      %v1432 = vsub.s32 %v1429, %v1431
      %v1433 = vrot.slane %v1398, %v1432
      %v1435 = vunpack.c.l.s4 1935823168
      %v1436 = vunpack.c.0.s8 %v1435
      %v1437 = vlaneseq
      %v1438 = vshrl.u32 %v1437, 7
      %v1439 = vsub.s32 %v1436, %v1438
      %v1440 = vrot.slane %v1433, %v1439
      %1441 = vrot.lane.b32.xlu0 %v1426, 32
      %v1442 = vpop.permute.xlu0 %1441
      %1443 = vrot.lane.b32.xlu0 %v1440, 32
      %v1444 = vpop.permute.xlu0 %1443
      %1447 = vst.msk [vmem:[#allocation2 + $0x8] sm:$0xf] %vm924, %v1442
      %v1448 = vld [vmem:[#allocation2 + $0x18] sm:$0x1]
      %v1449 = vsel %vm927, %v1444, %v1448
      %1450 = vst [vmem:[#allocation2 + $0x18] sm:$0x1] %v1449
      %v1451 = vunpack.i.h.s16 %v1336
      %v1452 = vpack.i.b16 %v787, %v932
      %v1453 = vpack.i.b16 %v933, %v788
      %v1454 = vpack.i.b16 %v1339, %v1338
      %v1456 = vcombine.low %v791, %v1453
      %v1457 = vcombine.low %v1452, %v1454
      %v1459 = vunpack.c.l.s4 1935823168
      %v1460 = vunpack.c.0.s8 %v1459
      %v1461 = vlaneseq
      %v1462 = vshrl.u32 %v1461, 7
      %v1463 = vsub.s32 %v1460, %v1462
      %v1464 = vrot.slane %v1456, %v1463
      %v1466 = vunpack.c.l.s4 1935823168
      %v1467 = vunpack.c.0.s8 %v1466
      %v1468 = vlaneseq
      %v1469 = vshrl.u32 %v1468, 7
      %v1470 = vsub.s32 %v1467, %v1469
      %v1471 = vrot.slane %v1457, %v1470
      %v1472 = vcombine.low %v1464, %v1471
      %v1474 = vunpack.c.l.s4 1935823168
      %v1475 = vunpack.c.0.s8 %v1474
      %v1476 = vlaneseq
      %v1477 = vshrl.u32 %v1476, 7
      %v1478 = vsub.s32 %v1475, %v1477
      %v1479 = vrot.slane %v1472, %v1478
      %v1481 = vunpack.c.l.s4 1935823168
      %v1482 = vunpack.c.0.s8 %v1481
      %v1483 = vlaneseq
      %v1484 = vshrl.u32 %v1483, 7
      %v1485 = vsub.s32 %v1482, %v1484
      %v1486 = vrot.slane %v1451, %v1485
      %v1488 = vunpack.c.l.s4 1935823168
      %v1489 = vunpack.c.0.s8 %v1488
      %v1490 = vlaneseq
      %v1491 = vshrl.u32 %v1490, 7
      %v1492 = vsub.s32 %v1489, %v1491
      %v1493 = vrot.slane %v1486, %v1492
      %1494 = vrot.lane.b32.xlu0 %v1479, 64
      %v1495 = vpop.permute.xlu0 %1494
      %1496 = vrot.lane.b32.xlu0 %v1493, 64
      %v1497 = vpop.permute.xlu0 %1496
      %1500 = vst.msk [vmem:[#allocation2 + $0x8] sm:$0xf] %vm983, %v1495
      %v1501 = vld [vmem:[#allocation2 + $0x18] sm:$0x1]
      %v1502 = vsel %vm986, %v1497, %v1501
      %1503 = vst [vmem:[#allocation2 + $0x18] sm:$0x1] %v1502
      %v1504 = vunpack.i.h.s16 %v1395
      %v1505 = vpack.i.b16 %v873, %v991
      %v1506 = vpack.i.b16 %v992, %v874
      %v1507 = vpack.i.b16 %v1398, %v1397
      %v1509 = vcombine.low %v877, %v1506
      %v1510 = vcombine.low %v1505, %v1507
      %v1512 = vunpack.c.l.s4 1935823168
      %v1513 = vunpack.c.0.s8 %v1512
      %v1514 = vlaneseq
      %v1515 = vshrl.u32 %v1514, 7
      %v1516 = vsub.s32 %v1513, %v1515
      %v1517 = vrot.slane %v1509, %v1516
      %v1519 = vunpack.c.l.s4 1935823168
      %v1520 = vunpack.c.0.s8 %v1519
      %v1521 = vlaneseq
      %v1522 = vshrl.u32 %v1521, 7
      %v1523 = vsub.s32 %v1520, %v1522
      %v1524 = vrot.slane %v1510, %v1523
      %v1525 = vcombine.low %v1517, %v1524
      %v1527 = vunpack.c.l.s4 1935823168
      %v1528 = vunpack.c.0.s8 %v1527
      %v1529 = vlaneseq
      %v1530 = vshrl.u32 %v1529, 7
      %v1531 = vsub.s32 %v1528, %v1530
      %v1532 = vrot.slane %v1525, %v1531
      %v1534 = vunpack.c.l.s4 1935823168
      %v1535 = vunpack.c.0.s8 %v1534
      %v1536 = vlaneseq
      %v1537 = vshrl.u32 %v1536, 7
      %v1538 = vsub.s32 %v1535, %v1537
      %v1539 = vrot.slane %v1504, %v1538
      %v1541 = vunpack.c.l.s4 1935823168
      %v1542 = vunpack.c.0.s8 %v1541
      %v1543 = vlaneseq
      %v1544 = vshrl.u32 %v1543, 7
      %v1545 = vsub.s32 %v1542, %v1544
      %v1546 = vrot.slane %v1539, %v1545
      %1547 = vrot.lane.b32.xlu0 %v1532, 96
      %v1548 = vpop.permute.xlu0 %1547
      %1549 = vrot.lane.b32.xlu0 %v1546, 96
      %v1550 = vpop.permute.xlu0 %1549
      %1553 = vst.msk [vmem:[#allocation2 + $0x8] sm:$0xf] %vm1042, %v1548
      %v1554 = vld [vmem:[#allocation2 + $0x18] sm:$0x1]
      %v1555 = vsel %vm1045, %v1550, %v1554
      %1556 = vst [vmem:[#allocation2 + $0x18] sm:$0x1] %v1555
      %v1558 = vunpack.c.l.s4 1966171168
      %v1559 = vunpack.c.0.s8 %v1558
      %v1560 = vlaneseq
      %v1561 = vshrl.u32 %v1560, 7
      %v1562 = vsub.s32 %v1559, %v1561
      %v1563 = vrot.slane %v738, %v1562
      %v1564 = vcombine.high %v1563, %v1563
      %v1565 = vunpack.i.l.s16 %v1563
      %v1566 = vunpack.i.h.s16 %v1563
      %v1567 = vunpack.i.l.s16 %v1564
      %v1568 = vpack.i.b16 %v1077, %v1076
      %v1569 = vpack.i.b16 %v1079, %v1078
      %v1570 = vpack.i.b16 %v1566, %v1565
      %v1572 = vcombine.low %v1568, %v1223
      %v1573 = vcombine.low %v1569, %v1570
      %v1575 = vunpack.c.l.s4 1935823168
      %v1576 = vunpack.c.0.s8 %v1575
      %v1577 = vlaneseq
      %v1578 = vshrl.u32 %v1577, 7
      %v1579 = vsub.s32 %v1576, %v1578
      %v1580 = vrot.slane %v1572, %v1579
      %v1582 = vunpack.c.l.s4 1935823168
      %v1583 = vunpack.c.0.s8 %v1582
      %v1584 = vlaneseq
      %v1585 = vshrl.u32 %v1584, 7
      %v1586 = vsub.s32 %v1583, %v1585
      %v1587 = vrot.slane %v1573, %v1586
      %v1588 = vcombine.low %v1580, %v1587
      %v1590 = vunpack.c.l.s4 1935823168
      %v1591 = vunpack.c.0.s8 %v1590
      %v1592 = vlaneseq
      %v1593 = vshrl.u32 %v1592, 7
      %v1594 = vsub.s32 %v1591, %v1593
      %v1595 = vrot.slane %v1588, %v1594
      %v1597 = vunpack.c.l.s4 1935823168
      %v1598 = vunpack.c.0.s8 %v1597
      %v1599 = vlaneseq
      %v1600 = vshrl.u32 %v1599, 7
      %v1601 = vsub.s32 %v1598, %v1600
      %v1602 = vrot.slane %v1567, %v1601
      %v1604 = vunpack.c.l.s4 1935823168
      %v1605 = vunpack.c.0.s8 %v1604
      %v1606 = vlaneseq
      %v1607 = vshrl.u32 %v1606, 7
      %v1608 = vsub.s32 %v1605, %v1607
      %v1609 = vrot.slane %v1602, %v1608
      %1612 = vst.msk [vmem:[#allocation2 + $0xc] sm:$0xf] %vm834, %v1595
      %v1613 = vld [vmem:[#allocation2 + $0x1c] sm:$0x1]
      %v1614 = vsel %vm838, %v1609, %v1613
      %1615 = vst [vmem:[#allocation2 + $0x1c] sm:$0x1] %v1614
      %v1617 = vunpack.c.l.s4 1966171168
      %v1618 = vunpack.c.0.s8 %v1617
      %v1619 = vlaneseq
      %v1620 = vshrl.u32 %v1619, 7
      %v1621 = vsub.s32 %v1618, %v1620
      %v1622 = vrot.slane %v755, %v1621
      %v1623 = vcombine.high %v1622, %v1622
      %v1624 = vunpack.i.l.s16 %v1622
      %v1625 = vunpack.i.h.s16 %v1622
      %v1626 = vunpack.i.l.s16 %v1623
      %v1627 = vpack.i.b16 %v1159, %v1158
      %v1628 = vpack.i.b16 %v1161, %v1160
      %v1629 = vpack.i.b16 %v1625, %v1624
      %v1631 = vcombine.low %v1627, %v1279
      %v1632 = vcombine.low %v1628, %v1629
      %v1634 = vunpack.c.l.s4 1935823168
      %v1635 = vunpack.c.0.s8 %v1634
      %v1636 = vlaneseq
      %v1637 = vshrl.u32 %v1636, 7
      %v1638 = vsub.s32 %v1635, %v1637
      %v1639 = vrot.slane %v1631, %v1638
      %v1641 = vunpack.c.l.s4 1935823168
      %v1642 = vunpack.c.0.s8 %v1641
      %v1643 = vlaneseq
      %v1644 = vshrl.u32 %v1643, 7
      %v1645 = vsub.s32 %v1642, %v1644
      %v1646 = vrot.slane %v1632, %v1645
      %v1647 = vcombine.low %v1639, %v1646
      %v1649 = vunpack.c.l.s4 1935823168
      %v1650 = vunpack.c.0.s8 %v1649
      %v1651 = vlaneseq
      %v1652 = vshrl.u32 %v1651, 7
      %v1653 = vsub.s32 %v1650, %v1652
      %v1654 = vrot.slane %v1647, %v1653
      %v1656 = vunpack.c.l.s4 1935823168
      %v1657 = vunpack.c.0.s8 %v1656
      %v1658 = vlaneseq
      %v1659 = vshrl.u32 %v1658, 7
      %v1660 = vsub.s32 %v1657, %v1659
      %v1661 = vrot.slane %v1626, %v1660
      %v1663 = vunpack.c.l.s4 1935823168
      %v1664 = vunpack.c.0.s8 %v1663
      %v1665 = vlaneseq
      %v1666 = vshrl.u32 %v1665, 7
      %v1667 = vsub.s32 %v1664, %v1666
      %v1668 = vrot.slane %v1661, %v1667
      %1669 = vrot.lane.b32.xlu0 %v1654, 32
      %v1670 = vpop.permute.xlu0 %1669
      %1671 = vrot.lane.b32.xlu0 %v1668, 32
      %v1672 = vpop.permute.xlu0 %1671
      %1675 = vst.msk [vmem:[#allocation2 + $0xc] sm:$0xf] %vm924, %v1670
      %v1676 = vld [vmem:[#allocation2 + $0x1c] sm:$0x1]
      %v1677 = vsel %vm927, %v1672, %v1676
      %1678 = vst [vmem:[#allocation2 + $0x1c] sm:$0x1] %v1677
      %v1679 = vunpack.i.h.s16 %v1564
      %v1680 = vpack.i.b16 %v1080, %v1218
      %v1681 = vpack.i.b16 %v1219, %v1081
      %v1682 = vpack.i.b16 %v1567, %v1566
      %v1684 = vcombine.low %v1084, %v1681
      %v1685 = vcombine.low %v1680, %v1682
      %v1687 = vunpack.c.l.s4 1935823168
      %v1688 = vunpack.c.0.s8 %v1687
      %v1689 = vlaneseq
      %v1690 = vshrl.u32 %v1689, 7
      %v1691 = vsub.s32 %v1688, %v1690
      %v1692 = vrot.slane %v1684, %v1691
      %v1694 = vunpack.c.l.s4 1935823168
      %v1695 = vunpack.c.0.s8 %v1694
      %v1696 = vlaneseq
      %v1697 = vshrl.u32 %v1696, 7
      %v1698 = vsub.s32 %v1695, %v1697
      %v1699 = vrot.slane %v1685, %v1698
      %v1700 = vcombine.low %v1692, %v1699
      %v1702 = vunpack.c.l.s4 1935823168
      %v1703 = vunpack.c.0.s8 %v1702
      %v1704 = vlaneseq
      %v1705 = vshrl.u32 %v1704, 7
      %v1706 = vsub.s32 %v1703, %v1705
      %v1707 = vrot.slane %v1700, %v1706
      %v1709 = vunpack.c.l.s4 1935823168
      %v1710 = vunpack.c.0.s8 %v1709
      %v1711 = vlaneseq
      %v1712 = vshrl.u32 %v1711, 7
      %v1713 = vsub.s32 %v1710, %v1712
      %v1714 = vrot.slane %v1679, %v1713
      %v1716 = vunpack.c.l.s4 1935823168
      %v1717 = vunpack.c.0.s8 %v1716
      %v1718 = vlaneseq
      %v1719 = vshrl.u32 %v1718, 7
      %v1720 = vsub.s32 %v1717, %v1719
      %v1721 = vrot.slane %v1714, %v1720
      %1722 = vrot.lane.b32.xlu0 %v1707, 64
      %v1723 = vpop.permute.xlu0 %1722
      %1724 = vrot.lane.b32.xlu0 %v1721, 64
      %v1725 = vpop.permute.xlu0 %1724
      %1728 = vst.msk [vmem:[#allocation2 + $0xc] sm:$0xf] %vm983, %v1723
      %v1729 = vld [vmem:[#allocation2 + $0x1c] sm:$0x1]
      %v1730 = vsel %vm986, %v1725, %v1729
      %1731 = vst [vmem:[#allocation2 + $0x1c] sm:$0x1] %v1730
      %v1732 = vunpack.i.h.s16 %v1623
      %v1733 = vpack.i.b16 %v1162, %v1274
      %v1734 = vpack.i.b16 %v1275, %v1163
      %v1735 = vpack.i.b16 %v1626, %v1625
      %v1737 = vcombine.low %v1166, %v1734
      %v1738 = vcombine.low %v1733, %v1735
      %v1740 = vunpack.c.l.s4 1935823168
      %v1741 = vunpack.c.0.s8 %v1740
      %v1742 = vlaneseq
      %v1743 = vshrl.u32 %v1742, 7
      %v1744 = vsub.s32 %v1741, %v1743
      %v1745 = vrot.slane %v1737, %v1744
      %v1747 = vunpack.c.l.s4 1935823168
      %v1748 = vunpack.c.0.s8 %v1747
      %v1749 = vlaneseq
      %v1750 = vshrl.u32 %v1749, 7
      %v1751 = vsub.s32 %v1748, %v1750
      %v1752 = vrot.slane %v1738, %v1751
      %v1753 = vcombine.low %v1745, %v1752
      %v1755 = vunpack.c.l.s4 1935823168
      %v1756 = vunpack.c.0.s8 %v1755
      %v1757 = vlaneseq
      %v1758 = vshrl.u32 %v1757, 7
      %v1759 = vsub.s32 %v1756, %v1758
      %v1760 = vrot.slane %v1753, %v1759
      %v1762 = vunpack.c.l.s4 1935823168
      %v1763 = vunpack.c.0.s8 %v1762
      %v1764 = vlaneseq
      %v1765 = vshrl.u32 %v1764, 7
      %v1766 = vsub.s32 %v1763, %v1765
      %v1767 = vrot.slane %v1732, %v1766
      %v1769 = vunpack.c.l.s4 1935823168
      %v1770 = vunpack.c.0.s8 %v1769
      %v1771 = vlaneseq
      %v1772 = vshrl.u32 %v1771, 7
      %v1773 = vsub.s32 %v1770, %v1772
      %v1774 = vrot.slane %v1767, %v1773
      %1775 = vrot.lane.b32.xlu0 %v1760, 96
      %v1776 = vpop.permute.xlu0 %1775
      %1777 = vrot.lane.b32.xlu0 %v1774, 96
      %v1778 = vpop.permute.xlu0 %1777
      %1781 = vst.msk [vmem:[#allocation2 + $0xc] sm:$0xf] %vm1042, %v1776
      %v1782 = vld [vmem:[#allocation2 + $0x1c] sm:$0x1]
      %v1783 = vsel %vm1045, %v1778, %v1782
      %1784 = vst [vmem:[#allocation2 + $0x1c] sm:$0x1] %v1783
      %v1785 = vld [vmem:[#allocation2] sm:$0xff]
      %v1786 = vld [vmem:[#allocation2 + $0x8] sm:$0xff]
      %v1787 = vld [vmem:[#allocation2 + $0x10] sm:$0x11]
      %v1788 = vld [vmem:[#allocation2 + $0x18] sm:$0x11]
      %v1789 = vld [vmem:[%s3] sm:$0xf]
      %v1790 = vld [vmem:[%s3 + $0x4] sm:$0xf]
      %v1791 = vld [vmem:[%s3 + $0x8] sm:$0xf]
      %v1792 = vld [vmem:[%s3 + $0xc] sm:$0xf]
      %v1793 = vld [vmem:[%s3 + $0x10] sm:$0xf]
      %v1794 = vld [vmem:[%s3 + $0x14] sm:$0xf]
      %v1795 = vld [vmem:[%s3 + $0x18] sm:$0xf]
      %v1796 = vld [vmem:[%s3 + $0x1c] sm:$0xf]
      %v1797 = vld [vmem:[%s3 + $0x20] sm:$0xf]
      %v1798 = vld [vmem:[%s3 + $0x24] sm:$0xf]
      %v1799 = vld [vmem:[%s3 + $0x28] sm:$0xf]
      %v1800 = vld [vmem:[%s3 + $0x2c] sm:$0xf]
      %v1801 = vld [vmem:[%s3 + $0x30] sm:$0xf]
      %v1802 = vld [vmem:[%s3 + $0x34] sm:$0xf]
      %v1803 = vld [vmem:[%s3 + $0x38] sm:$0xf]
      %v1804 = vld [vmem:[%s3 + $0x3c] sm:$0xf]
      %v1805 = vld [vmem:[%s3 + $0x40] sm:$0xf]
      %v1806 = vld [vmem:[%s3 + $0x44] sm:$0xf]
      %v1807 = vld [vmem:[%s3 + $0x48] sm:$0xf]
      %v1808 = vld [vmem:[%s3 + $0x4c] sm:$0xf]
      %v1809 = vld [vmem:[%s3 + $0x50] sm:$0xf]
      %v1810 = vld [vmem:[%s3 + $0x54] sm:$0xf]
      %v1811 = vld [vmem:[%s3 + $0x58] sm:$0xf]
      %v1812 = vld [vmem:[%s3 + $0x5c] sm:$0xf]
      %v1813 = vld [vmem:[%s3 + $0x60] sm:$0xf]
      %v1814 = vld [vmem:[%s3 + $0x64] sm:$0xf]
      %v1815 = vld [vmem:[%s3 + $0x68] sm:$0xf]
      %v1816 = vld [vmem:[%s3 + $0x6c] sm:$0xf]
      %v1817 = vld [vmem:[%s3 + $0x70] sm:$0xf]
      %v1818 = vld [vmem:[%s3 + $0x74] sm:$0xf]
      %v1819 = vld [vmem:[%s3 + $0x78] sm:$0xf]
      %v1820 = vld [vmem:[%s3 + $0x7c] sm:$0xf]
      %v1821 = vld [vmem:[%s3 + $0x80] sm:$0xf]
      %v1822 = vld [vmem:[%s3 + $0x84] sm:$0xf]
      %v1823 = vld [vmem:[%s3 + $0x88] sm:$0xf]
      %v1824 = vld [vmem:[%s3 + $0x8c] sm:$0xf]
      %v1825 = vld [vmem:[%s3 + $0x90] sm:$0xf]
      %v1826 = vld [vmem:[%s3 + $0x94] sm:$0xf]
      %v1827 = vld [vmem:[%s3 + $0x98] sm:$0xf]
      %v1828 = vld [vmem:[%s3 + $0x9c] sm:$0xf]
      %v1829 = vld [vmem:[%s3 + $0xa0] sm:$0xf]
      %v1830 = vld [vmem:[%s3 + $0xa4] sm:$0xf]
      %v1831 = vld [vmem:[%s3 + $0xa8] sm:$0xf]
      %v1832 = vld [vmem:[%s3 + $0xac] sm:$0xf]
      %v1833 = vld [vmem:[%s3 + $0xb0] sm:$0xf]
      %v1834 = vld [vmem:[%s3 + $0xb4] sm:$0xf]
      %v1835 = vld [vmem:[%s3 + $0xb8] sm:$0xf]
      %v1836 = vld [vmem:[%s3 + $0xbc] sm:$0xf]
      %v1837 = vld [vmem:[%s3 + $0xc0] sm:$0xf]
      %v1838 = vld [vmem:[%s3 + $0xc4] sm:$0xf]
      %v1839 = vld [vmem:[%s3 + $0xc8] sm:$0xf]
      %v1840 = vld [vmem:[%s3 + $0xcc] sm:$0xf]
      %v1841 = vld [vmem:[%s3 + $0xd0] sm:$0xf]
      %v1842 = vld [vmem:[%s3 + $0xd4] sm:$0xf]
      %v1843 = vld [vmem:[%s3 + $0xd8] sm:$0xf]
      %v1844 = vld [vmem:[%s3 + $0xdc] sm:$0xf]
      %v1845 = vld [vmem:[%s3 + $0xe0] sm:$0xf]
      %v1846 = vld [vmem:[%s3 + $0xe4] sm:$0xf]
      %v1847 = vld [vmem:[%s3 + $0xe8] sm:$0xf]
      %v1848 = vld [vmem:[%s3 + $0xec] sm:$0xf]
      %v1849 = vld [vmem:[%s3 + $0xf0] sm:$0xf]
      %v1850 = vld [vmem:[%s3 + $0xf4] sm:$0xf]
      %v1851 = vld [vmem:[%s3 + $0xf8] sm:$0xf]
      %v1852 = vld [vmem:[%s3 + $0xfc] sm:$0xf]
      %v1853 = vld [vmem:[%s4] sm:$0x1]
      %v1855 = vlaneseq
      %v1856 = vshrl.u32 %v1855, 7
      %v1857 = vsub.s32 0, %v1856
      %v1858 = vrot.slane %v1853, %v1857
      %v1864 = vunpack.c.l.b16 %v1785
      %v1865 = vunpack.c.h.b16 %v1785
      %v1866 = vunpack.c.l.b16 %v1786
      %v1867 = vunpack.c.h.b16 %v1786
      %v1868 = vunpack.c.l.b16 %v1787
      %v1869 = vunpack.c.h.b16 %v1787
      %v1870 = vunpack.c.l.b16 %v1788
      %v1871 = vunpack.c.h.b16 %v1788
      %v1872 = vpack.c.b16 %v1868, %v1864
      %v1873 = vpack.c.b16 %v1869, %v1865
      %v1874 = vpack.c.b16 %v1870, %v1866
      %v1875 = vpack.c.b16 %v1871, %v1867
      %v1944 = vunpack.c.l.b16 %v1789
      %v1945 = vunpack.c.l.b16 %v1790
      %v1946 = vunpack.c.l.b16 %v1791
      %v1947 = vunpack.c.l.b16 %v1792
      %v1948 = vunpack.c.l.b16 %v1793
      %v1949 = vunpack.c.l.b16 %v1794
      %v1950 = vunpack.c.l.b16 %v1795
      %v1951 = vunpack.c.l.b16 %v1796
      %v1952 = vunpack.c.l.b16 %v1797
      %v1953 = vunpack.c.l.b16 %v1798
      %v1954 = vunpack.c.l.b16 %v1799
      %v1955 = vunpack.c.l.b16 %v1800
      %v1956 = vunpack.c.l.b16 %v1801
      %v1957 = vunpack.c.l.b16 %v1802
      %v1958 = vunpack.c.l.b16 %v1803
      %v1959 = vunpack.c.l.b16 %v1804
      %v1960 = vunpack.c.l.b16 %v1805
      %v1961 = vunpack.c.l.b16 %v1806
      %v1962 = vunpack.c.l.b16 %v1807
      %v1963 = vunpack.c.l.b16 %v1808
      %v1964 = vunpack.c.l.b16 %v1809
      %v1965 = vunpack.c.l.b16 %v1810
      %v1966 = vunpack.c.l.b16 %v1811
      %v1967 = vunpack.c.l.b16 %v1812
      %v1968 = vunpack.c.l.b16 %v1813
      %v1969 = vunpack.c.l.b16 %v1814
      %v1970 = vunpack.c.l.b16 %v1815
      %v1971 = vunpack.c.l.b16 %v1816
      %v1972 = vunpack.c.l.b16 %v1817
      %v1973 = vunpack.c.l.b16 %v1818
      %v1974 = vunpack.c.l.b16 %v1819
      %v1975 = vunpack.c.l.b16 %v1820
      %v1976 = vunpack.c.l.b16 %v1821
      %v1977 = vunpack.c.l.b16 %v1822
      %v1978 = vunpack.c.l.b16 %v1823
      %v1979 = vunpack.c.l.b16 %v1824
      %v1980 = vunpack.c.l.b16 %v1825
      %v1981 = vunpack.c.l.b16 %v1826
      %v1982 = vunpack.c.l.b16 %v1827
      %v1983 = vunpack.c.l.b16 %v1828
      %v1984 = vunpack.c.l.b16 %v1829
      %v1985 = vunpack.c.l.b16 %v1830
      %v1986 = vunpack.c.l.b16 %v1831
      %v1987 = vunpack.c.l.b16 %v1832
      %v1988 = vunpack.c.l.b16 %v1833
      %v1989 = vunpack.c.l.b16 %v1834
      %v1990 = vunpack.c.l.b16 %v1835
      %v1991 = vunpack.c.l.b16 %v1836
      %v1992 = vunpack.c.l.b16 %v1837
      %v1993 = vunpack.c.l.b16 %v1838
      %v1994 = vunpack.c.l.b16 %v1839
      %v1995 = vunpack.c.l.b16 %v1840
      %v1996 = vunpack.c.l.b16 %v1841
      %v1997 = vunpack.c.l.b16 %v1842
      %v1998 = vunpack.c.l.b16 %v1843
      %v1999 = vunpack.c.l.b16 %v1844
      %v2000 = vunpack.c.l.b16 %v1845
      %v2001 = vunpack.c.l.b16 %v1846
      %v2002 = vunpack.c.l.b16 %v1847
      %v2003 = vunpack.c.l.b16 %v1848
      %v2004 = vunpack.c.l.b16 %v1849
      %v2005 = vunpack.c.l.b16 %v1850
      %v2006 = vunpack.c.l.b16 %v1851
      %v2007 = vunpack.c.l.b16 %v1852
      %v2008 = vpack.c.b16 %v1945, %v1944
      %v2009 = vpack.c.b16 %v1947, %v1946
      %v2010 = vpack.c.b16 %v1949, %v1948
      %v2011 = vpack.c.b16 %v1951, %v1950
      %v2012 = vpack.c.b16 %v1953, %v1952
      %v2013 = vpack.c.b16 %v1955, %v1954
      %v2014 = vpack.c.b16 %v1957, %v1956
      %v2015 = vpack.c.b16 %v1959, %v1958
      %v2016 = vpack.c.b16 %v1961, %v1960
      %v2017 = vpack.c.b16 %v1963, %v1962
      %v2018 = vpack.c.b16 %v1965, %v1964
      %v2019 = vpack.c.b16 %v1967, %v1966
      %v2020 = vpack.c.b16 %v1969, %v1968
      %v2021 = vpack.c.b16 %v1971, %v1970
      %v2022 = vpack.c.b16 %v1973, %v1972
      %v2023 = vpack.c.b16 %v1975, %v1974
      %v2024 = vpack.c.b16 %v1977, %v1976
      %v2025 = vpack.c.b16 %v1979, %v1978
      %v2026 = vpack.c.b16 %v1981, %v1980
      %v2027 = vpack.c.b16 %v1983, %v1982
      %v2028 = vpack.c.b16 %v1985, %v1984
      %v2029 = vpack.c.b16 %v1987, %v1986
      %v2030 = vpack.c.b16 %v1989, %v1988
      %v2031 = vpack.c.b16 %v1991, %v1990
      %v2032 = vpack.c.b16 %v1993, %v1992
      %v2033 = vpack.c.b16 %v1995, %v1994
      %v2034 = vpack.c.b16 %v1997, %v1996
      %v2035 = vpack.c.b16 %v1999, %v1998
      %v2036 = vpack.c.b16 %v2001, %v2000
      %v2037 = vpack.c.b16 %v2003, %v2002
      %v2038 = vpack.c.b16 %v2005, %v2004
      %v2039 = vpack.c.b16 %v2007, %v2006
      %2072 = vmatprep.subr.bf16.mxu0 0
      %2073 = vmatpush1.bf16.msra.mxu0 %v2008
      %2074 = vmatprep.subr.bf16.mxu0 0
      %2075 = vmatpush1.bf16.msra.mxu0 %v2009
      %2076 = vmatprep.subr.bf16.mxu0 0
      %2077 = vmatpush1.bf16.msra.mxu0 %v2010
      %2078 = vmatprep.subr.bf16.mxu0 0
      %2079 = vmatpush1.bf16.msra.mxu0 %v2011
      %2080 = vmatprep.subr.bf16.mxu0 0
      %2081 = vmatpush1.bf16.msra.mxu0 %v2012
      %2082 = vmatprep.subr.bf16.mxu0 0
      %2083 = vmatpush1.bf16.msra.mxu0 %v2013
      %2084 = vmatprep.subr.bf16.mxu0 0
      %2085 = vmatpush1.bf16.msra.mxu0 %v2014
      %2086 = vmatprep.subr.bf16.mxu0 0
      %2087 = vmatpush1.bf16.msra.mxu0 %v2015
      %2088 = vmatprep.subr.bf16.mxu0 0
      %2089 = vmatpush1.bf16.msra.mxu0 %v2016
      %2090 = vmatprep.subr.bf16.mxu0 0
      %2091 = vmatpush1.bf16.msra.mxu0 %v2017
      %2092 = vmatprep.subr.bf16.mxu0 0
      %2093 = vmatpush1.bf16.msra.mxu0 %v2018
      %2094 = vmatprep.subr.bf16.mxu0 0
      %2095 = vmatpush1.bf16.msra.mxu0 %v2019
      %2096 = vmatprep.subr.bf16.mxu0 0
      %2097 = vmatpush1.bf16.msra.mxu0 %v2020
      %2098 = vmatprep.subr.bf16.mxu0 0
      %2099 = vmatpush1.bf16.msra.mxu0 %v2021
      %2100 = vmatprep.subr.bf16.mxu0 0
      %2101 = vmatpush1.bf16.msra.mxu0 %v2022
      %2102 = vmatprep.subr.bf16.mxu0 0
      %2103 = vmatpush1.bf16.msra.mxu0 %v2023
      %2104 = vmatprep.mubr.bf16.mxu0 %v1873
      %2105 = vmatmul.mubr.bf16.gmra.mrb[0].mxu0 %v1872
      %v2106 = vpop.f32.mrb[0].mxu0
      %v2107 = vadd.f32 %v1858, %v2106
      %v2108 = vpop.f32.mrb[0].mxu0
      %v2109 = vpop.f32.mrb[0].mxu0
      %v2110 = vadd.f32 %v1858, %v2109
      %v2111 = vpop.f32.mrb[0].mxu0
      %2112 = vdwg.mxu0
      %2113 = vmatprep.subr.bf16.mxu0 0
      %2114 = vmatpush1.bf16.msra.mxu0 %v2024
      %2115 = vmatprep.subr.bf16.mxu0 0
      %2116 = vmatpush1.bf16.msra.mxu0 %v2025
      %2117 = vmatprep.subr.bf16.mxu0 0
      %2118 = vmatpush1.bf16.msra.mxu0 %v2026
      %2119 = vmatprep.subr.bf16.mxu0 0
      %2120 = vmatpush1.bf16.msra.mxu0 %v2027
      %2121 = vmatprep.subr.bf16.mxu0 0
      %2122 = vmatpush1.bf16.msra.mxu0 %v2028
      %2123 = vmatprep.subr.bf16.mxu0 0
      %2124 = vmatpush1.bf16.msra.mxu0 %v2029
      %2125 = vmatprep.subr.bf16.mxu0 0
      %2126 = vmatpush1.bf16.msra.mxu0 %v2030
      %2127 = vmatprep.subr.bf16.mxu0 0
      %2128 = vmatpush1.bf16.msra.mxu0 %v2031
      %2129 = vmatprep.subr.bf16.mxu0 0
      %2130 = vmatpush1.bf16.msra.mxu0 %v2032
      %2131 = vmatprep.subr.bf16.mxu0 0
      %2132 = vmatpush1.bf16.msra.mxu0 %v2033
      %2133 = vmatprep.subr.bf16.mxu0 0
      %2134 = vmatpush1.bf16.msra.mxu0 %v2034
      %2135 = vmatprep.subr.bf16.mxu0 0
      %2136 = vmatpush1.bf16.msra.mxu0 %v2035
      %2137 = vmatprep.subr.bf16.mxu0 0
      %2138 = vmatpush1.bf16.msra.mxu0 %v2036
      %2139 = vmatprep.subr.bf16.mxu0 0
      %2140 = vmatpush1.bf16.msra.mxu0 %v2037
      %2141 = vmatprep.subr.bf16.mxu0 0
      %2142 = vmatpush1.bf16.msra.mxu0 %v2038
      %2143 = vmatprep.subr.bf16.mxu0 0
      %2144 = vmatpush1.bf16.msra.mxu0 %v2039
      %2145 = vmatprep.mubr.bf16.mxu0 %v1875
      %2146 = vmatmul.mubr.bf16.gmra.mrb[0].mxu0 %v1874
      %v2147 = vpop.f32.mrb[0].mxu0
      %v2148 = vadd.f32 %v2107, %v2147
      %v2149 = vpop.f32.mrb[0].mxu0
      %v2150 = vpop.f32.mrb[0].mxu0
      %v2151 = vadd.f32 %v2110, %v2150
      %v2152 = vpop.f32.mrb[0].mxu0
      %2153 = vdwg.mxu0
      %v2154 = vsub.f32 0.0, %v2148
      %v2155 = vsub.f32 0.0, %v2151
      %v2156 = vmul.f32 %v2154, 1.442695
      %v2157 = vpow.pop %v2156
      %v2158 = vmul.f32 %v2155, 1.442695
      %v2159 = vpow.pop %v2158
      %v2160 = vadd.f32 %v2157, 1.0
      %v2161 = vadd.f32 %v2159, 1.0
      %v2162 = vrcp.pop %v2160
      %v2163 = vrcp.pop %v2161
      %v2164 = vmul.f32 %v2148, %v2162
      %v2165 = vmul.f32 %v2151, %v2163
      %v2166 = vpack.c.bf16 %v2165, %v2164
      %vm2167 = vcmask 516096
      %vm2168 = vmand %vm2167, %vm837
      %v2169 = vld [vmem:[#allocation3] sm:$0x1]
      %v2170 = vsel %vm2168, %v2166, %v2169
      %2171 = vst [vmem:[#allocation3] sm:$0x1] %v2170
      %v2174 = vunpack.c.l.s4 1966171168
      %v2175 = vunpack.c.0.s8 %v2174
      %v2176 = vlaneseq
      %v2177 = vshrl.u32 %v2176, 7
      %v2178 = vsub.s32 %v2175, %v2177
      %v2179 = vrot.slane %v2166, %v2178
      %v2181 = vunpack.c.l.s4 1966171168
      %v2182 = vunpack.c.0.s8 %v2181
      %v2183 = vlaneseq
      %v2184 = vshrl.u32 %v2183, 7
      %v2185 = vsub.s32 %v2182, %v2184
      %v2186 = vrot.slane %v2179, %v2185
      %v2188 = vshrl.u32 %v2186, 16
      %v2190 = vrot.slane %v2188, 7
      %v2191 = vrot.slane %v2190, 1
      %2192 = vrot.lane.b32.xlu0 %v2191, 64
      %v2193 = vpop.permute.xlu0 %2192
      %vm2195 = vcmask 1040896
      %vm2196 = vmand %vm2195, %vm837
      %v2197 = vld [vmem:[#allocation3] sm:$0x1]
      %v2198 = vsel %vm2196, %v2193, %v2197
      %2199 = vst [vmem:[#allocation3] sm:$0x1] %v2198
      %v2200 = vcombine.high %v2179, %v2179
      %v2202 = vunpack.c.l.s4 1966171168
      %v2203 = vunpack.c.0.s8 %v2202
      %v2204 = vlaneseq
      %v2205 = vshrl.u32 %v2204, 7
      %v2206 = vsub.s32 %v2203, %v2205
      %v2207 = vrot.slane %v2200, %v2206
      %v2209 = vld [vmem:[#allocation3 + $0x1] sm:$0x1]
      %v2210 = vsel %vm2168, %v2207, %v2209
      %2211 = vst [vmem:[#allocation3 + $0x1] sm:$0x1] %v2210
      %v2213 = vshrl.u32 %v2207, 16
      %v2215 = vrot.slane %v2213, 7
      %v2216 = vrot.slane %v2215, 1
      %2217 = vrot.lane.b32.xlu0 %v2216, 64
      %v2218 = vpop.permute.xlu0 %2217
      %v2220 = vld [vmem:[#allocation3 + $0x1] sm:$0x1]
      %v2221 = vsel %vm2196, %v2218, %v2220
      %2222 = vst [vmem:[#allocation3 + $0x1] sm:$0x1] %v2221
      %v2223 = vcombine.high %v2186, %v2186
      %v2225 = vld [vmem:[#allocation3 + $0x2] sm:$0x1]
      %v2226 = vsel %vm2168, %v2223, %v2225
      %2227 = vst [vmem:[#allocation3 + $0x2] sm:$0x1] %v2226
      %v2229 = vshrl.u32 %v2223, 16
      %v2231 = vrot.slane %v2229, 7
      %v2232 = vrot.slane %v2231, 1
      %2233 = vrot.lane.b32.xlu0 %v2232, 64
      %v2234 = vpop.permute.xlu0 %2233
      %v2236 = vld [vmem:[#allocation3 + $0x2] sm:$0x1]
      %v2237 = vsel %vm2196, %v2234, %v2236
      %2238 = vst [vmem:[#allocation3 + $0x2] sm:$0x1] %v2237
      %v2239 = vcombine.high %v2207, %v2207
      %v2241 = vld [vmem:[#allocation3 + $0x3] sm:$0x1]
      %v2242 = vsel %vm2168, %v2239, %v2241
      %2243 = vst [vmem:[#allocation3 + $0x3] sm:$0x1] %v2242
      %v2245 = vshrl.u32 %v2239, 16
      %v2247 = vrot.slane %v2245, 7
      %v2248 = vrot.slane %v2247, 1
      %2249 = vrot.lane.b32.xlu0 %v2248, 64
      %v2250 = vpop.permute.xlu0 %2249
      %v2252 = vld [vmem:[#allocation3 + $0x3] sm:$0x1]
      %v2253 = vsel %vm2196, %v2250, %v2252
      %2254 = vst [vmem:[#allocation3 + $0x3] sm:$0x1] %v2253
      %v2255 = vcombine.high %v2166, %v2166
      %v2257 = vunpack.c.l.s4 1966171168
      %v2258 = vunpack.c.0.s8 %v2257
      %v2259 = vlaneseq
      %v2260 = vshrl.u32 %v2259, 7
      %v2261 = vsub.s32 %v2258, %v2260
      %v2262 = vrot.slane %v2255, %v2261
      %v2264 = vunpack.c.l.s4 1966171168
      %v2265 = vunpack.c.0.s8 %v2264
      %v2266 = vlaneseq
      %v2267 = vshrl.u32 %v2266, 7
      %v2268 = vsub.s32 %v2265, %v2267
      %v2269 = vrot.slane %v2262, %v2268
      %v2271 = vld [vmem:[#allocation3 + $0x4] sm:$0x1]
      %v2272 = vsel %vm2168, %v2269, %v2271
      %2273 = vst [vmem:[#allocation3 + $0x4] sm:$0x1] %v2272
      %v2274 = vld [vmem:[#allocation3] sm:$0x1f]
      %v2275 = vld [vmem:[%s5] sm:$0xf]
      %v2276 = vld [vmem:[%s5 + $0x4] sm:$0xf]
      %v2277 = vld [vmem:[%s5 + $0x8] sm:$0xf]
      %v2278 = vld [vmem:[%s5 + $0xc] sm:$0xf]
      %v2279 = vld [vmem:[%s5 + $0x10] sm:$0xf]
      %v2280 = vld [vmem:[%s5 + $0x14] sm:$0xf]
      %v2281 = vld [vmem:[%s5 + $0x18] sm:$0xf]
      %v2282 = vld [vmem:[%s5 + $0x1c] sm:$0xf]
      %v2283 = vld [vmem:[%s5 + $0x20] sm:$0xf]
      %v2284 = vld [vmem:[%s5 + $0x24] sm:$0xf]
      %v2285 = vld [vmem:[%s5 + $0x28] sm:$0xf]
      %v2286 = vld [vmem:[%s5 + $0x2c] sm:$0xf]
      %v2287 = vld [vmem:[%s5 + $0x30] sm:$0xf]
      %v2288 = vld [vmem:[%s5 + $0x34] sm:$0xf]
      %v2289 = vld [vmem:[%s5 + $0x38] sm:$0xf]
      %v2290 = vld [vmem:[%s5 + $0x3c] sm:$0xf]
      %v2291 = vld [vmem:[%s5 + $0x40] sm:$0xf]
      %v2292 = vld [vmem:[%s5 + $0x44] sm:$0xf]
      %v2293 = vld [vmem:[%s5 + $0x48] sm:$0xf]
      %v2294 = vld [vmem:[%s5 + $0x4c] sm:$0xf]
      %v2295 = vld [vmem:[%s5 + $0x50] sm:$0xf]
      %v2296 = vld [vmem:[%s5 + $0x54] sm:$0xf]
      %v2297 = vld [vmem:[%s5 + $0x58] sm:$0xf]
      %v2298 = vld [vmem:[%s5 + $0x5c] sm:$0xf]
      %v2299 = vld [vmem:[%s5 + $0x60] sm:$0xf]
      %v2300 = vld [vmem:[%s5 + $0x64] sm:$0xf]
      %v2301 = vld [vmem:[%s5 + $0x68] sm:$0xf]
      %v2302 = vld [vmem:[%s5 + $0x6c] sm:$0xf]
      %v2303 = vld [vmem:[%s5 + $0x70] sm:$0xf]
      %v2304 = vld [vmem:[%s5 + $0x74] sm:$0xf]
      %v2305 = vld [vmem:[%s5 + $0x78] sm:$0xf]
      %v2306 = vld [vmem:[%s5 + $0x7c] sm:$0xf]
      %v2307 = vld [vmem:[%s5 + $0x80] sm:$0xf]
      %v2308 = vld [vmem:[%s5 + $0x84] sm:$0xf]
      %v2309 = vld [vmem:[%s5 + $0x88] sm:$0xf]
      %v2310 = vld [vmem:[%s5 + $0x8c] sm:$0xf]
      %v2311 = vld [vmem:[%s5 + $0x90] sm:$0xf]
      %v2312 = vld [vmem:[%s5 + $0x94] sm:$0xf]
      %v2313 = vld [vmem:[%s5 + $0x98] sm:$0xf]
      %v2314 = vld [vmem:[%s5 + $0x9c] sm:$0xf]
      %v2315 = vld [vmem:[%s5 + $0xa0] sm:$0xf]
      %v2316 = vld [vmem:[%s5 + $0xa4] sm:$0xf]
      %v2317 = vld [vmem:[%s5 + $0xa8] sm:$0xf]
      %v2318 = vld [vmem:[%s5 + $0xac] sm:$0xf]
      %v2319 = vld [vmem:[%s5 + $0xb0] sm:$0xf]
      %v2320 = vld [vmem:[%s5 + $0xb4] sm:$0xf]
      %v2321 = vld [vmem:[%s5 + $0xb8] sm:$0xf]
      %v2322 = vld [vmem:[%s5 + $0xbc] sm:$0xf]
      %v2323 = vld [vmem:[%s5 + $0xc0] sm:$0xf]
      %v2324 = vld [vmem:[%s5 + $0xc4] sm:$0xf]
      %v2325 = vld [vmem:[%s5 + $0xc8] sm:$0xf]
      %v2326 = vld [vmem:[%s5 + $0xcc] sm:$0xf]
      %v2327 = vld [vmem:[%s5 + $0xd0] sm:$0xf]
      %v2328 = vld [vmem:[%s5 + $0xd4] sm:$0xf]
      %v2329 = vld [vmem:[%s5 + $0xd8] sm:$0xf]
      %v2330 = vld [vmem:[%s5 + $0xdc] sm:$0xf]
      %v2331 = vld [vmem:[%s5 + $0xe0] sm:$0xf]
      %v2332 = vld [vmem:[%s5 + $0xe4] sm:$0xf]
      %v2333 = vld [vmem:[%s5 + $0xe8] sm:$0xf]
      %v2334 = vld [vmem:[%s5 + $0xec] sm:$0xf]
      %v2335 = vld [vmem:[%s5 + $0xf0] sm:$0xf]
      %v2336 = vld [vmem:[%s5 + $0xf4] sm:$0xf]
      %v2337 = vld [vmem:[%s5 + $0xf8] sm:$0xf]
      %v2338 = vld [vmem:[%s5 + $0xfc] sm:$0xf]
      %v2339 = vld [vmem:[%s5 + $0x100] sm:$0xf]
      %v2340 = vld [vmem:[%s5 + $0x104] sm:$0xf]
      %v2341 = vld [vmem:[%s5 + $0x108] sm:$0xf]
      %v2342 = vld [vmem:[%s5 + $0x10c] sm:$0xf]
      %v2343 = vld [vmem:[%s5 + $0x110] sm:$0xf]
      %v2344 = vld [vmem:[%s5 + $0x114] sm:$0xf]
      %v2345 = vld [vmem:[%s5 + $0x118] sm:$0xf]
      %v2346 = vld [vmem:[%s5 + $0x11c] sm:$0xf]
      %v2347 = vld [vmem:[%s6] sm:$0x1]
      %v2349 = vcombine.high %v2274, %v2274
      %v2351 = vunpack.c.l.s4 1966171168
      %v2352 = vunpack.c.0.s8 %v2351
      %v2353 = vlaneseq
      %v2354 = vshrl.u32 %v2353, 7
      %v2355 = vsub.s32 %v2352, %v2354
      %v2356 = vrot.slane %v2274, %v2355
      %v2358 = vunpack.c.l.s4 1966171168
      %v2359 = vunpack.c.0.s8 %v2358
      %v2360 = vlaneseq
      %v2361 = vshrl.u32 %v2360, 7
      %v2362 = vsub.s32 %v2359, %v2361
      %v2363 = vrot.slane %v2349, %v2362
      %v2364 = vcombine.high %v2356, %v2356
      %v2366 = vunpack.c.l.s4 1966171168
      %v2367 = vunpack.c.0.s8 %v2366
      %v2368 = vlaneseq
      %v2369 = vshrl.u32 %v2368, 7
      %v2370 = vsub.s32 %v2367, %v2369
      %v2371 = vrot.slane %v2356, %v2370
      %v2373 = vunpack.c.l.s4 1966171168
      %v2374 = vunpack.c.0.s8 %v2373
      %v2375 = vlaneseq
      %v2376 = vshrl.u32 %v2375, 7
      %v2377 = vsub.s32 %v2374, %v2376
      %v2378 = vrot.slane %v2363, %v2377
      %v2380 = vunpack.c.l.s4 1966171168
      %v2381 = vunpack.c.0.s8 %v2380
      %v2382 = vlaneseq
      %v2383 = vshrl.u32 %v2382, 7
      %v2384 = vsub.s32 %v2381, %v2383
      %v2385 = vrot.slane %v2364, %v2384
      %v2386 = vcombine.high %v2371, %v2371
      %v2387 = vcombine.high %v2385, %v2385
      %v2464 = vunpack.c.l.b16 %v2275
      %v2465 = vunpack.c.l.b16 %v2276
      %v2466 = vunpack.c.l.b16 %v2277
      %v2467 = vunpack.c.l.b16 %v2278
      %v2468 = vunpack.c.l.b16 %v2279
      %v2469 = vunpack.c.l.b16 %v2280
      %v2470 = vunpack.c.l.b16 %v2281
      %v2471 = vunpack.c.l.b16 %v2282
      %v2472 = vunpack.c.l.b16 %v2283
      %v2473 = vunpack.c.l.b16 %v2284
      %v2474 = vunpack.c.l.b16 %v2285
      %v2475 = vunpack.c.l.b16 %v2286
      %v2476 = vunpack.c.l.b16 %v2287
      %v2477 = vunpack.c.l.b16 %v2288
      %v2478 = vunpack.c.l.b16 %v2289
      %v2479 = vunpack.c.l.b16 %v2290
      %v2480 = vunpack.c.l.b16 %v2291
      %v2481 = vunpack.c.l.b16 %v2292
      %v2482 = vunpack.c.l.b16 %v2293
      %v2483 = vunpack.c.l.b16 %v2294
      %v2484 = vunpack.c.l.b16 %v2295
      %v2485 = vunpack.c.l.b16 %v2296
      %v2486 = vunpack.c.l.b16 %v2297
      %v2487 = vunpack.c.l.b16 %v2298
      %v2488 = vunpack.c.l.b16 %v2299
      %v2489 = vunpack.c.l.b16 %v2300
      %v2490 = vunpack.c.l.b16 %v2301
      %v2491 = vunpack.c.l.b16 %v2302
      %v2492 = vunpack.c.l.b16 %v2303
      %v2493 = vunpack.c.l.b16 %v2304
      %v2494 = vunpack.c.l.b16 %v2305
      %v2495 = vunpack.c.l.b16 %v2306
      %v2496 = vunpack.c.l.b16 %v2307
      %v2497 = vunpack.c.l.b16 %v2308
      %v2498 = vunpack.c.l.b16 %v2309
      %v2499 = vunpack.c.l.b16 %v2310
      %v2500 = vunpack.c.l.b16 %v2311
      %v2501 = vunpack.c.l.b16 %v2312
      %v2502 = vunpack.c.l.b16 %v2313
      %v2503 = vunpack.c.l.b16 %v2314
      %v2504 = vunpack.c.l.b16 %v2315
      %v2505 = vunpack.c.l.b16 %v2316
      %v2506 = vunpack.c.l.b16 %v2317
      %v2507 = vunpack.c.l.b16 %v2318
      %v2508 = vunpack.c.l.b16 %v2319
      %v2509 = vunpack.c.l.b16 %v2320
      %v2510 = vunpack.c.l.b16 %v2321
      %v2511 = vunpack.c.l.b16 %v2322
      %v2512 = vunpack.c.l.b16 %v2323
      %v2513 = vunpack.c.l.b16 %v2324
      %v2514 = vunpack.c.l.b16 %v2325
      %v2515 = vunpack.c.l.b16 %v2326
      %v2516 = vunpack.c.l.b16 %v2327
      %v2517 = vunpack.c.l.b16 %v2328
      %v2518 = vunpack.c.l.b16 %v2329
      %v2519 = vunpack.c.l.b16 %v2330
      %v2520 = vunpack.c.l.b16 %v2331
      %v2521 = vunpack.c.l.b16 %v2332
      %v2522 = vunpack.c.l.b16 %v2333
      %v2523 = vunpack.c.l.b16 %v2334
      %v2524 = vunpack.c.l.b16 %v2335
      %v2525 = vunpack.c.l.b16 %v2336
      %v2526 = vunpack.c.l.b16 %v2337
      %v2527 = vunpack.c.l.b16 %v2338
      %v2528 = vunpack.c.l.b16 %v2339
      %v2529 = vunpack.c.l.b16 %v2340
      %v2530 = vunpack.c.l.b16 %v2341
      %v2531 = vunpack.c.l.b16 %v2342
      %v2532 = vunpack.c.l.b16 %v2343
      %v2533 = vunpack.c.l.b16 %v2344
      %v2534 = vunpack.c.l.b16 %v2345
      %v2535 = vunpack.c.l.b16 %v2346
      %v2536 = vpack.c.b16 %v2465, %v2464
      %v2537 = vpack.c.b16 %v2467, %v2466
      %v2538 = vpack.c.b16 %v2469, %v2468
      %v2539 = vpack.c.b16 %v2471, %v2470
      %v2540 = vpack.c.b16 %v2473, %v2472
      %v2541 = vpack.c.b16 %v2475, %v2474
      %v2542 = vpack.c.b16 %v2477, %v2476
      %v2543 = vpack.c.b16 %v2479, %v2478
      %v2544 = vpack.c.b16 %v2481, %v2480
      %v2545 = vpack.c.b16 %v2483, %v2482
      %v2546 = vpack.c.b16 %v2485, %v2484
      %v2547 = vpack.c.b16 %v2487, %v2486
      %v2548 = vpack.c.b16 %v2489, %v2488
      %v2549 = vpack.c.b16 %v2491, %v2490
      %v2550 = vpack.c.b16 %v2493, %v2492
      %v2551 = vpack.c.b16 %v2495, %v2494
      %v2552 = vpack.c.b16 %v2497, %v2496
      %v2553 = vpack.c.b16 %v2499, %v2498
      %v2554 = vpack.c.b16 %v2501, %v2500
      %v2555 = vpack.c.b16 %v2503, %v2502
      %v2556 = vpack.c.b16 %v2505, %v2504
      %v2557 = vpack.c.b16 %v2507, %v2506
      %v2558 = vpack.c.b16 %v2509, %v2508
      %v2559 = vpack.c.b16 %v2511, %v2510
      %v2560 = vpack.c.b16 %v2513, %v2512
      %v2561 = vpack.c.b16 %v2515, %v2514
      %v2562 = vpack.c.b16 %v2517, %v2516
      %v2563 = vpack.c.b16 %v2519, %v2518
      %v2564 = vpack.c.b16 %v2521, %v2520
      %v2565 = vpack.c.b16 %v2523, %v2522
      %v2566 = vpack.c.b16 %v2525, %v2524
      %v2567 = vpack.c.b16 %v2527, %v2526
      %v2568 = vpack.c.b16 %v2529, %v2528
      %v2569 = vpack.c.b16 %v2531, %v2530
      %v2570 = vpack.c.b16 %v2533, %v2532
      %v2571 = vpack.c.b16 %v2535, %v2534
      %vm2608 = vcmask 523264
      %v2610 = vsel %vm2608, %v2378, 0
      %2612 = vmatprep.subr.bf16.mxu0 0
      %2613 = vmatpush1.bf16.msra.mxu0 %v2536
      %2614 = vmatprep.subr.bf16.mxu0 0
      %2615 = vmatpush1.bf16.msra.mxu0 %v2537
      %2616 = vmatprep.subr.bf16.mxu0 0
      %2617 = vmatpush1.bf16.msra.mxu0 %v2538
      %2618 = vmatprep.subr.bf16.mxu0 0
      %2619 = vmatpush1.bf16.msra.mxu0 %v2539
      %2620 = vmatprep.subr.bf16.mxu0 0
      %2621 = vmatpush1.bf16.msra.mxu0 %v2540
      %2622 = vmatprep.subr.bf16.mxu0 0
      %2623 = vmatpush1.bf16.msra.mxu0 %v2541
      %2624 = vmatprep.subr.bf16.mxu0 0
      %2625 = vmatpush1.bf16.msra.mxu0 %v2542
      %2626 = vmatprep.subr.bf16.mxu0 0
      %2627 = vmatpush1.bf16.msra.mxu0 %v2543
      %2628 = vmatprep.subr.bf16.mxu0 0
      %2629 = vmatpush1.bf16.msra.mxu0 %v2544
      %2630 = vmatprep.subr.bf16.mxu0 0
      %2631 = vmatpush1.bf16.msra.mxu0 %v2545
      %2632 = vmatprep.subr.bf16.mxu0 0
      %2633 = vmatpush1.bf16.msra.mxu0 %v2546
      %2634 = vmatprep.subr.bf16.mxu0 0
      %2635 = vmatpush1.bf16.msra.mxu0 %v2547
      %2636 = vmatprep.subr.bf16.mxu0 0
      %2637 = vmatpush1.bf16.msra.mxu0 %v2548
      %2638 = vmatprep.subr.bf16.mxu0 0
      %2639 = vmatpush1.bf16.msra.mxu0 %v2549
      %2640 = vmatprep.subr.bf16.mxu0 0
      %2641 = vmatpush1.bf16.msra.mxu0 %v2550
      %2642 = vmatprep.subr.bf16.mxu0 0
      %2643 = vmatpush1.bf16.msra.mxu0 %v2551
      %2644 = vmatprep.mubr.bf16.mxu0 %v2385
      %2645 = vmatmul.mubr.bf16.gmra.mrb[0].mxu0 %v2371
      %v2646 = vpop.f32.mrb[0].mxu0
      %v2647 = vadd.f32 %v2347, %v2646
      %v2648 = vpop.f32.mrb[0].mxu0
      %v2649 = vpop.f32.mrb[0].mxu0
      %v2650 = vpop.f32.mrb[0].mxu0
      %2651 = vdwg.mxu0
      %2652 = vmatprep.subr.bf16.mxu0 0
      %2653 = vmatpush1.bf16.msra.mxu0 %v2552
      %2654 = vmatprep.subr.bf16.mxu0 0
      %2655 = vmatpush1.bf16.msra.mxu0 %v2553
      %2656 = vmatprep.subr.bf16.mxu0 0
      %2657 = vmatpush1.bf16.msra.mxu0 %v2554
      %2658 = vmatprep.subr.bf16.mxu0 0
      %2659 = vmatpush1.bf16.msra.mxu0 %v2555
      %2660 = vmatprep.subr.bf16.mxu0 0
      %2661 = vmatpush1.bf16.msra.mxu0 %v2556
      %2662 = vmatprep.subr.bf16.mxu0 0
      %2663 = vmatpush1.bf16.msra.mxu0 %v2557
      %2664 = vmatprep.subr.bf16.mxu0 0
      %2665 = vmatpush1.bf16.msra.mxu0 %v2558
      %2666 = vmatprep.subr.bf16.mxu0 0
      %2667 = vmatpush1.bf16.msra.mxu0 %v2559
      %2668 = vmatprep.subr.bf16.mxu0 0
      %2669 = vmatpush1.bf16.msra.mxu0 %v2560
      %2670 = vmatprep.subr.bf16.mxu0 0
      %2671 = vmatpush1.bf16.msra.mxu0 %v2561
      %2672 = vmatprep.subr.bf16.mxu0 0
      %2673 = vmatpush1.bf16.msra.mxu0 %v2562
      %2674 = vmatprep.subr.bf16.mxu0 0
      %2675 = vmatpush1.bf16.msra.mxu0 %v2563
      %2676 = vmatprep.subr.bf16.mxu0 0
      %2677 = vmatpush1.bf16.msra.mxu0 %v2564
      %2678 = vmatprep.subr.bf16.mxu0 0
      %2679 = vmatpush1.bf16.msra.mxu0 %v2565
      %2680 = vmatprep.subr.bf16.mxu0 0
      %2681 = vmatpush1.bf16.msra.mxu0 %v2566
      %2682 = vmatprep.subr.bf16.mxu0 0
      %2683 = vmatpush1.bf16.msra.mxu0 %v2567
      %2684 = vmatprep.mubr.bf16.mxu0 %v2387
      %2685 = vmatmul.mubr.bf16.gmra.mrb[0].mxu0 %v2386
      %v2686 = vpop.f32.mrb[0].mxu0
      %v2687 = vadd.f32 %v2647, %v2686
      %v2688 = vpop.f32.mrb[0].mxu0
      %v2689 = vpop.f32.mrb[0].mxu0
      %v2690 = vpop.f32.mrb[0].mxu0
      %2691 = vdwg.mxu0
      %2692 = vmatprep.subr.bf16.mxu0 0
      %2693 = vmatpush1.bf16.msra.mxu0 %v2568
      %2694 = vmatprep.subr.bf16.mxu0 0
      %2695 = vmatpush1.bf16.msra.mxu0 %v2569
      %2696 = vmatprep.subr.bf16.mxu0 0
      %2697 = vmatpush1.bf16.msra.mxu0 %v2570
      %2698 = vmatprep.subr.bf16.mxu0 0
      %2699 = vmatpush1.bf16.msra.mxu0 %v2571
      %2700 = vmatprep.subr.bf16.mxu0 0
      %2701 = vmatpush1.bf16.msra.mxu0 0
      %2702 = vmatprep.subr.bf16.mxu0 0
      %2703 = vmatpush1.bf16.msra.mxu0 0
      %2704 = vmatprep.subr.bf16.mxu0 0
      %2705 = vmatpush1.bf16.msra.mxu0 0
      %2706 = vmatprep.subr.bf16.mxu0 0
      %2707 = vmatpush1.bf16.msra.mxu0 0
      %2708 = vmatprep.subr.bf16.mxu0 0
      %2709 = vmatpush1.bf16.msra.mxu0 0
      %2710 = vmatprep.subr.bf16.mxu0 0
      %2711 = vmatpush1.bf16.msra.mxu0 0
      %2712 = vmatprep.subr.bf16.mxu0 0
      %2713 = vmatpush1.bf16.msra.mxu0 0
      %2714 = vmatprep.subr.bf16.mxu0 0
      %2715 = vmatpush1.bf16.msra.mxu0 0
      %2716 = vmatprep.subr.bf16.mxu0 0
      %2717 = vmatpush1.bf16.msra.mxu0 0
      %2718 = vmatprep.subr.bf16.mxu0 0
      %2719 = vmatpush1.bf16.msra.mxu0 0
      %2720 = vmatprep.subr.bf16.mxu0 0
      %2721 = vmatpush1.bf16.msra.mxu0 0
      %2722 = vmatprep.subr.bf16.mxu0 0
      %2723 = vmatpush1.bf16.msra.mxu0 0
      %2724 = vmatprep.mubr.bf16.mxu0 0
      %2725 = vmatmul.mubr.bf16.gmra.mrb[0].mxu0 %v2610
      %v2726 = vpop.f32.mrb[0].mxu0
      %v2727 = vadd.f32 %v2687, %v2726
      %v2728 = vpop.f32.mrb[0].mxu0
      %v2729 = vpop.f32.mrb[0].mxu0
      %v2730 = vpop.f32.mrb[0].mxu0
      %2731 = vdwg.mxu0
      %v2732 = vsub.f32 0.0, %v2727
      %v2733 = vmul.f32 %v2732, 1.442695
      %v2734 = vpow.pop %v2733
      %v2735 = vadd.f32 %v2734, 1.0
      %v2736 = vrcp.pop %v2735
      %v2737 = vmul.f32 %v2727, %v2736
      %v2738 = vpack.c.bf16 %v2737, %v2737
      %v2739 = vld [vmem:[%s7] sm:$0xff]
      %v2740 = vld [vmem:[%s7 + $0x8] sm:$0xff]
      %v2741 = vld [vmem:[%s7 + $0x10] sm:$0xff]
      %v2742 = vld [vmem:[%s7 + $0x18] sm:$0xff]
      %v2743 = vld [vmem:[%s7 + $0x20] sm:$0xff]
      %v2744 = vld [vmem:[%s7 + $0x28] sm:$0xff]
      %v2745 = vld [vmem:[%s7 + $0x30] sm:$0xff]
      %v2746 = vld [vmem:[%s7 + $0x38] sm:$0xff]
      %v2747 = vld [vmem:[%s8] sm:$0x3]
      %v2756 = vunpack.c.l.b16 %v2739
      %v2757 = vunpack.c.h.b16 %v2739
      %v2758 = vunpack.c.l.b16 %v2740
      %v2759 = vunpack.c.h.b16 %v2740
      %v2760 = vunpack.c.l.b16 %v2741
      %v2761 = vunpack.c.h.b16 %v2741
      %v2762 = vunpack.c.l.b16 %v2742
      %v2763 = vunpack.c.h.b16 %v2742
      %v2764 = vunpack.c.l.b16 %v2743
      %v2765 = vunpack.c.h.b16 %v2743
      %v2766 = vunpack.c.l.b16 %v2744
      %v2767 = vunpack.c.h.b16 %v2744
      %v2768 = vunpack.c.l.b16 %v2745
      %v2769 = vunpack.c.h.b16 %v2745
      %v2770 = vunpack.c.l.b16 %v2746
      %v2771 = vunpack.c.h.b16 %v2746
      %v2772 = vpack.c.b16 %v2758, %v2756
      %v2773 = vpack.c.b16 %v2759, %v2757
      %v2774 = vpack.c.b16 %v2762, %v2760
      %v2775 = vpack.c.b16 %v2763, %v2761
      %v2776 = vpack.c.b16 %v2766, %v2764
      %v2777 = vpack.c.b16 %v2767, %v2765
      %v2778 = vpack.c.b16 %v2770, %v2768
      %v2779 = vpack.c.b16 %v2771, %v2769
      %v2789 = vlaneseq
      %v2790 = vshrl.u32 %v2789, 7
      %v2791 = vsub.s32 0, %v2790
      %v2792 = vrot.slane %v2747, %v2791
      %v2793 = vlaneseq
      %v2794 = vshrl.u32 %v2793, 7
      %v2795 = vsub.s32 1, %v2794
      %v2796 = vrot.slane %v2747, %v2795
      %v2800 = vsel %vm2608, %v2738, 0
      %2802 = vmatprep.subr.bf16.mxu0 %v2773
      %2803 = vmatpush1.bf16.msra.mxu0 %v2772
      %2804 = vmatprep.subr.bf16.mxu0 %v2775
      %2805 = vmatpush1.bf16.msra.mxu0 %v2774
      %2806 = vmatprep.subr.bf16.mxu0 %v2777
      %2807 = vmatpush1.bf16.msra.mxu0 %v2776
      %2808 = vmatprep.subr.bf16.mxu0 %v2779
      %2809 = vmatpush1.bf16.msra.mxu0 %v2778
      %2810 = vmatprep.subr.bf16.mxu0 0
      %2811 = vmatpush1.bf16.msra.mxu0 0
      %2812 = vmatprep.subr.bf16.mxu0 0
      %2813 = vmatpush1.bf16.msra.mxu0 0
      %2814 = vmatprep.subr.bf16.mxu0 0
      %2815 = vmatpush1.bf16.msra.mxu0 0
      %2816 = vmatprep.subr.bf16.mxu0 0
      %2817 = vmatpush1.bf16.msra.mxu0 0
      %2818 = vmatprep.subr.bf16.mxu0 0
      %2819 = vmatpush1.bf16.msra.mxu0 0
      %2820 = vmatprep.subr.bf16.mxu0 0
      %2821 = vmatpush1.bf16.msra.mxu0 0
      %2822 = vmatprep.subr.bf16.mxu0 0
      %2823 = vmatpush1.bf16.msra.mxu0 0
      %2824 = vmatprep.subr.bf16.mxu0 0
      %2825 = vmatpush1.bf16.msra.mxu0 0
      %2826 = vmatprep.subr.bf16.mxu0 0
      %2827 = vmatpush1.bf16.msra.mxu0 0
      %2828 = vmatprep.subr.bf16.mxu0 0
      %2829 = vmatpush1.bf16.msra.mxu0 0
      %2830 = vmatprep.subr.bf16.mxu0 0
      %2831 = vmatpush1.bf16.msra.mxu0 0
      %2832 = vmatprep.subr.bf16.mxu0 0
      %2833 = vmatpush1.bf16.msra.mxu0 0
      %2834 = vmatprep.mubr.bf16.mxu0 0
      %2835 = vmatmul.mubr.bf16.gmra.mrb[0].mxu0 %v2800
      %v2836 = vpop.f32.mrb[0].mxu0
      %v2837 = vadd.f32 %v2792, %v2836
      %v2838 = vpop.f32.mrb[0].mxu0
      %v2839 = vadd.f32 %v2796, %v2838
      %v2840 = vpop.f32.mrb[0].mxu0
      %v2841 = vpop.f32.mrb[0].mxu0
      %2842 = vdwg.mxu0
      %v2843 = vsub.f32 0.0, %v2837
      %v2844 = vsub.f32 0.0, %v2839
      %v2845 = vmul.f32 %v2843, 1.442695
      %v2846 = vpow.pop %v2845
      %v2847 = vmul.f32 %v2844, 1.442695
      %v2848 = vpow.pop %v2847
      %v2849 = vadd.f32 %v2846, 1.0
      %v2850 = vadd.f32 %v2848, 1.0
      %v2851 = vrcp.pop %v2849
      %v2852 = vrcp.pop %v2850
      %v2853 = vmul.f32 %v2837, %v2851
      %v2854 = vmul.f32 %v2839, %v2852
      %v2855 = vpack.c.bf16 %v2853, %v2853
      %v2856 = vpack.c.bf16 %v2854, %v2854
      %v2857 = vld [vmem:[%s9] sm:$0xf]
      %v2858 = vld [vmem:[%s9 + $0x4] sm:$0xf]
      %v2859 = vld [vmem:[%s9 + $0x8] sm:$0xf]
      %v2860 = vld [vmem:[%s9 + $0xc] sm:$0xf]
      %v2861 = vld [vmem:[%s9 + $0x10] sm:$0xf]
      %v2862 = vld [vmem:[%s9 + $0x14] sm:$0xf]
      %v2863 = vld [vmem:[%s9 + $0x18] sm:$0xf]
      %v2864 = vld [vmem:[%s9 + $0x1c] sm:$0xf]
      %v2865 = vld [vmem:[%s9 + $0x20] sm:$0xf]
      %v2866 = vld [vmem:[%s9 + $0x24] sm:$0xf]
      %v2867 = vld [vmem:[%s9 + $0x28] sm:$0xf]
      %v2868 = vld [vmem:[%s9 + $0x2c] sm:$0xf]
      %v2869 = vld [vmem:[%s9 + $0x30] sm:$0xf]
      %v2870 = vld [vmem:[%s9 + $0x34] sm:$0xf]
      %v2871 = vld [vmem:[%s9 + $0x38] sm:$0xf]
      %v2872 = vld [vmem:[%s9 + $0x3c] sm:$0xf]
      %v2873 = vld [vmem:[%s9 + $0x40] sm:$0xf]
      %v2874 = vld [vmem:[%s9 + $0x44] sm:$0xf]
      %v2875 = vld [vmem:[%s9 + $0x48] sm:$0xf]
      %v2876 = vld [vmem:[%s9 + $0x4c] sm:$0xf]
      %v2877 = vld [vmem:[%s9 + $0x50] sm:$0xf]
      %v2878 = vld [vmem:[%s9 + $0x54] sm:$0xf]
      %v2879 = vld [vmem:[%s9 + $0x58] sm:$0xf]
      %v2880 = vld [vmem:[%s9 + $0x5c] sm:$0xf]
      %v2881 = vld [vmem:[%s9 + $0x60] sm:$0xf]
      %v2882 = vld [vmem:[%s9 + $0x64] sm:$0xf]
      %v2883 = vld [vmem:[%s9 + $0x68] sm:$0xf]
      %v2884 = vld [vmem:[%s9 + $0x6c] sm:$0xf]
      %v2885 = vld [vmem:[%s9 + $0x70] sm:$0xf]
      %v2886 = vld [vmem:[%s9 + $0x74] sm:$0xf]
      %v2887 = vld [vmem:[%s9 + $0x78] sm:$0xf]
      %v2888 = vld [vmem:[%s9 + $0x7c] sm:$0xf]
      %v2889 = vld [vmem:[%s10] sm:$0x1]
      %v2922 = vunpack.c.l.b16 %v2857
      %v2923 = vunpack.c.l.b16 %v2858
      %v2924 = vunpack.c.l.b16 %v2859
      %v2925 = vunpack.c.l.b16 %v2860
      %v2926 = vunpack.c.l.b16 %v2861
      %v2927 = vunpack.c.l.b16 %v2862
      %v2928 = vunpack.c.l.b16 %v2863
      %v2929 = vunpack.c.l.b16 %v2864
      %v2930 = vunpack.c.l.b16 %v2865
      %v2931 = vunpack.c.l.b16 %v2866
      %v2932 = vunpack.c.l.b16 %v2867
      %v2933 = vunpack.c.l.b16 %v2868
      %v2934 = vunpack.c.l.b16 %v2869
      %v2935 = vunpack.c.l.b16 %v2870
      %v2936 = vunpack.c.l.b16 %v2871
      %v2937 = vunpack.c.l.b16 %v2872
      %v2938 = vunpack.c.l.b16 %v2873
      %v2939 = vunpack.c.l.b16 %v2874
      %v2940 = vunpack.c.l.b16 %v2875
      %v2941 = vunpack.c.l.b16 %v2876
      %v2942 = vunpack.c.l.b16 %v2877
      %v2943 = vunpack.c.l.b16 %v2878
      %v2944 = vunpack.c.l.b16 %v2879
      %v2945 = vunpack.c.l.b16 %v2880
      %v2946 = vunpack.c.l.b16 %v2881
      %v2947 = vunpack.c.l.b16 %v2882
      %v2948 = vunpack.c.l.b16 %v2883
      %v2949 = vunpack.c.l.b16 %v2884
      %v2950 = vunpack.c.l.b16 %v2885
      %v2951 = vunpack.c.l.b16 %v2886
      %v2952 = vunpack.c.l.b16 %v2887
      %v2953 = vunpack.c.l.b16 %v2888
      %v2954 = vpack.c.b16 %v2923, %v2922
      %v2955 = vpack.c.b16 %v2925, %v2924
      %v2956 = vpack.c.b16 %v2927, %v2926
      %v2957 = vpack.c.b16 %v2929, %v2928
      %v2958 = vpack.c.b16 %v2931, %v2930
      %v2959 = vpack.c.b16 %v2933, %v2932
      %v2960 = vpack.c.b16 %v2935, %v2934
      %v2961 = vpack.c.b16 %v2937, %v2936
      %v2962 = vpack.c.b16 %v2939, %v2938
      %v2963 = vpack.c.b16 %v2941, %v2940
      %v2964 = vpack.c.b16 %v2943, %v2942
      %v2965 = vpack.c.b16 %v2945, %v2944
      %v2966 = vpack.c.b16 %v2947, %v2946
      %v2967 = vpack.c.b16 %v2949, %v2948
      %v2968 = vpack.c.b16 %v2951, %v2950
      %v2969 = vpack.c.b16 %v2953, %v2952
      %2986 = vmatprep.subr.bf16.mxu0 0
      %2987 = vmatpush1.bf16.msra.mxu0 %v2954
      %2988 = vmatprep.subr.bf16.mxu0 0
      %2989 = vmatpush1.bf16.msra.mxu0 %v2955
      %2990 = vmatprep.subr.bf16.mxu0 0
      %2991 = vmatpush1.bf16.msra.mxu0 %v2956
      %2992 = vmatprep.subr.bf16.mxu0 0
      %2993 = vmatpush1.bf16.msra.mxu0 %v2957
      %2994 = vmatprep.subr.bf16.mxu0 0
      %2995 = vmatpush1.bf16.msra.mxu0 %v2958
      %2996 = vmatprep.subr.bf16.mxu0 0
      %2997 = vmatpush1.bf16.msra.mxu0 %v2959
      %2998 = vmatprep.subr.bf16.mxu0 0
      %2999 = vmatpush1.bf16.msra.mxu0 %v2960
      %3000 = vmatprep.subr.bf16.mxu0 0
      %3001 = vmatpush1.bf16.msra.mxu0 %v2961
      %3002 = vmatprep.subr.bf16.mxu0 0
      %3003 = vmatpush1.bf16.msra.mxu0 %v2962
      %3004 = vmatprep.subr.bf16.mxu0 0
      %3005 = vmatpush1.bf16.msra.mxu0 %v2963
      %3006 = vmatprep.subr.bf16.mxu0 0
      %3007 = vmatpush1.bf16.msra.mxu0 %v2964
      %3008 = vmatprep.subr.bf16.mxu0 0
      %3009 = vmatpush1.bf16.msra.mxu0 %v2965
      %3010 = vmatprep.subr.bf16.mxu0 0
      %3011 = vmatpush1.bf16.msra.mxu0 %v2966
      %3012 = vmatprep.subr.bf16.mxu0 0
      %3013 = vmatpush1.bf16.msra.mxu0 %v2967
      %3014 = vmatprep.subr.bf16.mxu0 0
      %3015 = vmatpush1.bf16.msra.mxu0 %v2968
      %3016 = vmatprep.subr.bf16.mxu0 0
      %3017 = vmatpush1.bf16.msra.mxu0 %v2969
      %3018 = vmatprep.mubr.bf16.mxu0 %v2856
      %3019 = vmatmul.mubr.bf16.gmra.mrb[0].mxu0 %v2855
      %v3020 = vpop.f32.mrb[0].mxu0
      %v3021 = vadd.f32 %v2889, %v3020
      %v3022 = vpop.f32.mrb[0].mxu0
      %v3023 = vpop.f32.mrb[0].mxu0
      %v3024 = vpop.f32.mrb[0].mxu0
      %3025 = vdwg.mxu0
      %vm3026 = vcmask 8192
      %3027 = vst.msk [vmem:[%s382] sm:$0x1] %vm3026, %v3021
      %p3028 = scmp.lt.s32.totalorder %s22, 1
      %s3029 = scalar_select %p3028, %s22, 1
      %s3030 = scalar_lea.vmem %s11, %s3029
      // Predicated region
      $region65: #{atari_rnd_value_forward.1} parent=63 // pred_check
        %p3031 = pneg %p276
      $region66: #{atari_rnd_value_forward.1} parent=63 // pred_check_branch
        %3033 = sbr.rel (%p3031) target = $region68
      $region67: #{atari_rnd_value_forward.1} parent=63 // pred_region
        _
      $region68: #{atari_rnd_value_forward.1} parent=63 // pred_fallthru
        _
    $region64: #{atari_rnd_value_forward.1} parent=5 // pred_fallthru
      _
    %p3034 = scmp.le.s32.totalorder 2, %s17
    // Predicated region
    $region69: #{atari_rnd_value_forward.1} parent=5 // pred_check
      %p3035 = pneg %p3034
    $region70: #{atari_rnd_value_forward.1} parent=5 // pred_check_branch
      %3037 = sbr.rel (%p3035) target = $region72
    $region71: #{atari_rnd_value_forward.1} parent=5 // pred_region
      %s3038 = ssub.s32 %s17, 2
      // Predicated region
      $region73: #{atari_rnd_value_forward.1} parent=71 // pred_check
        %p3039 = pneg %p282
      $region74: #{atari_rnd_value_forward.1} parent=71 // pred_check_branch
        %3041 = sbr.rel (%p3039) target = $region76
      $region75: #{atari_rnd_value_forward.1} parent=71 // pred_region
        %p3042 = scmp.lt.s32.totalorder %s23, 1
        %s3043 = scalar_select %p3042, %s23, 1
        %s3044 = scalar_lea.vmem %s11, %s3043
      $region76: #{atari_rnd_value_forward.1} parent=71 // pred_fallthru
        _
    $region72: #{atari_rnd_value_forward.1} parent=5 // pred_fallthru
      _
  $region6: #{atari_rnd_value_forward.1} parent=0 // loop_footer
    %s21 = sadd.s32 1, %s17
  $region7: #{atari_rnd_value_forward.1} parent=0 // loop_footer_branch
    %16 = sbr.rel target = $region3
  $region8: #{atari_rnd_value_forward.1} parent=0 // loop_exit
    _

</llo_original>
